<compile_context>
chip_gen: v7x
topology: tpu7x:2x2x1
jax: 0.10.0
libtpu: 0.0.40
codegen_flags: <defaults>
</compile_context>

<pallas_src>
import functools

import numpy as np
import jax
import jax.numpy as jnp
from jax.experimental import pallas as pl
from jax.experimental.pallas import tpu as pltpu


def _round_up(x, m):
    return (x + m - 1) // m * m


# ----------------------------------------------------------------------------
# Pallas kernel: tiled matmul (bf16 x bf16 -> f32) with fused bias epilogue.
# The output block is resident across the K grid axis, so we accumulate
# directly into o_ref (f32, no scratch) and only add the bias on the last K step.
# ----------------------------------------------------------------------------
def _matmul_bias_kernel(a_ref, b_ref, bias_ref, o_ref):
    k = pl.program_id(2)

    @pl.when(k == 0)
    def _():
        o_ref[...] = jnp.zeros_like(o_ref)

    o_ref[...] += jnp.dot(a_ref[...], b_ref[...],
                          preferred_element_type=jnp.float32)

    @pl.when(k == pl.num_programs(2) - 1)
    def _():
        o_ref[...] += bias_ref[...]          # fused bias; only stored once per (i, j)


def matmul_bias(a, b, bias):
    """a:(M,K) @ b:(K,N) + bias:(N,) -> (M,N) f32.  bf16 MXU inputs, f32 accumulation."""
    M, K = a.shape
    K2, N = b.shape
    assert K == K2 and bias.shape == (N,)

    # Adaptive tiles: as large as the problem allows, capped at bf16-friendly sizes that fit
    # comfortably inside the scoped VMEM on v5e/v6e and v7x (64 MiB physical).
    tm = min(256, _round_up(M, 16))
    tk = min(512, _round_up(K, 128))
    tn = min(256, _round_up(N, 128))
    Mp, Kp, Np = _round_up(M, tm), _round_up(K, tk), _round_up(N, tn)

    a_bf = a.astype(jnp.bfloat16)
    b_bf = b.astype(jnp.bfloat16)            # no-op if the weight is already bf16-resident
    if (Mp, Kp) != (M, K):                   # skip the pad copy when already tile-aligned
        a_bf = jnp.pad(a_bf, ((0, Mp - M), (0, Kp - K)))
    if (Kp, Np) != (K, N):
        b_bf = jnp.pad(b_bf, ((0, Kp - K), (0, Np - N)))
    bias2 = bias.astype(jnp.float32).reshape(1, N)
    if Np != N:
        bias2 = jnp.pad(bias2, ((0, 0), (0, Np - N)))

    out = pl.pallas_call(
        _matmul_bias_kernel,
        out_shape=jax.ShapeDtypeStruct((Mp, Np), jnp.float32),
        grid_spec=pltpu.PrefetchScalarGridSpec(
            num_scalar_prefetch=0,
            grid=(Mp // tm, Np // tn, Kp // tk),
            in_specs=[pl.BlockSpec((tm, tk), lambda i, j, k: (i, k)),
                      pl.BlockSpec((tk, tn), lambda i, j, k: (k, j)),
                      pl.BlockSpec((1, tn), lambda i, j, k: (0, j))],
            out_specs=pl.BlockSpec((tm, tn), lambda i, j, k: (i, j))),
        compiler_params=pltpu.CompilerParams(
            dimension_semantics=("parallel", "parallel", "arbitrary")),
    )(a_bf, b_bf, bias2)
    if (Mp, Np) != (M, N):
        out = out[:M, :N]
    return out


# ----------------------------------------------------------------------------
# Pallas kernel: fused depthwise 3x3 conv + bias + exact GELU.
# The 9 taps are formed in-kernel by static slices of one padded NHWC block.
# ----------------------------------------------------------------------------
def _gelu_exact(x):
    # Exact (erf) GELU matching nn.GELU().  erf via Abramowitz & Stegun 7.1.26
    # (|error| < 1.5e-7, i.e. f32-exact) so only exp / mul / div are needed in Mosaic.
    z = x * 0.7071067811865476
    az = jnp.abs(z)
    t = 1.0 / (1.0 + 0.3275911 * az)
    poly = t * (0.254829592 + t * (-0.284496736 + t * (1.421413741
                + t * (-1.453152027 + t * 1.061405429))))
    erf_abs = 1.0 - poly * jnp.exp(-az * az)
    erf_z = jnp.where(z >= 0, erf_abs, -erf_abs)
    return 0.5 * x * (1.0 + erf_z)


def _dwconv3x3_gelu_kernel(x_ref, w_ref, b_ref, o_ref):
    Hc, Wc = o_ref.shape[1], o_ref.shape[2]
    acc = x_ref[:, 0:Hc, 0:Wc, :] * w_ref[0] + b_ref[...]
    for t in range(1, 9):
        di, dj = t // 3, t % 3
        acc = acc + x_ref[:, di:di + Hc, dj:dj + Wc, :] * w_ref[t]
    o_ref[...] = _gelu_exact(acc)


def dwconv3x3_gelu(x_bhwc, w9, bias):
    """Depthwise 3x3 conv (pad=1, bias) + exact GELU.  x:(B,H,W,C), w9:(9,1,1,C), bias:(C,)."""
    B, H, W, C = x_bhwc.shape
    xp = jnp.pad(x_bhwc.astype(jnp.float32), ((0, 0), (1, 1), (1, 1), (0, 0)))
    tc = 128 if (C % 128 == 0) else C        # channel tiling bounds the VMEM block for large C
    return pl.pallas_call(
        _dwconv3x3_gelu_kernel,
        out_shape=jax.ShapeDtypeStruct((B, H, W, C), jnp.float32),
        grid_spec=pl.GridSpec(
            grid=(B, C // tc),
            in_specs=[pl.BlockSpec((1, H + 2, W + 2, tc), lambda b, c: (b, 0, 0, c)),
                      pl.BlockSpec((9, 1, 1, tc), lambda b, c: (0, 0, 0, c)),
                      pl.BlockSpec((1, 1, tc), lambda b, c: (0, 0, c))],
            out_specs=pl.BlockSpec((1, H, W, tc), lambda b, c: (b, 0, 0, c))),
        compiler_params=pltpu.CompilerParams(
            dimension_semantics=("parallel", "parallel")),
    )(xp, w9.astype(jnp.float32), bias.reshape(1, 1, C).astype(jnp.float32))


# ----------------------------------------------------------------------------
# JAX glue: the shiftmlp spatial shift (pad -> chunk(5, C) -> roll -> cat -> narrow),
# done in NHWC.  Pure data movement, identical to the torch semantics.
# ----------------------------------------------------------------------------
def spatial_shift(x_bnc, H, W, axis, shift_size=5):
    """axis=1: roll along H (first shift);  axis=2: roll along W (second shift)."""
    B, N, C = x_bnc.shape
    pad = shift_size // 2
    x = x_bnc.reshape(B, H, W, C)
    xp = jnp.pad(x, ((0, 0), (pad, pad), (pad, pad), (0, 0)))
    csz = -(-C // shift_size)                # torch.chunk chunk size (ceil)
    parts, start = [], 0
    for shift in range(-pad, pad + 1):
        if start >= C:
            break
        end = min(start + csz, C)
        parts.append(jnp.roll(xp[..., start:end], shift, axis=axis))
        start = end
    xc = jnp.concatenate(parts, axis=-1)
    xc = xc[:, pad:pad + H, pad:pad + W, :]
    return xc.reshape(B, N, C)


# ----------------------------------------------------------------------------
# shiftmlp forward:  shift(H) -> fc1(+bias) -> dwconv3x3(+bias)+GELU -> shift(W) -> fc2(+bias)
# ----------------------------------------------------------------------------
def shiftmlp_forward(params, x, H, W):
    B, N, C = x.shape
    hidden = params['fc1_wT'].shape[1]

    xs = spatial_shift(x, H, W, axis=1)                                        # roll along H
    h = matmul_bias(xs.reshape(B * N, C), params['fc1_wT'], params['fc1_b'])   # fc1 (bias fused)
    h = dwconv3x3_gelu(h.reshape(B, H, W, hidden),
                       params['dw_w9'], params['dw_b'])                        # dwconv+bias+GELU fused
    hs = spatial_shift(h.reshape(B, N, hidden), H, W, axis=2)                  # roll along W
    o = matmul_bias(hs.reshape(B * N, hidden), params['fc2_wT'], params['fc2_b'])  # fc2 (bias fused)
    return o.reshape(B, N, -1)
    # TODO(synk): nn.Dropout(drop=0.0) is the identity and is omitted.


# Pure-JAX (no Pallas) reference for a correctness sanity check.
def shiftmlp_reference(params, x, H, W):
    B, N, C = x.shape
    w1 = params['fc1_wT'].astype(jnp.float32)
    w2 = params['fc2_wT'].astype(jnp.float32)
    hidden = w1.shape[1]
    xs = spatial_shift(x, H, W, axis=1)
    h = xs.reshape(B * N, C) @ w1 + params['fc1_b']
    hp = jnp.pad(h.reshape(B, H, W, hidden), ((0, 0), (1, 1), (1, 1), (0, 0)))
    w9 = params['dw_w9'].reshape(9, hidden)
    conv = sum(hp[:, i:i + H, j:j + W, :] * w9[3 * i + j]
               for i in range(3) for j in range(3)) + params['dw_b']
    act = jax.nn.gelu(conv, approximate=False)
    hs = spatial_shift(act.reshape(B, N, hidden), H, W, axis=2)
    o = hs.reshape(B * N, hidden) @ w2 + params['fc2_b']
    return o.reshape(B, N, -1)


# ----------------------------------------------------------------------------
# deterministic parameter init (synthetic; shapes match shiftmlp.__init__).
# fc weights are stored pre-transposed and bf16-resident for the MXU path.
# (PyTorch init zeroes the biases; small random biases are used here so the fused
#  bias epilogues are numerically exercised.)
# ----------------------------------------------------------------------------
def init_params(key, in_features, hidden_features=None, out_features=None):
    hidden = hidden_features or in_features
    out_f = out_features or in_features
    k1, k2, k3, k4, k5, k6 = jax.random.split(key, 6)
    fc1_w = 0.02 * jax.random.normal(k1, (hidden, in_features), jnp.float32)
    fc2_w = 0.02 * jax.random.normal(k2, (out_f, hidden), jnp.float32)
    dw_w = np.sqrt(2.0 / 9.0) * jax.random.normal(k3, (hidden, 1, 3, 3), jnp.float32)
    return {
        'fc1_wT': jnp.transpose(fc1_w).astype(jnp.bfloat16),                   # (C, hidden)
        'fc1_b': 0.01 * jax.random.normal(k4, (hidden,), jnp.float32),
        'dw_w9': jnp.transpose(dw_w[:, 0], (1, 2, 0)).reshape(9, 1, 1, hidden),
        'dw_b': 0.01 * jax.random.normal(k5, (hidden,), jnp.float32),
        'fc2_wT': jnp.transpose(fc2_w).astype(jnp.bfloat16),                   # (hidden, out)
        'fc2_b': 0.01 * jax.random.normal(k6, (out_f,), jnp.float32),
    }


if __name__ == "__main__":
    key = jax.random.PRNGKey(0)
    pkey, xkey = jax.random.split(key)

    # Small shapes consistent with the module: tokens (B, N=H*W, C), hidden == C (default).
    B, H, W, C = 2, 16, 16, 64
    params = init_params(pkey, in_features=C, hidden_features=C)
    x = jax.random.normal(xkey, (B, H * W, C), jnp.float32)

    fwd = jax.jit(functools.partial(shiftmlp_forward, H=H, W=W))
    out = fwd(params, x)
    jax.block_until_ready(out)
    assert out.shape == (B, H * W, C), out.shape
    assert bool(jnp.isfinite(out).all())

    # correctness check against the pure-JAX f32 reference (loose tol for bf16 MXU drift)
    ref = jax.jit(functools.partial(shiftmlp_reference, H=H, W=W))(params, x)
    jax.block_until_ready(ref)
    rel = float(jnp.max(jnp.abs(out - ref)) / (jnp.max(jnp.abs(ref)) + 1e-6))
    assert rel < 0.1, f"relative error too large: {rel}"

    print("KERNEL_OK")
</pallas_src>

<mosaic_0001>
module attributes {stable_mosaic.version = 11 : i64} {
  func.func @_matmul_bias_kernel(%arg0: i32, %arg1: i32, %arg2: i32, %arg3: memref<256x128xbf16, #tpu.memory_space<vmem>>, %arg4: memref<128x128xbf16, #tpu.memory_space<vmem>>, %arg5: memref<1x128xf32, #tpu.memory_space<vmem>>, %arg6: memref<256x128xf32, #tpu.memory_space<vmem>>) attributes {dimension_semantics = [#tpu.dimension_semantics<parallel>, #tpu.dimension_semantics<parallel>, #tpu.dimension_semantics<arbitrary>], iteration_bounds = array<i64: 2, 1, 1>, scalar_prefetch = 0 : i64, scratch_operands = 0 : i64, tpu.core_type = #tpu.core_type<tc>, window_params = [{transform_indices = @transform_0, window_bounds = array<i64: 256, 128>}, {transform_indices = @transform_1, window_bounds = array<i64: 128, 128>}, {transform_indices = @transform_2, window_bounds = array<i64: 1, 128>}, {transform_indices = @transform_3, window_bounds = array<i64: 256, 128>}]} {
    %c0_i32 = arith.constant 0 : i32
    %0 = arith.cmpi eq, %arg2, %c0_i32 : i32
    %1 = arith.extui %0 : i1 to i32
    %c0_i32_0 = arith.constant 0 : i32
    %2 = arith.cmpi ne, %1, %c0_i32_0 : i32
    scf.if %2 {
      %cst_10 = arith.constant 0.000000e+00 : f32
      %12 = vector.broadcast %cst_10 : f32 to vector<256x128xf32>
      %c0_11 = arith.constant 0 : index
      %c0_12 = arith.constant 0 : index
      %13 = vector.load %arg6[%c0_11, %c0_12] : memref<256x128xf32, #tpu.memory_space<vmem>>, vector<256x128xf32>
      tpu.vector_store %arg6[%c0_11, %c0_12], %12 {strides = array<i32>} : memref<256x128xf32, #tpu.memory_space<vmem>>, vector<256x128xf32>,
    } else {
    }
    %c0 = arith.constant 0 : index
    %c0_1 = arith.constant 0 : index
    %3 = vector.load %arg6[%c0, %c0_1] : memref<256x128xf32, #tpu.memory_space<vmem>>, vector<256x128xf32>
    %c0_2 = arith.constant 0 : index
    %c0_3 = arith.constant 0 : index
    %4 = vector.load %arg3[%c0_2, %c0_3] : memref<256x128xbf16, #tpu.memory_space<vmem>>, vector<256x128xbf16>
    %c0_4 = arith.constant 0 : index
    %c0_5 = arith.constant 0 : index
    %5 = vector.load %arg4[%c0_4, %c0_5] : memref<128x128xbf16, #tpu.memory_space<vmem>>, vector<128x128xbf16>
    %cst = arith.constant dense<0.000000e+00> : vector<256x128xf32>
    %6 = tpu.matmul %4, %5, %cst {dimension_numbers = #tpu.dot_dimension_numbers<[1], [0], [0], [1], [0, 0, 1, 1], [], []>} : vector<256x128xbf16>, vector<128x128xbf16>, vector<256x128xf32> -> vector<256x128xf32>
    %7 = arith.addf %3, %6 : vector<256x128xf32>
    %c0_6 = arith.constant 0 : index
    %c0_7 = arith.constant 0 : index
    %8 = vector.load %arg6[%c0_6, %c0_7] : memref<256x128xf32, #tpu.memory_space<vmem>>, vector<256x128xf32>
    tpu.vector_store %arg6[%c0_6, %c0_7], %7 {strides = array<i32>} : memref<256x128xf32, #tpu.memory_space<vmem>>, vector<256x128xf32>,
    %c0_i32_8 = arith.constant 0 : i32
    %9 = arith.cmpi eq, %arg2, %c0_i32_8 : i32
    %10 = arith.extui %9 : i1 to i32
    %c0_i32_9 = arith.constant 0 : i32
    %11 = arith.cmpi ne, %10, %c0_i32_9 : i32
    scf.if %11 {
      %c0_10 = arith.constant 0 : index
      %c0_11 = arith.constant 0 : index
      %12 = vector.load %arg6[%c0_10, %c0_11] : memref<256x128xf32, #tpu.memory_space<vmem>>, vector<256x128xf32>
      %c0_12 = arith.constant 0 : index
      %c0_13 = arith.constant 0 : index
      %13 = vector.load %arg5[%c0_12, %c0_13] : memref<1x128xf32, #tpu.memory_space<vmem>>, vector<1x128xf32>
      %14 = vector.broadcast %13 : vector<1x128xf32> to vector<256x128xf32>
      %15 = arith.addf %12, %14 : vector<256x128xf32>
      %c0_14 = arith.constant 0 : index
      %c0_15 = arith.constant 0 : index
      %16 = vector.load %arg6[%c0_14, %c0_15] : memref<256x128xf32, #tpu.memory_space<vmem>>, vector<256x128xf32>
      tpu.vector_store %arg6[%c0_14, %c0_15], %15 {strides = array<i32>} : memref<256x128xf32, #tpu.memory_space<vmem>>, vector<256x128xf32>,
    } else {
    }
    return
  }
  func.func @transform_0(%arg0: i32, %arg1: i32, %arg2: i32) -> (i32, i32) {
    %c0_i32 = arith.constant 0 : i32
    return %arg0, %arg2 : i32, i32
  }
  func.func @transform_1(%arg0: i32, %arg1: i32, %arg2: i32) -> (i32, i32) {
    %c0_i32 = arith.constant 0 : i32
    return %arg2, %arg1 : i32, i32
  }
  func.func @transform_2(%arg0: i32, %arg1: i32, %arg2: i32) -> (i32, i32) {
    %c0_i32 = arith.constant 0 : i32
    %c0_i32_0 = arith.constant 0 : i32
    return %c0_i32, %arg1 : i32, i32
  }
  func.func @transform_3(%arg0: i32, %arg1: i32, %arg2: i32) -> (i32, i32) {
    %c0_i32 = arith.constant 0 : i32
    return %arg0, %arg1 : i32, i32
  }
}

module attributes {stable_mosaic.version = 11 : i64} {
  func.func @_dwconv3x3_gelu_kernel(%arg0: i32, %arg1: i32, %arg2: memref<1x18x18x64xf32, #tpu.memory_space<vmem>>, %arg3: memref<9x1x1x64xf32, #tpu.memory_space<vmem>>, %arg4: memref<1x1x64xf32, #tpu.memory_space<vmem>>, %arg5: memref<1x16x16x64xf32, #tpu.memory_space<vmem>>) attributes {dimension_semantics = [#tpu.dimension_semantics<parallel>, #tpu.dimension_semantics<parallel>], iteration_bounds = array<i64: 2, 1>, scalar_prefetch = 0 : i64, scratch_operands = 0 : i64, tpu.core_type = #tpu.core_type<tc>, window_params = [{transform_indices = @transform_0, window_bounds = array<i64: 1, 18, 18, 64>}, {transform_indices = @transform_1, window_bounds = array<i64: 9, 1, 1, 64>}, {transform_indices = @transform_2, window_bounds = array<i64: 1, 1, 64>}, {transform_indices = @transform_3, window_bounds = array<i64: 1, 16, 16, 64>}]} {
    %c0 = arith.constant 0 : index
    %c0_0 = arith.constant 0 : index
    %c0_1 = arith.constant 0 : index
    %c0_2 = arith.constant 0 : index
    %0 = vector.load %arg2[%c0, %c0_0, %c0_1, %c0_2] : memref<1x18x18x64xf32, #tpu.memory_space<vmem>>, vector<1x16x16x64xf32>
    %c0_3 = arith.constant 0 : index
    %c0_4 = arith.constant 0 : index
    %c0_5 = arith.constant 0 : index
    %c0_6 = arith.constant 0 : index
    %1 = vector.load %arg3[%c0_3, %c0_4, %c0_5, %c0_6] : memref<9x1x1x64xf32, #tpu.memory_space<vmem>>, vector<1x1x1x64xf32>
    %2 = vector.shape_cast %1 : vector<1x1x1x64xf32> to vector<1x1x64xf32>
    %3 = vector.shape_cast %2 : vector<1x1x64xf32> to vector<1x1x1x64xf32>
    %4 = vector.broadcast %3 : vector<1x1x1x64xf32> to vector<1x16x16x64xf32>
    %5 = arith.mulf %0, %4 : vector<1x16x16x64xf32>
    %c0_7 = arith.constant 0 : index
    %c0_8 = arith.constant 0 : index
    %c0_9 = arith.constant 0 : index
    %6 = vector.load %arg4[%c0_7, %c0_8, %c0_9] : memref<1x1x64xf32, #tpu.memory_space<vmem>>, vector<1x1x64xf32>
    %7 = vector.shape_cast %6 : vector<1x1x64xf32> to vector<1x1x1x64xf32>
    %8 = vector.broadcast %7 : vector<1x1x1x64xf32> to vector<1x16x16x64xf32>
    %9 = arith.addf %5, %8 : vector<1x16x16x64xf32>
    %c0_10 = arith.constant 0 : index
    %c0_11 = arith.constant 0 : index
    %c1 = arith.constant 1 : index
    %c0_12 = arith.constant 0 : index
    %10 = vector.load %arg2[%c0_10, %c0_11, %c1, %c0_12] : memref<1x18x18x64xf32, #tpu.memory_space<vmem>>, vector<1x16x16x64xf32>
    %c1_13 = arith.constant 1 : index
    %c0_14 = arith.constant 0 : index
    %c0_15 = arith.constant 0 : index
    %c0_16 = arith.constant 0 : index
    %11 = vector.load %arg3[%c1_13, %c0_14, %c0_15, %c0_16] : memref<9x1x1x64xf32, #tpu.memory_space<vmem>>, vector<1x1x1x64xf32>
    %12 = vector.shape_cast %11 : vector<1x1x1x64xf32> to vector<1x1x64xf32>
    %13 = vector.shape_cast %12 : vector<1x1x64xf32> to vector<1x1x1x64xf32>
    %14 = vector.broadcast %13 : vector<1x1x1x64xf32> to vector<1x16x16x64xf32>
    %15 = arith.mulf %10, %14 : vector<1x16x16x64xf32>
    %16 = arith.addf %9, %15 : vector<1x16x16x64xf32>
    %c0_17 = arith.constant 0 : index
    %c0_18 = arith.constant 0 : index
    %c2 = arith.constant 2 : index
    %c0_19 = arith.constant 0 : index
    %17 = vector.load %arg2[%c0_17, %c0_18, %c2, %c0_19] : memref<1x18x18x64xf32, #tpu.memory_space<vmem>>, vector<1x16x16x64xf32>
    %c2_20 = arith.constant 2 : index
    %c0_21 = arith.constant 0 : index
    %c0_22 = arith.constant 0 : index
    %c0_23 = arith.constant 0 : index
    %18 = vector.load %arg3[%c2_20, %c0_21, %c0_22, %c0_23] : memref<9x1x1x64xf32, #tpu.memory_space<vmem>>, vector<1x1x1x64xf32>
    %19 = vector.shape_cast %18 : vector<1x1x1x64xf32> to vector<1x1x64xf32>
    %20 = vector.shape_cast %19 : vector<1x1x64xf32> to vector<1x1x1x64xf32>
    %21 = vector.broadcast %20 : vector<1x1x1x64xf32> to vector<1x16x16x64xf32>
    %22 = arith.mulf %17, %21 : vector<1x16x16x64xf32>
    %23 = arith.addf %16, %22 : vector<1x16x16x64xf32>
    %c0_24 = arith.constant 0 : index
    %c1_25 = arith.constant 1 : index
    %c0_26 = arith.constant 0 : index
    %c0_27 = arith.constant 0 : index
    %24 = vector.load %arg2[%c0_24, %c1_25, %c0_26, %c0_27] : memref<1x18x18x64xf32, #tpu.memory_space<vmem>>, vector<1x16x16x64xf32>
    %c3 = arith.constant 3 : index
    %c0_28 = arith.constant 0 : index
    %c0_29 = arith.constant 0 : index
    %c0_30 = arith.constant 0 : index
    %25 = vector.load %arg3[%c3, %c0_28, %c0_29, %c0_30] : memref<9x1x1x64xf32, #tpu.memory_space<vmem>>, vector<1x1x1x64xf32>
    %26 = vector.shape_cast %25 : vector<1x1x1x64xf32> to vector<1x1x64xf32>
    %27 = vector.shape_cast %26 : vector<1x1x64xf32> to vector<1x1x1x64xf32>
    %28 = vector.broadcast %27 : vector<1x1x1x64xf32> to vector<1x16x16x64xf32>
    %29 = arith.mulf %24, %28 : vector<1x16x16x64xf32>
    %30 = arith.addf %23, %29 : vector<1x16x16x64xf32>
    %c0_31 = arith.constant 0 : index
    %c1_32 = arith.constant 1 : index
    %c1_33 = arith.constant 1 : index
    %c0_34 = arith.constant 0 : index
    %31 = vector.load %arg2[%c0_31, %c1_32, %c1_33, %c0_34] : memref<1x18x18x64xf32, #tpu.memory_space<vmem>>, vector<1x16x16x64xf32>
    %c4 = arith.constant 4 : index
    %c0_35 = arith.constant 0 : index
    %c0_36 = arith.constant 0 : index
    %c0_37 = arith.constant 0 : index
    %32 = vector.load %arg3[%c4, %c0_35, %c0_36, %c0_37] : memref<9x1x1x64xf32, #tpu.memory_space<vmem>>, vector<1x1x1x64xf32>
    %33 = vector.shape_cast %32 : vector<1x1x1x64xf32> to vector<1x1x64xf32>
    %34 = vector.shape_cast %33 : vector<1x1x64xf32> to vector<1x1x1x64xf32>
    %35 = vector.broadcast %34 : vector<1x1x1x64xf32> to vector<1x16x16x64xf32>
    %36 = arith.mulf %31, %35 : vector<1x16x16x64xf32>
    %37 = arith.addf %30, %36 : vector<1x16x16x64xf32>
    %c0_38 = arith.constant 0 : index
    %c1_39 = arith.constant 1 : index
    %c2_40 = arith.constant 2 : index
    %c0_41 = arith.constant 0 : index
    %38 = vector.load %arg2[%c0_38, %c1_39, %c2_40, %c0_41] : memref<1x18x18x64xf32, #tpu.memory_space<vmem>>, vector<1x16x16x64xf32>
    %c5 = arith.constant 5 : index
    %c0_42 = arith.constant 0 : index
    %c0_43 = arith.constant 0 : index
    %c0_44 = arith.constant 0 : index
    %39 = vector.load %arg3[%c5, %c0_42, %c0_43, %c0_44] : memref<9x1x1x64xf32, #tpu.memory_space<vmem>>, vector<1x1x1x64xf32>
    %40 = vector.shape_cast %39 : vector<1x1x1x64xf32> to vector<1x1x64xf32>
    %41 = vector.shape_cast %40 : vector<1x1x64xf32> to vector<1x1x1x64xf32>
    %42 = vector.broadcast %41 : vector<1x1x1x64xf32> to vector<1x16x16x64xf32>
    %43 = arith.mulf %38, %42 : vector<1x16x16x64xf32>
    %44 = arith.addf %37, %43 : vector<1x16x16x64xf32>
    %c0_45 = arith.constant 0 : index
    %c2_46 = arith.constant 2 : index
    %c0_47 = arith.constant 0 : index
    %c0_48 = arith.constant 0 : index
    %45 = vector.load %arg2[%c0_45, %c2_46, %c0_47, %c0_48] : memref<1x18x18x64xf32, #tpu.memory_space<vmem>>, vector<1x16x16x64xf32>
    %c6 = arith.constant 6 : index
    %c0_49 = arith.constant 0 : index
    %c0_50 = arith.constant 0 : index
    %c0_51 = arith.constant 0 : index
    %46 = vector.load %arg3[%c6, %c0_49, %c0_50, %c0_51] : memref<9x1x1x64xf32, #tpu.memory_space<vmem>>, vector<1x1x1x64xf32>
    %47 = vector.shape_cast %46 : vector<1x1x1x64xf32> to vector<1x1x64xf32>
    %48 = vector.shape_cast %47 : vector<1x1x64xf32> to vector<1x1x1x64xf32>
    %49 = vector.broadcast %48 : vector<1x1x1x64xf32> to vector<1x16x16x64xf32>
    %50 = arith.mulf %45, %49 : vector<1x16x16x64xf32>
    %51 = arith.addf %44, %50 : vector<1x16x16x64xf32>
    %c0_52 = arith.constant 0 : index
    %c2_53 = arith.constant 2 : index
    %c1_54 = arith.constant 1 : index
    %c0_55 = arith.constant 0 : index
    %52 = vector.load %arg2[%c0_52, %c2_53, %c1_54, %c0_55] : memref<1x18x18x64xf32, #tpu.memory_space<vmem>>, vector<1x16x16x64xf32>
    %c7 = arith.constant 7 : index
    %c0_56 = arith.constant 0 : index
    %c0_57 = arith.constant 0 : index
    %c0_58 = arith.constant 0 : index
    %53 = vector.load %arg3[%c7, %c0_56, %c0_57, %c0_58] : memref<9x1x1x64xf32, #tpu.memory_space<vmem>>, vector<1x1x1x64xf32>
    %54 = vector.shape_cast %53 : vector<1x1x1x64xf32> to vector<1x1x64xf32>
    %55 = vector.shape_cast %54 : vector<1x1x64xf32> to vector<1x1x1x64xf32>
    %56 = vector.broadcast %55 : vector<1x1x1x64xf32> to vector<1x16x16x64xf32>
    %57 = arith.mulf %52, %56 : vector<1x16x16x64xf32>
    %58 = arith.addf %51, %57 : vector<1x16x16x64xf32>
    %c0_59 = arith.constant 0 : index
    %c2_60 = arith.constant 2 : index
    %c2_61 = arith.constant 2 : index
    %c0_62 = arith.constant 0 : index
    %59 = vector.load %arg2[%c0_59, %c2_60, %c2_61, %c0_62] : memref<1x18x18x64xf32, #tpu.memory_space<vmem>>, vector<1x16x16x64xf32>
    %c8 = arith.constant 8 : index
    %c0_63 = arith.constant 0 : index
    %c0_64 = arith.constant 0 : index
    %c0_65 = arith.constant 0 : index
    %60 = vector.load %arg3[%c8, %c0_63, %c0_64, %c0_65] : memref<9x1x1x64xf32, #tpu.memory_space<vmem>>, vector<1x1x1x64xf32>
    %61 = vector.shape_cast %60 : vector<1x1x1x64xf32> to vector<1x1x64xf32>
    %62 = vector.shape_cast %61 : vector<1x1x64xf32> to vector<1x1x1x64xf32>
    %63 = vector.broadcast %62 : vector<1x1x1x64xf32> to vector<1x16x16x64xf32>
    %64 = arith.mulf %59, %63 : vector<1x16x16x64xf32>
    %65 = arith.addf %58, %64 : vector<1x16x16x64xf32>
    %cst = arith.constant 0.707106769 : f32
    %66 = vector.broadcast %cst : f32 to vector<1x16x16x64xf32>
    %67 = arith.mulf %65, %66 : vector<1x16x16x64xf32>
    %68 = math.absf %67 : vector<1x16x16x64xf32>
    %cst_66 = arith.constant 0.327591091 : f32
    %69 = vector.broadcast %cst_66 : f32 to vector<1x16x16x64xf32>
    %70 = arith.mulf %69, %68 : vector<1x16x16x64xf32>
    %cst_67 = arith.constant 1.000000e+00 : f32
    %71 = vector.broadcast %cst_67 : f32 to vector<1x16x16x64xf32>
    %72 = arith.addf %71, %70 : vector<1x16x16x64xf32>
    %cst_68 = arith.constant 1.000000e+00 : f32
    %73 = vector.broadcast %cst_68 : f32 to vector<1x16x16x64xf32>
    %74 = arith.divf %73, %72 : vector<1x16x16x64xf32>
    %cst_69 = arith.constant 1.06140542 : f32
    %75 = vector.broadcast %cst_69 : f32 to vector<1x16x16x64xf32>
    %76 = arith.mulf %74, %75 : vector<1x16x16x64xf32>
    %cst_70 = arith.constant -1.45315206 : f32
    %77 = vector.broadcast %cst_70 : f32 to vector<1x16x16x64xf32>
    %78 = arith.addf %77, %76 : vector<1x16x16x64xf32>
    %79 = arith.mulf %74, %78 : vector<1x16x16x64xf32>
    %cst_71 = arith.constant 1.42141378 : f32
    %80 = vector.broadcast %cst_71 : f32 to vector<1x16x16x64xf32>
    %81 = arith.addf %80, %79 : vector<1x16x16x64xf32>
    %82 = arith.mulf %74, %81 : vector<1x16x16x64xf32>
    %cst_72 = arith.constant -0.284496725 : f32
    %83 = vector.broadcast %cst_72 : f32 to vector<1x16x16x64xf32>
    %84 = arith.addf %83, %82 : vector<1x16x16x64xf32>
    %85 = arith.mulf %74, %84 : vector<1x16x16x64xf32>
    %cst_73 = arith.constant 0.254829586 : f32
    %86 = vector.broadcast %cst_73 : f32 to vector<1x16x16x64xf32>
    %87 = arith.addf %86, %85 : vector<1x16x16x64xf32>
    %88 = arith.mulf %74, %87 : vector<1x16x16x64xf32>
    %cst_74 = arith.constant 0.000000e+00 : f32
    %89 = vector.broadcast %cst_74 : f32 to vector<1x16x16x64xf32>
    %90 = arith.subf %89, %68 : vector<1x16x16x64xf32>
    %91 = arith.mulf %90, %68 : vector<1x16x16x64xf32>
    %92 = math.exp %91 : vector<1x16x16x64xf32>
    %93 = arith.mulf %88, %92 : vector<1x16x16x64xf32>
    %cst_75 = arith.constant 1.000000e+00 : f32
    %94 = vector.broadcast %cst_75 : f32 to vector<1x16x16x64xf32>
    %95 = arith.subf %94, %93 : vector<1x16x16x64xf32>
    %cst_76 = arith.constant 0.000000e+00 : f32
    %96 = vector.broadcast %cst_76 : f32 to vector<1x16x16x64xf32>
    %97 = arith.cmpf oge, %67, %96 : vector<1x16x16x64xf32>
    %cst_77 = arith.constant 0.000000e+00 : f32
    %98 = vector.broadcast %cst_77 : f32 to vector<1x16x16x64xf32>
    %99 = arith.subf %98, %95 : vector<1x16x16x64xf32>
    %100 = arith.select %97, %95, %99 : vector<1x16x16x64xi1>, vector<1x16x16x64xf32>
    %cst_78 = arith.constant 5.000000e-01 : f32
    %101 = vector.broadcast %cst_78 : f32 to vector<1x16x16x64xf32>
    %102 = arith.mulf %101, %65 : vector<1x16x16x64xf32>
    %cst_79 = arith.constant 1.000000e+00 : f32
    %103 = vector.broadcast %cst_79 : f32 to vector<1x16x16x64xf32>
    %104 = arith.addf %103, %100 : vector<1x16x16x64xf32>
    %105 = arith.mulf %102, %104 : vector<1x16x16x64xf32>
    %c0_80 = arith.constant 0 : index
    %c0_81 = arith.constant 0 : index
    %c0_82 = arith.constant 0 : index
    %c0_83 = arith.constant 0 : index
    %106 = vector.load %arg5[%c0_80, %c0_81, %c0_82, %c0_83] : memref<1x16x16x64xf32, #tpu.memory_space<vmem>>, vector<1x16x16x64xf32>
    tpu.vector_store %arg5[%c0_80, %c0_81, %c0_82, %c0_83], %105 {strides = array<i32>} : memref<1x16x16x64xf32, #tpu.memory_space<vmem>>, vector<1x16x16x64xf32>,
    return
  }
  func.func @transform_0(%arg0: i32, %arg1: i32) -> (i32, i32, i32, i32) {
    %c0_i32 = arith.constant 0 : i32
    %c0_i32_0 = arith.constant 0 : i32
    %c0_i32_1 = arith.constant 0 : i32
    return %arg0, %c0_i32, %c0_i32_0, %arg1 : i32, i32, i32, i32
  }
  func.func @transform_1(%arg0: i32, %arg1: i32) -> (i32, i32, i32, i32) {
    %c0_i32 = arith.constant 0 : i32
    %c0_i32_0 = arith.constant 0 : i32
    %c0_i32_1 = arith.constant 0 : i32
    %c0_i32_2 = arith.constant 0 : i32
    return %c0_i32, %c0_i32_0, %c0_i32_1, %arg1 : i32, i32, i32, i32
  }
  func.func @transform_2(%arg0: i32, %arg1: i32) -> (i32, i32, i32) {
    %c0_i32 = arith.constant 0 : i32
    %c0_i32_0 = arith.constant 0 : i32
    %c0_i32_1 = arith.constant 0 : i32
    return %c0_i32, %c0_i32_0, %arg1 : i32, i32, i32
  }
  func.func @transform_3(%arg0: i32, %arg1: i32) -> (i32, i32, i32, i32) {
    %c0_i32 = arith.constant 0 : i32
    %c0_i32_0 = arith.constant 0 : i32
    %c0_i32_1 = arith.constant 0 : i32
    return %arg0, %c0_i32, %c0_i32_0, %arg1 : i32, i32, i32, i32
  }
}

</mosaic_0001>

<llo_original>
// kernel: shiftmlp_forward.3
$region0: #{shiftmlp_forward.3}
  #allocation0 [shape = 'u32[]', space=smem, size = 0x4, offset = 0x4, fixed_abs, tag = 'smem constant byte address 0x4 - core index']
  #allocation1 [shape = 'u32[144,128]{1,0:T(1,128)}', space=vmem, size = 0x12000, scoped, tag = 'internal scratch']
  %s0 = inlined_call_operand.vmem [shape: bf16[512,128], index: 0, kind: input, shape index: {}]
  %s1 = inlined_call_operand.vmem [shape: bf16[128,128], index: 1, kind: input, shape index: {}]
  %s2 = inlined_call_operand.vmem [shape: f32[1,128], index: 2, kind: input, shape index: {}]
  %s3 = inlined_call_operand.vmem [shape: f32[512,128], index: 3, kind: output, shape index: {}]
  %s4 = sld [smem:[#allocation0]]
  $region53: #{shiftmlp_forward.3} parent=0
    _
  %s6 = ssub.s32 1, %s4
  %s7 = scalar_select 0, %s6, %s4
  loop: start=0, step=1, limit=4
  $region2: #{shiftmlp_forward.3} parent=0 // loop_pre_header
    _
  $region3: #{shiftmlp_forward.3} parent=0 // loop_header
    %s9 = sphi 0, %s13
    %p10 = scmp.ge.s32.totalorder %s9, 4
    %s16 = sphi 0, %s35
    %s17 = sphi 0, %s31
    %s18 = sphi 0, %s27
    %s19 = sphi 0, %s16
    %s20 = sphi 0, %s17
    %s21 = sphi 0, %s18
    %s22 = sphi 0, %s19
    %s23 = sphi 0, %s20
    %s24 = sphi 0, %s21
    %s40 = sphi 0, %s42
    %s43 = sphi 0, %s40
    %s44 = sphi 0, %s43
    %s60 = sphi 0, %s44
    %s68 = sphi 0, %s70
    %s71 = sphi 0, %s68
    %s72 = sphi 0, %s71
    %s88 = sphi 0, %s72
    %s94 = sphi 0, %s96
    %s97 = sphi 0, %s94
    %s98 = sphi 0, %s97
    %s114 = sphi 0, %s98
    %s122 = sphi 0, %s124
    %s125 = sphi 0, %s122
    %s126 = sphi 0, %s125
    %s142 = sphi 0, %s126
  $region4: #{shiftmlp_forward.3} parent=0 // loop_header_branch
    %12 = sbr.rel (%p10) target = $region8
  $region5: #{shiftmlp_forward.3} parent=0 // loop_body
    %s14 = ssub.s32 %s9, 1
    %s15 = ssub.s32 %s9, 2
    %s25 = sadd.s32 1, %s18
    %p26 = scmp.ge.s32.totalorder %s25, 1
    %s27 = scalar_select %p26, 0, %s25
    %s28 = sadd.s32 1, %s17
    %s29 = scalar_select %p26, %s28, %s17
    %p30 = scmp.ge.s32.totalorder %s29, 1
    %s31 = scalar_select %p30, 0, %s29
    %s32 = sadd.s32 1, %s16
    %s33 = scalar_select %p30, %s32, %s16
    %p34 = scmp.ge.s32.totalorder %s33, 2
    %s35 = scalar_select %p34, 0, %s33
    %s36 = ssub.s32 %s16, %s35
    %s37 = ssub.s32 %s18, %s27
    %s38 = sor.u32 %s36, %s37
    %p39 = scmp.eq.s32.totalorder %s38, 0
    %s41 = sadd.s32 %s40, 1
    %s42 = scalar_select %p39, %s40, %s41
    %p45 = pneg %p39
    %p46 = scmp.eq.s32.totalorder %s9, 1
    %p47 = por %p45, %p46
    %p48 = scmp.ne.s32.totalorder %s40, %s43
    %p49 = scmp.eq.s32.totalorder %s9, 0
    %p50 = por %p48, %p49
    %p51 = scmp.ne.s32.totalorder %s40, %s43
    %p52 = scmp.eq.s32.totalorder %s14, 1
    %p53 = por %p51, %p52
    %p54 = scmp.ne.s32.totalorder %s43, %s44
    %p55 = scmp.eq.s32.totalorder %s14, 0
    %p56 = por %p54, %p55
    %p57 = scmp.ne.s32.totalorder %s43, %s44
    %p58 = scmp.eq.s32.totalorder %s15, 1
    %p59 = por %p57, %p58
    %p61 = scmp.ne.s32.totalorder %s44, %s60
    %p62 = scmp.eq.s32.totalorder %s15, 0
    %p63 = por %p61, %p62
    %s64 = ssub.s32 %s18, %s27
    %s65 = ssub.s32 %s17, %s31
    %s66 = sor.u32 %s64, %s65
    %p67 = scmp.eq.s32.totalorder %s66, 0
    %s69 = sadd.s32 %s68, 1
    %s70 = scalar_select %p67, %s68, %s69
    %p73 = pneg %p67
    %p74 = scmp.eq.s32.totalorder %s9, 1
    %p75 = por %p73, %p74
    %p76 = scmp.ne.s32.totalorder %s68, %s71
    %p77 = scmp.eq.s32.totalorder %s9, 0
    %p78 = por %p76, %p77
    %p79 = scmp.ne.s32.totalorder %s68, %s71
    %p80 = scmp.eq.s32.totalorder %s14, 1
    %p81 = por %p79, %p80
    %p82 = scmp.ne.s32.totalorder %s71, %s72
    %p83 = scmp.eq.s32.totalorder %s14, 0
    %p84 = por %p82, %p83
    %p85 = scmp.ne.s32.totalorder %s71, %s72
    %p86 = scmp.eq.s32.totalorder %s15, 1
    %p87 = por %p85, %p86
    %p89 = scmp.ne.s32.totalorder %s72, %s88
    %p90 = scmp.eq.s32.totalorder %s15, 0
    %p91 = por %p89, %p90
    %s92 = ssub.s32 %s17, %s31
    %p93 = scmp.eq.s32.totalorder %s92, 0
    %s95 = sadd.s32 %s94, 1
    %s96 = scalar_select %p93, %s94, %s95
    %p99 = pneg %p93
    %p100 = scmp.eq.s32.totalorder %s9, 1
    %p101 = por %p99, %p100
    %p102 = scmp.ne.s32.totalorder %s94, %s97
    %p103 = scmp.eq.s32.totalorder %s9, 0
    %p104 = por %p102, %p103
    %p105 = scmp.ne.s32.totalorder %s94, %s97
    %p106 = scmp.eq.s32.totalorder %s14, 1
    %p107 = por %p105, %p106
    %p108 = scmp.ne.s32.totalorder %s97, %s98
    %p109 = scmp.eq.s32.totalorder %s14, 0
    %p110 = por %p108, %p109
    %p111 = scmp.ne.s32.totalorder %s97, %s98
    %p112 = scmp.eq.s32.totalorder %s15, 1
    %p113 = por %p111, %p112
    %p115 = scmp.ne.s32.totalorder %s98, %s114
    %p116 = scmp.eq.s32.totalorder %s15, 0
    %p117 = por %p115, %p116
    %s118 = ssub.s32 %s16, %s35
    %s119 = ssub.s32 %s17, %s31
    %s120 = sor.u32 %s118, %s119
    %p121 = scmp.eq.s32.totalorder %s120, 0
    %s123 = sadd.s32 %s122, 1
    %s124 = scalar_select %p121, %s122, %s123
    %p127 = pneg %p121
    %p128 = scmp.eq.s32.totalorder %s9, 1
    %p129 = por %p127, %p128
    %p130 = scmp.ne.s32.totalorder %s122, %s125
    %p131 = scmp.eq.s32.totalorder %s9, 0
    %p132 = por %p130, %p131
    %p133 = scmp.ne.s32.totalorder %s122, %s125
    %p134 = scmp.eq.s32.totalorder %s14, 1
    %p135 = por %p133, %p134
    %p136 = scmp.ne.s32.totalorder %s125, %s126
    %p137 = scmp.eq.s32.totalorder %s14, 0
    %p138 = por %p136, %p137
    %p139 = scmp.ne.s32.totalorder %s125, %s126
    %p140 = scmp.eq.s32.totalorder %s15, 1
    %p141 = por %p139, %p140
    %p143 = scmp.ne.s32.totalorder %s126, %s142
    %p144 = scmp.eq.s32.totalorder %s15, 0
    %p145 = por %p143, %p144
    %p146 = scmp.le.s32.totalorder 1, %s9
    %p147 = scmp.lt.s32.totalorder %s9, 3
    %p148 = pnand %p146, %p147
    %p149 = pneg %p148
    // Predicated region
    $region9: #{shiftmlp_forward.3} parent=5 // pred_check
      _
    $region10: #{shiftmlp_forward.3} parent=5 // pred_check_branch
      %151 = sbr.rel (%p148) target = $region12
    $region11: #{shiftmlp_forward.3} parent=5 // pred_region
      %s152 = ssub.s32 %s9, 1
      // Predicated region
      $region13: #{shiftmlp_forward.3} parent=11 // pred_check
        %p153 = pneg %p84
      $region14: #{shiftmlp_forward.3} parent=11 // pred_check_branch
        %155 = sbr.rel (%p153) target = $region16
      $region15: #{shiftmlp_forward.3} parent=11 // pred_region
        %s156 = smul.u32 16, %s21
        %p157 = scmp.lt.s32.totalorder %s156, 15
        %s158 = scalar_select %p157, %s156, 15
        %p159 = scmp.lt.s32.totalorder %s20, 0
        %s160 = scalar_select %p159, %s20, 0
        %s161 = sadd.s32 %s160, %s158
        %s162 = smul.addr %s161, 4
        %s163 = scalar_lea.vmem %s1, %s162
        %s164 = smul.u32 16, %s21
      $region16: #{shiftmlp_forward.3} parent=11 // pred_fallthru
        _
      // Predicated region
      $region17: #{shiftmlp_forward.3} parent=11 // pred_check
        %p165 = pneg %p110
      $region18: #{shiftmlp_forward.3} parent=11 // pred_check_branch
        %167 = sbr.rel (%p165) target = $region20
      $region19: #{shiftmlp_forward.3} parent=11 // pred_region
        %p168 = scmp.lt.s32.totalorder %s20, 0
        %s169 = scalar_select %p168, %s20, 0
        %s170 = scalar_lea.vmem %s2, %s169
      $region20: #{shiftmlp_forward.3} parent=11 // pred_fallthru
        _
    $region12: #{shiftmlp_forward.3} parent=5 // pred_fallthru
      _
    %p171 = scmp.lt.s32.totalorder %s9, 2
    // Predicated region
    $region21: #{shiftmlp_forward.3} parent=5 // pred_check
      %p172 = pneg %p171
    $region22: #{shiftmlp_forward.3} parent=5 // pred_check_branch
      %174 = sbr.rel (%p172) target = $region24
    $region23: #{shiftmlp_forward.3} parent=5 // pred_region
      // Predicated region
      $region25: #{shiftmlp_forward.3} parent=23 // pred_check
        %p175 = pneg %p50
      $region26: #{shiftmlp_forward.3} parent=23 // pred_check_branch
        %177 = sbr.rel (%p175) target = $region28
      $region27: #{shiftmlp_forward.3} parent=23 // pred_region
        %s178 = smul.u32 32, %s16
        %p179 = scmp.lt.s32.totalorder %s178, 63
        %s180 = scalar_select %p179, %s178, 63
        %p181 = scmp.lt.s32.totalorder %s18, 0
        %s182 = scalar_select %p181, %s18, 0
        %s183 = sadd.s32 %s182, %s180
        %s184 = smul.addr %s183, 4
        %s185 = scalar_lea.vmem %s0, %s184
        %s186 = smul.u32 32, %s16
      $region28: #{shiftmlp_forward.3} parent=23 // pred_fallthru
        _
    $region24: #{shiftmlp_forward.3} parent=5 // pred_fallthru
      _
    %p187 = scmp.le.s32.totalorder 1, %s9
    %p188 = scmp.lt.s32.totalorder %s9, 3
    %p189 = pnand %p187, %p188
    %p190 = pneg %p189
    // Predicated region
    $region29: #{shiftmlp_forward.3} parent=5 // pred_check
      _
    $region30: #{shiftmlp_forward.3} parent=5 // pred_check_branch
      %192 = sbr.rel (%p189) target = $region32
    $region31: #{shiftmlp_forward.3} parent=5 // pred_region
      %s193 = ssub.s32 %s9, 1
      %s194 = smul.u32 32, %s19
      %p195 = scmp.lt.s32.totalorder %s194, 63
      %s196 = scalar_select %p195, %s194, 63
      %p197 = scmp.lt.s32.totalorder %s21, 0
      %s198 = scalar_select %p197, %s21, 0
      %s199 = sadd.s32 %s198, %s196
      %s200 = smul.addr %s199, 4
      %s201 = scalar_lea.vmem %s0, %s200
      %p202 = pneg %p56
      %p203 = pneg %p53
      %s204 = smul.u32 16, %s21
      %p205 = scmp.lt.s32.totalorder %s204, 15
      %s206 = scalar_select %p205, %s204, 15
      %p207 = scmp.lt.s32.totalorder %s20, 0
      %s208 = scalar_select %p207, %s20, 0
      %s209 = sadd.s32 %s208, %s206
      %s210 = smul.addr %s209, 4
      %s211 = scalar_lea.vmem %s1, %s210
      %p212 = pneg %p84
      %p213 = pneg %p81
      %p214 = scmp.lt.s32.totalorder %s20, 0
      %s215 = scalar_select %p214, %s20, 0
      %s216 = scalar_lea.vmem %s2, %s215
      %p217 = pneg %p110
      %p218 = pneg %p107
      %p219 = pneg %p138
      %p220 = pneg %p135
      %s221 = smul.u32 32, %s19
      %p222 = scmp.lt.s32.totalorder %s221, 63
      %s223 = scalar_select %p222, %s221, 63
      %p224 = scmp.lt.s32.totalorder %s20, 0
      %s225 = scalar_select %p224, %s20, 0
      %s226 = sadd.s32 %s225, %s223
      %s227 = smul.addr %s226, 8
      %s228 = scalar_lea.vmem %s3, %s227
      %s229 = smul.u32 32, %s19
      %p230 = scmp.lt.s32.totalorder %s229, 63
      %s231 = scalar_select %p230, %s229, 63
      %p232 = scmp.lt.s32.totalorder %s21, 0
      %s233 = scalar_select %p232, %s21, 0
      %s234 = sadd.s32 %s233, %s231
      %s235 = smul.addr %s234, 4
      %s236 = scalar_lea.vmem %s0, %s235
      %s237 = smul.u32 32, %s19
      %s238 = smul.u32 16, %s21
      %p239 = scmp.lt.s32.totalorder %s238, 15
      %s240 = scalar_select %p239, %s238, 15
      %p241 = scmp.lt.s32.totalorder %s20, 0
      %s242 = scalar_select %p241, %s20, 0
      %s243 = sadd.s32 %s242, %s240
      %s244 = smul.addr %s243, 4
      %s245 = scalar_lea.vmem %s1, %s244
      %s246 = smul.u32 16, %s21
      %p247 = scmp.lt.s32.totalorder %s20, 0
      %s248 = scalar_select %p247, %s20, 0
      %s249 = scalar_lea.vmem %s2, %s248
      %s250 = smul.u32 32, %s19
      %p251 = scmp.lt.s32.totalorder %s250, 63
      %s252 = scalar_select %p251, %s250, 63
      %p253 = scmp.lt.s32.totalorder %s20, 0
      %s254 = scalar_select %p253, %s20, 0
      %s255 = sadd.s32 %s254, %s252
      %s256 = smul.addr %s255, 8
      %s257 = scalar_lea.vmem %s3, %s256
      %s258 = smul.u32 32, %s19
      %p260 = scmp.eq.s32.totalorder %s21, 0
      // Predicated region
      $region33: #{shiftmlp_forward.3} parent=31 // pred_check
        %p261 = pneg %p260
      $region34: #{shiftmlp_forward.3} parent=31 // pred_check_branch
        %263 = sbr.rel (%p261) target = $region36
      $region35: #{shiftmlp_forward.3} parent=31 // pred_region
        %264 = vst [vmem:[%s257] sm:$0xff] 0.0
        %265 = vst [vmem:[%s257 + $0x8] sm:$0xff] 0.0
        %266 = vst [vmem:[%s257 + $0x10] sm:$0xff] 0.0
        %267 = vst [vmem:[%s257 + $0x18] sm:$0xff] 0.0
        %268 = vst [vmem:[%s257 + $0x20] sm:$0xff] 0.0
        %269 = vst [vmem:[%s257 + $0x28] sm:$0xff] 0.0
        %270 = vst [vmem:[%s257 + $0x30] sm:$0xff] 0.0
        %271 = vst [vmem:[%s257 + $0x38] sm:$0xff] 0.0
        %272 = vst [vmem:[%s257 + $0x40] sm:$0xff] 0.0
        %273 = vst [vmem:[%s257 + $0x48] sm:$0xff] 0.0
        %274 = vst [vmem:[%s257 + $0x50] sm:$0xff] 0.0
        %275 = vst [vmem:[%s257 + $0x58] sm:$0xff] 0.0
        %276 = vst [vmem:[%s257 + $0x60] sm:$0xff] 0.0
        %277 = vst [vmem:[%s257 + $0x68] sm:$0xff] 0.0
        %278 = vst [vmem:[%s257 + $0x70] sm:$0xff] 0.0
        %279 = vst [vmem:[%s257 + $0x78] sm:$0xff] 0.0
        %280 = vst [vmem:[%s257 + $0x80] sm:$0xff] 0.0
        %281 = vst [vmem:[%s257 + $0x88] sm:$0xff] 0.0
        %282 = vst [vmem:[%s257 + $0x90] sm:$0xff] 0.0
        %283 = vst [vmem:[%s257 + $0x98] sm:$0xff] 0.0
        %284 = vst [vmem:[%s257 + $0xa0] sm:$0xff] 0.0
        %285 = vst [vmem:[%s257 + $0xa8] sm:$0xff] 0.0
        %286 = vst [vmem:[%s257 + $0xb0] sm:$0xff] 0.0
        %287 = vst [vmem:[%s257 + $0xb8] sm:$0xff] 0.0
        %288 = vst [vmem:[%s257 + $0xc0] sm:$0xff] 0.0
        %289 = vst [vmem:[%s257 + $0xc8] sm:$0xff] 0.0
        %290 = vst [vmem:[%s257 + $0xd0] sm:$0xff] 0.0
        %291 = vst [vmem:[%s257 + $0xd8] sm:$0xff] 0.0
        %292 = vst [vmem:[%s257 + $0xe0] sm:$0xff] 0.0
        %293 = vst [vmem:[%s257 + $0xe8] sm:$0xff] 0.0
        %294 = vst [vmem:[%s257 + $0xf0] sm:$0xff] 0.0
        %295 = vst [vmem:[%s257 + $0xf8] sm:$0xff] 0.0
      $region36: #{shiftmlp_forward.3} parent=31 // pred_fallthru
        _
      %v296 = vld [vmem:[%s257] sm:$0xff]
      %v297 = vld [vmem:[%s257 + $0x8] sm:$0xff]
      %v298 = vld [vmem:[%s257 + $0x10] sm:$0xff]
      %v299 = vld [vmem:[%s257 + $0x18] sm:$0xff]
      %v300 = vld [vmem:[%s257 + $0x20] sm:$0xff]
      %v301 = vld [vmem:[%s257 + $0x28] sm:$0xff]
      %v302 = vld [vmem:[%s257 + $0x30] sm:$0xff]
      %v303 = vld [vmem:[%s257 + $0x38] sm:$0xff]
      %v304 = vld [vmem:[%s257 + $0x40] sm:$0xff]
      %v305 = vld [vmem:[%s257 + $0x48] sm:$0xff]
      %v306 = vld [vmem:[%s257 + $0x50] sm:$0xff]
      %v307 = vld [vmem:[%s257 + $0x58] sm:$0xff]
      %v308 = vld [vmem:[%s257 + $0x60] sm:$0xff]
      %v309 = vld [vmem:[%s257 + $0x68] sm:$0xff]
      %v310 = vld [vmem:[%s257 + $0x70] sm:$0xff]
      %v311 = vld [vmem:[%s257 + $0x78] sm:$0xff]
      %v312 = vld [vmem:[%s257 + $0x80] sm:$0xff]
      %v313 = vld [vmem:[%s257 + $0x88] sm:$0xff]
      %v314 = vld [vmem:[%s257 + $0x90] sm:$0xff]
      %v315 = vld [vmem:[%s257 + $0x98] sm:$0xff]
      %v316 = vld [vmem:[%s257 + $0xa0] sm:$0xff]
      %v317 = vld [vmem:[%s257 + $0xa8] sm:$0xff]
      %v318 = vld [vmem:[%s257 + $0xb0] sm:$0xff]
      %v319 = vld [vmem:[%s257 + $0xb8] sm:$0xff]
      %v320 = vld [vmem:[%s257 + $0xc0] sm:$0xff]
      %v321 = vld [vmem:[%s257 + $0xc8] sm:$0xff]
      %v322 = vld [vmem:[%s257 + $0xd0] sm:$0xff]
      %v323 = vld [vmem:[%s257 + $0xd8] sm:$0xff]
      %v324 = vld [vmem:[%s257 + $0xe0] sm:$0xff]
      %v325 = vld [vmem:[%s257 + $0xe8] sm:$0xff]
      %v326 = vld [vmem:[%s257 + $0xf0] sm:$0xff]
      %v327 = vld [vmem:[%s257 + $0xf8] sm:$0xff]
      %v328 = vld [vmem:[%s236] sm:$0xf]
      %v329 = vld [vmem:[%s236 + $0x4] sm:$0xf]
      %v330 = vld [vmem:[%s236 + $0x8] sm:$0xf]
      %v331 = vld [vmem:[%s236 + $0xc] sm:$0xf]
      %v332 = vld [vmem:[%s236 + $0x10] sm:$0xf]
      %v333 = vld [vmem:[%s236 + $0x14] sm:$0xf]
      %v334 = vld [vmem:[%s236 + $0x18] sm:$0xf]
      %v335 = vld [vmem:[%s236 + $0x1c] sm:$0xf]
      %v336 = vld [vmem:[%s236 + $0x20] sm:$0xf]
      %v337 = vld [vmem:[%s236 + $0x24] sm:$0xf]
      %v338 = vld [vmem:[%s236 + $0x28] sm:$0xf]
      %v339 = vld [vmem:[%s236 + $0x2c] sm:$0xf]
      %v340 = vld [vmem:[%s236 + $0x30] sm:$0xf]
      %v341 = vld [vmem:[%s236 + $0x34] sm:$0xf]
      %v342 = vld [vmem:[%s236 + $0x38] sm:$0xf]
      %v343 = vld [vmem:[%s236 + $0x3c] sm:$0xf]
      %v344 = vld [vmem:[%s236 + $0x40] sm:$0xf]
      %v345 = vld [vmem:[%s236 + $0x44] sm:$0xf]
      %v346 = vld [vmem:[%s236 + $0x48] sm:$0xf]
      %v347 = vld [vmem:[%s236 + $0x4c] sm:$0xf]
      %v348 = vld [vmem:[%s236 + $0x50] sm:$0xf]
      %v349 = vld [vmem:[%s236 + $0x54] sm:$0xf]
      %v350 = vld [vmem:[%s236 + $0x58] sm:$0xf]
      %v351 = vld [vmem:[%s236 + $0x5c] sm:$0xf]
      %v352 = vld [vmem:[%s236 + $0x60] sm:$0xf]
      %v353 = vld [vmem:[%s236 + $0x64] sm:$0xf]
      %v354 = vld [vmem:[%s236 + $0x68] sm:$0xf]
      %v355 = vld [vmem:[%s236 + $0x6c] sm:$0xf]
      %v356 = vld [vmem:[%s236 + $0x70] sm:$0xf]
      %v357 = vld [vmem:[%s236 + $0x74] sm:$0xf]
      %v358 = vld [vmem:[%s236 + $0x78] sm:$0xf]
      %v359 = vld [vmem:[%s236 + $0x7c] sm:$0xf]
      %v360 = vld [vmem:[%s245] sm:$0xf]
      %v361 = vld [vmem:[%s245 + $0x4] sm:$0xf]
      %v362 = vld [vmem:[%s245 + $0x8] sm:$0xf]
      %v363 = vld [vmem:[%s245 + $0xc] sm:$0xf]
      %v364 = vld [vmem:[%s245 + $0x10] sm:$0xf]
      %v365 = vld [vmem:[%s245 + $0x14] sm:$0xf]
      %v366 = vld [vmem:[%s245 + $0x18] sm:$0xf]
      %v367 = vld [vmem:[%s245 + $0x1c] sm:$0xf]
      %v368 = vld [vmem:[%s245 + $0x20] sm:$0xf]
      %v369 = vld [vmem:[%s245 + $0x24] sm:$0xf]
      %v370 = vld [vmem:[%s245 + $0x28] sm:$0xf]
      %v371 = vld [vmem:[%s245 + $0x2c] sm:$0xf]
      %v372 = vld [vmem:[%s245 + $0x30] sm:$0xf]
      %v373 = vld [vmem:[%s245 + $0x34] sm:$0xf]
      %v374 = vld [vmem:[%s245 + $0x38] sm:$0xf]
      %v375 = vld [vmem:[%s245 + $0x3c] sm:$0xf]
      %v408 = vunpack.c.l.b16 %v328
      %v409 = vunpack.c.l.b16 %v329
      %v410 = vunpack.c.l.b16 %v330
      %v411 = vunpack.c.l.b16 %v331
      %v412 = vunpack.c.l.b16 %v332
      %v413 = vunpack.c.l.b16 %v333
      %v414 = vunpack.c.l.b16 %v334
      %v415 = vunpack.c.l.b16 %v335
      %v416 = vunpack.c.l.b16 %v336
      %v417 = vunpack.c.l.b16 %v337
      %v418 = vunpack.c.l.b16 %v338
      %v419 = vunpack.c.l.b16 %v339
      %v420 = vunpack.c.l.b16 %v340
      %v421 = vunpack.c.l.b16 %v341
      %v422 = vunpack.c.l.b16 %v342
      %v423 = vunpack.c.l.b16 %v343
      %v424 = vunpack.c.l.b16 %v344
      %v425 = vunpack.c.l.b16 %v345
      %v426 = vunpack.c.l.b16 %v346
      %v427 = vunpack.c.l.b16 %v347
      %v428 = vunpack.c.l.b16 %v348
      %v429 = vunpack.c.l.b16 %v349
      %v430 = vunpack.c.l.b16 %v350
      %v431 = vunpack.c.l.b16 %v351
      %v432 = vunpack.c.l.b16 %v352
      %v433 = vunpack.c.l.b16 %v353
      %v434 = vunpack.c.l.b16 %v354
      %v435 = vunpack.c.l.b16 %v355
      %v436 = vunpack.c.l.b16 %v356
      %v437 = vunpack.c.l.b16 %v357
      %v438 = vunpack.c.l.b16 %v358
      %v439 = vunpack.c.l.b16 %v359
      %v440 = vpack.c.b16 %v409, %v408
      %v441 = vpack.c.b16 %v411, %v410
      %v442 = vpack.c.b16 %v413, %v412
      %v443 = vpack.c.b16 %v415, %v414
      %v444 = vpack.c.b16 %v417, %v416
      %v445 = vpack.c.b16 %v419, %v418
      %v446 = vpack.c.b16 %v421, %v420
      %v447 = vpack.c.b16 %v423, %v422
      %v448 = vpack.c.b16 %v425, %v424
      %v449 = vpack.c.b16 %v427, %v426
      %v450 = vpack.c.b16 %v429, %v428
      %v451 = vpack.c.b16 %v431, %v430
      %v452 = vpack.c.b16 %v433, %v432
      %v453 = vpack.c.b16 %v435, %v434
      %v454 = vpack.c.b16 %v437, %v436
      %v455 = vpack.c.b16 %v439, %v438
      %v488 = vunpack.c.l.b16 %v360
      %v489 = vunpack.c.l.b16 %v361
      %v490 = vunpack.c.l.b16 %v362
      %v491 = vunpack.c.l.b16 %v363
      %v492 = vunpack.c.l.b16 %v364
      %v493 = vunpack.c.l.b16 %v365
      %v494 = vunpack.c.l.b16 %v366
      %v495 = vunpack.c.l.b16 %v367
      %v496 = vunpack.c.l.b16 %v368
      %v497 = vunpack.c.l.b16 %v369
      %v498 = vunpack.c.l.b16 %v370
      %v499 = vunpack.c.l.b16 %v371
      %v500 = vunpack.c.l.b16 %v372
      %v501 = vunpack.c.l.b16 %v373
      %v502 = vunpack.c.l.b16 %v374
      %v503 = vunpack.c.l.b16 %v375
      %v504 = vpack.c.b16 %v489, %v488
      %v505 = vpack.c.b16 %v491, %v490
      %v506 = vpack.c.b16 %v493, %v492
      %v507 = vpack.c.b16 %v495, %v494
      %v508 = vpack.c.b16 %v497, %v496
      %v509 = vpack.c.b16 %v499, %v498
      %v510 = vpack.c.b16 %v501, %v500
      %v511 = vpack.c.b16 %v503, %v502
      %520 = vmatprep.subr.bf16.mxu0 0
      %521 = vmatpush1.bf16.msra.mxu0 %v504
      %522 = vmatprep.subr.bf16.mxu0 0
      %523 = vmatpush1.bf16.msra.mxu0 %v505
      %524 = vmatprep.subr.bf16.mxu0 0
      %525 = vmatpush1.bf16.msra.mxu0 %v506
      %526 = vmatprep.subr.bf16.mxu0 0
      %527 = vmatpush1.bf16.msra.mxu0 %v507
      %528 = vmatprep.subr.bf16.mxu0 0
      %529 = vmatpush1.bf16.msra.mxu0 %v508
      %530 = vmatprep.subr.bf16.mxu0 0
      %531 = vmatpush1.bf16.msra.mxu0 %v509
      %532 = vmatprep.subr.bf16.mxu0 0
      %533 = vmatpush1.bf16.msra.mxu0 %v510
      %534 = vmatprep.subr.bf16.mxu0 0
      %535 = vmatpush1.bf16.msra.mxu0 %v511
      %536 = vmatprep.subr.bf16.mxu0 0
      %537 = vmatpush1.bf16.msra.mxu0 0
      %538 = vmatprep.subr.bf16.mxu0 0
      %539 = vmatpush1.bf16.msra.mxu0 0
      %540 = vmatprep.subr.bf16.mxu0 0
      %541 = vmatpush1.bf16.msra.mxu0 0
      %542 = vmatprep.subr.bf16.mxu0 0
      %543 = vmatpush1.bf16.msra.mxu0 0
      %544 = vmatprep.subr.bf16.mxu0 0
      %545 = vmatpush1.bf16.msra.mxu0 0
      %546 = vmatprep.subr.bf16.mxu0 0
      %547 = vmatpush1.bf16.msra.mxu0 0
      %548 = vmatprep.subr.bf16.mxu0 0
      %549 = vmatpush1.bf16.msra.mxu0 0
      %550 = vmatprep.subr.bf16.mxu0 0
      %551 = vmatpush1.bf16.msra.mxu0 0
      %552 = vmatprep.mubr.bf16.mxu0 0
      %553 = vmatmul.mubr.bf16.gmra.mrb[0].mxu0 %v440
      %v554 = vpop.f32.mrb[0].mxu0
      %v555 = vadd.f32 0.0, %v554
      %v556 = vpop.f32.mrb[0].mxu0
      %v557 = vpop.f32.mrb[0].mxu0
      %v558 = vadd.f32 0.0, %v557
      %v559 = vpop.f32.mrb[0].mxu0
      %560 = vmatprep.mubr.bf16.mxu0 0
      %561 = vmatmul.mubr.bf16.gmra.mrb[0].mxu0 %v441
      %v562 = vpop.f32.mrb[0].mxu0
      %v563 = vadd.f32 0.0, %v562
      %v564 = vpop.f32.mrb[0].mxu0
      %v565 = vpop.f32.mrb[0].mxu0
      %v566 = vadd.f32 0.0, %v565
      %v567 = vpop.f32.mrb[0].mxu0
      %568 = vmatprep.mubr.bf16.mxu0 0
      %569 = vmatmul.mubr.bf16.gmra.mrb[0].mxu0 %v442
      %v570 = vpop.f32.mrb[0].mxu0
      %v571 = vadd.f32 0.0, %v570
      %v572 = vpop.f32.mrb[0].mxu0
      %v573 = vpop.f32.mrb[0].mxu0
      %v574 = vadd.f32 0.0, %v573
      %v575 = vpop.f32.mrb[0].mxu0
      %576 = vmatprep.mubr.bf16.mxu0 0
      %577 = vmatmul.mubr.bf16.gmra.mrb[0].mxu0 %v443
      %v578 = vpop.f32.mrb[0].mxu0
      %v579 = vadd.f32 0.0, %v578
      %v580 = vpop.f32.mrb[0].mxu0
      %v581 = vpop.f32.mrb[0].mxu0
      %v582 = vadd.f32 0.0, %v581
      %v583 = vpop.f32.mrb[0].mxu0
      %584 = vmatprep.mubr.bf16.mxu0 0
      %585 = vmatmul.mubr.bf16.gmra.mrb[0].mxu0 %v444
      %v586 = vpop.f32.mrb[0].mxu0
      %v587 = vadd.f32 0.0, %v586
      %v588 = vpop.f32.mrb[0].mxu0
      %v589 = vpop.f32.mrb[0].mxu0
      %v590 = vadd.f32 0.0, %v589
      %v591 = vpop.f32.mrb[0].mxu0
      %592 = vmatprep.mubr.bf16.mxu0 0
      %593 = vmatmul.mubr.bf16.gmra.mrb[0].mxu0 %v445
      %v594 = vpop.f32.mrb[0].mxu0
      %v595 = vadd.f32 0.0, %v594
      %v596 = vpop.f32.mrb[0].mxu0
      %v597 = vpop.f32.mrb[0].mxu0
      %v598 = vadd.f32 0.0, %v597
      %v599 = vpop.f32.mrb[0].mxu0
      %600 = vmatprep.mubr.bf16.mxu0 0
      %601 = vmatmul.mubr.bf16.gmra.mrb[0].mxu0 %v446
      %v602 = vpop.f32.mrb[0].mxu0
      %v603 = vadd.f32 0.0, %v602
      %v604 = vpop.f32.mrb[0].mxu0
      %v605 = vpop.f32.mrb[0].mxu0
      %v606 = vadd.f32 0.0, %v605
      %v607 = vpop.f32.mrb[0].mxu0
      %608 = vmatprep.mubr.bf16.mxu0 0
      %609 = vmatmul.mubr.bf16.gmra.mrb[0].mxu0 %v447
      %v610 = vpop.f32.mrb[0].mxu0
      %v611 = vadd.f32 0.0, %v610
      %v612 = vpop.f32.mrb[0].mxu0
      %v613 = vpop.f32.mrb[0].mxu0
      %v614 = vadd.f32 0.0, %v613
      %v615 = vpop.f32.mrb[0].mxu0
      %616 = vmatprep.mubr.bf16.mxu0 0
      %617 = vmatmul.mubr.bf16.gmra.mrb[0].mxu0 %v448
      %v618 = vpop.f32.mrb[0].mxu0
      %v619 = vadd.f32 0.0, %v618
      %v620 = vpop.f32.mrb[0].mxu0
      %v621 = vpop.f32.mrb[0].mxu0
      %v622 = vadd.f32 0.0, %v621
      %v623 = vpop.f32.mrb[0].mxu0
      %624 = vmatprep.mubr.bf16.mxu0 0
      %625 = vmatmul.mubr.bf16.gmra.mrb[0].mxu0 %v449
      %v626 = vpop.f32.mrb[0].mxu0
      %v627 = vadd.f32 0.0, %v626
      %v628 = vpop.f32.mrb[0].mxu0
      %v629 = vpop.f32.mrb[0].mxu0
      %v630 = vadd.f32 0.0, %v629
      %v631 = vpop.f32.mrb[0].mxu0
      %632 = vmatprep.mubr.bf16.mxu0 0
      %633 = vmatmul.mubr.bf16.gmra.mrb[0].mxu0 %v450
      %v634 = vpop.f32.mrb[0].mxu0
      %v635 = vadd.f32 0.0, %v634
      %v636 = vpop.f32.mrb[0].mxu0
      %v637 = vpop.f32.mrb[0].mxu0
      %v638 = vadd.f32 0.0, %v637
      %v639 = vpop.f32.mrb[0].mxu0
      %640 = vmatprep.mubr.bf16.mxu0 0
      %641 = vmatmul.mubr.bf16.gmra.mrb[0].mxu0 %v451
      %v642 = vpop.f32.mrb[0].mxu0
      %v643 = vadd.f32 0.0, %v642
      %v644 = vpop.f32.mrb[0].mxu0
      %v645 = vpop.f32.mrb[0].mxu0
      %v646 = vadd.f32 0.0, %v645
      %v647 = vpop.f32.mrb[0].mxu0
      %648 = vmatprep.mubr.bf16.mxu0 0
      %649 = vmatmul.mubr.bf16.gmra.mrb[0].mxu0 %v452
      %v650 = vpop.f32.mrb[0].mxu0
      %v651 = vadd.f32 0.0, %v650
      %v652 = vpop.f32.mrb[0].mxu0
      %v653 = vpop.f32.mrb[0].mxu0
      %v654 = vadd.f32 0.0, %v653
      %v655 = vpop.f32.mrb[0].mxu0
      %656 = vmatprep.mubr.bf16.mxu0 0
      %657 = vmatmul.mubr.bf16.gmra.mrb[0].mxu0 %v453
      %v658 = vpop.f32.mrb[0].mxu0
      %v659 = vadd.f32 0.0, %v658
      %v660 = vpop.f32.mrb[0].mxu0
      %v661 = vpop.f32.mrb[0].mxu0
      %v662 = vadd.f32 0.0, %v661
      %v663 = vpop.f32.mrb[0].mxu0
      %664 = vmatprep.mubr.bf16.mxu0 0
      %665 = vmatmul.mubr.bf16.gmra.mrb[0].mxu0 %v454
      %v666 = vpop.f32.mrb[0].mxu0
      %v667 = vadd.f32 0.0, %v666
      %v668 = vpop.f32.mrb[0].mxu0
      %v669 = vpop.f32.mrb[0].mxu0
      %v670 = vadd.f32 0.0, %v669
      %v671 = vpop.f32.mrb[0].mxu0
      %672 = vmatprep.mubr.bf16.mxu0 0
      %673 = vmatmul.mubr.bf16.gmra.mrb[0].mxu0 %v455
      %v674 = vpop.f32.mrb[0].mxu0
      %v675 = vadd.f32 0.0, %v674
      %v676 = vpop.f32.mrb[0].mxu0
      %v677 = vpop.f32.mrb[0].mxu0
      %v678 = vadd.f32 0.0, %v677
      %v679 = vpop.f32.mrb[0].mxu0
      %680 = vdwg.mxu0
      %v681 = vadd.f32 %v296, %v555
      %v682 = vadd.f32 %v297, %v558
      %v683 = vadd.f32 %v298, %v563
      %v684 = vadd.f32 %v299, %v566
      %v685 = vadd.f32 %v300, %v571
      %v686 = vadd.f32 %v301, %v574
      %v687 = vadd.f32 %v302, %v579
      %v688 = vadd.f32 %v303, %v582
      %v689 = vadd.f32 %v304, %v587
      %v690 = vadd.f32 %v305, %v590
      %v691 = vadd.f32 %v306, %v595
      %v692 = vadd.f32 %v307, %v598
      %v693 = vadd.f32 %v308, %v603
      %v694 = vadd.f32 %v309, %v606
      %v695 = vadd.f32 %v310, %v611
      %v696 = vadd.f32 %v311, %v614
      %v697 = vadd.f32 %v312, %v619
      %v698 = vadd.f32 %v313, %v622
      %v699 = vadd.f32 %v314, %v627
      %v700 = vadd.f32 %v315, %v630
      %v701 = vadd.f32 %v316, %v635
      %v702 = vadd.f32 %v317, %v638
      %v703 = vadd.f32 %v318, %v643
      %v704 = vadd.f32 %v319, %v646
      %v705 = vadd.f32 %v320, %v651
      %v706 = vadd.f32 %v321, %v654
      %v707 = vadd.f32 %v322, %v659
      %v708 = vadd.f32 %v323, %v662
      %v709 = vadd.f32 %v324, %v667
      %v710 = vadd.f32 %v325, %v670
      %v711 = vadd.f32 %v326, %v675
      %v712 = vadd.f32 %v327, %v678
      %713 = vst [vmem:[%s257] sm:$0xff] %v681
      %714 = vst [vmem:[%s257 + $0x8] sm:$0xff] %v682
      %715 = vst [vmem:[%s257 + $0x10] sm:$0xff] %v683
      %716 = vst [vmem:[%s257 + $0x18] sm:$0xff] %v684
      %717 = vst [vmem:[%s257 + $0x20] sm:$0xff] %v685
      %718 = vst [vmem:[%s257 + $0x28] sm:$0xff] %v686
      %719 = vst [vmem:[%s257 + $0x30] sm:$0xff] %v687
      %720 = vst [vmem:[%s257 + $0x38] sm:$0xff] %v688
      %721 = vst [vmem:[%s257 + $0x40] sm:$0xff] %v689
      %722 = vst [vmem:[%s257 + $0x48] sm:$0xff] %v690
      %723 = vst [vmem:[%s257 + $0x50] sm:$0xff] %v691
      %724 = vst [vmem:[%s257 + $0x58] sm:$0xff] %v692
      %725 = vst [vmem:[%s257 + $0x60] sm:$0xff] %v693
      %726 = vst [vmem:[%s257 + $0x68] sm:$0xff] %v694
      %727 = vst [vmem:[%s257 + $0x70] sm:$0xff] %v695
      %728 = vst [vmem:[%s257 + $0x78] sm:$0xff] %v696
      %729 = vst [vmem:[%s257 + $0x80] sm:$0xff] %v697
      %730 = vst [vmem:[%s257 + $0x88] sm:$0xff] %v698
      %731 = vst [vmem:[%s257 + $0x90] sm:$0xff] %v699
      %732 = vst [vmem:[%s257 + $0x98] sm:$0xff] %v700
      %733 = vst [vmem:[%s257 + $0xa0] sm:$0xff] %v701
      %734 = vst [vmem:[%s257 + $0xa8] sm:$0xff] %v702
      %735 = vst [vmem:[%s257 + $0xb0] sm:$0xff] %v703
      %736 = vst [vmem:[%s257 + $0xb8] sm:$0xff] %v704
      %737 = vst [vmem:[%s257 + $0xc0] sm:$0xff] %v705
      %738 = vst [vmem:[%s257 + $0xc8] sm:$0xff] %v706
      %739 = vst [vmem:[%s257 + $0xd0] sm:$0xff] %v707
      %740 = vst [vmem:[%s257 + $0xd8] sm:$0xff] %v708
      %741 = vst [vmem:[%s257 + $0xe0] sm:$0xff] %v709
      %742 = vst [vmem:[%s257 + $0xe8] sm:$0xff] %v710
      %743 = vst [vmem:[%s257 + $0xf0] sm:$0xff] %v711
      %744 = vst [vmem:[%s257 + $0xf8] sm:$0xff] %v712
      // Predicated region
      $region37: #{shiftmlp_forward.3} parent=31 // pred_check
        %p745 = pneg %p260
      $region38: #{shiftmlp_forward.3} parent=31 // pred_check_branch
        %747 = sbr.rel (%p745) target = $region40
      $region39: #{shiftmlp_forward.3} parent=31 // pred_region
        %v748 = vld [vmem:[%s257] sm:$0xff]
        %v749 = vld [vmem:[%s257 + $0x8] sm:$0xff]
        %v750 = vld [vmem:[%s257 + $0x10] sm:$0xff]
        %v751 = vld [vmem:[%s257 + $0x18] sm:$0xff]
        %v752 = vld [vmem:[%s257 + $0x20] sm:$0xff]
        %v753 = vld [vmem:[%s257 + $0x28] sm:$0xff]
        %v754 = vld [vmem:[%s257 + $0x30] sm:$0xff]
        %v755 = vld [vmem:[%s257 + $0x38] sm:$0xff]
        %v756 = vld [vmem:[%s257 + $0x40] sm:$0xff]
        %v757 = vld [vmem:[%s257 + $0x48] sm:$0xff]
        %v758 = vld [vmem:[%s257 + $0x50] sm:$0xff]
        %v759 = vld [vmem:[%s257 + $0x58] sm:$0xff]
        %v760 = vld [vmem:[%s257 + $0x60] sm:$0xff]
        %v761 = vld [vmem:[%s257 + $0x68] sm:$0xff]
        %v762 = vld [vmem:[%s257 + $0x70] sm:$0xff]
        %v763 = vld [vmem:[%s257 + $0x78] sm:$0xff]
        %v764 = vld [vmem:[%s257 + $0x80] sm:$0xff]
        %v765 = vld [vmem:[%s257 + $0x88] sm:$0xff]
        %v766 = vld [vmem:[%s257 + $0x90] sm:$0xff]
        %v767 = vld [vmem:[%s257 + $0x98] sm:$0xff]
        %v768 = vld [vmem:[%s257 + $0xa0] sm:$0xff]
        %v769 = vld [vmem:[%s257 + $0xa8] sm:$0xff]
        %v770 = vld [vmem:[%s257 + $0xb0] sm:$0xff]
        %v771 = vld [vmem:[%s257 + $0xb8] sm:$0xff]
        %v772 = vld [vmem:[%s257 + $0xc0] sm:$0xff]
        %v773 = vld [vmem:[%s257 + $0xc8] sm:$0xff]
        %v774 = vld [vmem:[%s257 + $0xd0] sm:$0xff]
        %v775 = vld [vmem:[%s257 + $0xd8] sm:$0xff]
        %v776 = vld [vmem:[%s257 + $0xe0] sm:$0xff]
        %v777 = vld [vmem:[%s257 + $0xe8] sm:$0xff]
        %v778 = vld [vmem:[%s257 + $0xf0] sm:$0xff]
        %v779 = vld [vmem:[%s257 + $0xf8] sm:$0xff]
        %v780 = vld [vmem:[%s249] sm:$0x1]
        %v782 = vlaneseq
        %v783 = vshrl.u32 %v782, 7
        %v784 = vsub.s32 0, %v783
        %v785 = vrot.slane %v780, %v784
        %v787 = vadd.f32 %v748, %v785
        %v788 = vadd.f32 %v749, %v785
        %v789 = vadd.f32 %v750, %v785
        %v790 = vadd.f32 %v751, %v785
        %v791 = vadd.f32 %v752, %v785
        %v792 = vadd.f32 %v753, %v785
        %v793 = vadd.f32 %v754, %v785
        %v794 = vadd.f32 %v755, %v785
        %v795 = vadd.f32 %v756, %v785
        %v796 = vadd.f32 %v757, %v785
        %v797 = vadd.f32 %v758, %v785
        %v798 = vadd.f32 %v759, %v785
        %v799 = vadd.f32 %v760, %v785
        %v800 = vadd.f32 %v761, %v785
        %v801 = vadd.f32 %v762, %v785
        %v802 = vadd.f32 %v763, %v785
        %v803 = vadd.f32 %v764, %v785
        %v804 = vadd.f32 %v765, %v785
        %v805 = vadd.f32 %v766, %v785
        %v806 = vadd.f32 %v767, %v785
        %v807 = vadd.f32 %v768, %v785
        %v808 = vadd.f32 %v769, %v785
        %v809 = vadd.f32 %v770, %v785
        %v810 = vadd.f32 %v771, %v785
        %v811 = vadd.f32 %v772, %v785
        %v812 = vadd.f32 %v773, %v785
        %v813 = vadd.f32 %v774, %v785
        %v814 = vadd.f32 %v775, %v785
        %v815 = vadd.f32 %v776, %v785
        %v816 = vadd.f32 %v777, %v785
        %v817 = vadd.f32 %v778, %v785
        %v818 = vadd.f32 %v779, %v785
        %819 = vst [vmem:[%s257] sm:$0xff] %v787
        %820 = vst [vmem:[%s257 + $0x8] sm:$0xff] %v788
        %821 = vst [vmem:[%s257 + $0x10] sm:$0xff] %v789
        %822 = vst [vmem:[%s257 + $0x18] sm:$0xff] %v790
        %823 = vst [vmem:[%s257 + $0x20] sm:$0xff] %v791
        %824 = vst [vmem:[%s257 + $0x28] sm:$0xff] %v792
        %825 = vst [vmem:[%s257 + $0x30] sm:$0xff] %v793
        %826 = vst [vmem:[%s257 + $0x38] sm:$0xff] %v794
        %827 = vst [vmem:[%s257 + $0x40] sm:$0xff] %v795
        %828 = vst [vmem:[%s257 + $0x48] sm:$0xff] %v796
        %829 = vst [vmem:[%s257 + $0x50] sm:$0xff] %v797
        %830 = vst [vmem:[%s257 + $0x58] sm:$0xff] %v798
        %831 = vst [vmem:[%s257 + $0x60] sm:$0xff] %v799
        %832 = vst [vmem:[%s257 + $0x68] sm:$0xff] %v800
        %833 = vst [vmem:[%s257 + $0x70] sm:$0xff] %v801
        %834 = vst [vmem:[%s257 + $0x78] sm:$0xff] %v802
        %835 = vst [vmem:[%s257 + $0x80] sm:$0xff] %v803
        %836 = vst [vmem:[%s257 + $0x88] sm:$0xff] %v804
        %837 = vst [vmem:[%s257 + $0x90] sm:$0xff] %v805
        %838 = vst [vmem:[%s257 + $0x98] sm:$0xff] %v806
        %839 = vst [vmem:[%s257 + $0xa0] sm:$0xff] %v807
        %840 = vst [vmem:[%s257 + $0xa8] sm:$0xff] %v808
        %841 = vst [vmem:[%s257 + $0xb0] sm:$0xff] %v809
        %842 = vst [vmem:[%s257 + $0xb8] sm:$0xff] %v810
        %843 = vst [vmem:[%s257 + $0xc0] sm:$0xff] %v811
        %844 = vst [vmem:[%s257 + $0xc8] sm:$0xff] %v812
        %845 = vst [vmem:[%s257 + $0xd0] sm:$0xff] %v813
        %846 = vst [vmem:[%s257 + $0xd8] sm:$0xff] %v814
        %847 = vst [vmem:[%s257 + $0xe0] sm:$0xff] %v815
        %848 = vst [vmem:[%s257 + $0xe8] sm:$0xff] %v816
        %849 = vst [vmem:[%s257 + $0xf0] sm:$0xff] %v817
        %850 = vst [vmem:[%s257 + $0xf8] sm:$0xff] %v818
      $region40: #{shiftmlp_forward.3} parent=31 // pred_fallthru
        _
      %s851 = smul.u32 32, %s19
      %p852 = scmp.lt.s32.totalorder %s851, 63
      %s853 = scalar_select %p852, %s851, 63
      %p854 = scmp.lt.s32.totalorder %s20, 0
      %s855 = scalar_select %p854, %s20, 0
      %s856 = sadd.s32 %s855, %s853
      %s857 = smul.addr %s856, 8
      %s858 = scalar_lea.vmem %s3, %s857
      // Predicated region
      $region41: #{shiftmlp_forward.3} parent=31 // pred_check
        %p859 = pneg %p135
      $region42: #{shiftmlp_forward.3} parent=31 // pred_check_branch
        %861 = sbr.rel (%p859) target = $region44
      $region43: #{shiftmlp_forward.3} parent=31 // pred_region
        %s862 = smul.u32 32, %s19
      $region44: #{shiftmlp_forward.3} parent=31 // pred_fallthru
        _
    $region32: #{shiftmlp_forward.3} parent=5 // pred_fallthru
      _
    %p863 = scmp.le.s32.totalorder 2, %s9
    // Predicated region
    $region45: #{shiftmlp_forward.3} parent=5 // pred_check
      %p864 = pneg %p863
    $region46: #{shiftmlp_forward.3} parent=5 // pred_check_branch
      %866 = sbr.rel (%p864) target = $region48
    $region47: #{shiftmlp_forward.3} parent=5 // pred_region
      %s867 = ssub.s32 %s9, 2
      // Predicated region
      $region49: #{shiftmlp_forward.3} parent=47 // pred_check
        %p868 = pneg %p141
      $region50: #{shiftmlp_forward.3} parent=47 // pred_check_branch
        %870 = sbr.rel (%p868) target = $region52
      $region51: #{shiftmlp_forward.3} parent=47 // pred_region
        %s871 = smul.u32 32, %s22
        %p872 = scmp.lt.s32.totalorder %s871, 63
        %s873 = scalar_select %p872, %s871, 63
        %p874 = scmp.lt.s32.totalorder %s23, 0
        %s875 = scalar_select %p874, %s23, 0
        %s876 = sadd.s32 %s875, %s873
        %s877 = smul.addr %s876, 8
        %s878 = scalar_lea.vmem %s3, %s877
      $region52: #{shiftmlp_forward.3} parent=47 // pred_fallthru
        _
    $region48: #{shiftmlp_forward.3} parent=5 // pred_fallthru
      _
  $region6: #{shiftmlp_forward.3} parent=0 // loop_footer
    %s13 = sadd.s32 1, %s9
  $region7: #{shiftmlp_forward.3} parent=0 // loop_footer_branch
    %8 = sbr.rel target = $region3
  $region8: #{shiftmlp_forward.3} parent=0 // loop_exit
    _

// kernel: shiftmlp_forward.4
$region0: #{shiftmlp_forward.4}
  #allocation0 [shape = 'u32[]', space=smem, size = 0x4, offset = 0x4, fixed_abs, tag = 'smem constant byte address 0x4 - core index']
  #allocation1 [shape = 'u32[144,128]{1,0:T(1,128)}', space=vmem, size = 0x12000, scoped, tag = 'internal scratch']
  %s0 = inlined_call_operand.vmem [shape: f32[2,18,18,64], index: 0, kind: input, shape index: {}]
  %s1 = inlined_call_operand.vmem [shape: f32[9,1,1,64], index: 1, kind: input, shape index: {}]
  %s2 = inlined_call_operand.vmem [shape: f32[1,1,64], index: 2, kind: input, shape index: {}]
  %s3 = inlined_call_operand.vmem [shape: f32[2,16,16,64], index: 3, kind: output, shape index: {}]
  %s4 = sld [smem:[#allocation0]]
  $region45: #{shiftmlp_forward.4} parent=0
    _
  %s6 = ssub.s32 1, %s4
  %s7 = scalar_select 0, %s6, %s4
  loop: start=0, step=1, limit=4
  $region2: #{shiftmlp_forward.4} parent=0 // loop_pre_header
    _
  $region3: #{shiftmlp_forward.4} parent=0 // loop_header
    %s9 = sphi 0, %s13
    %p10 = scmp.ge.s32.totalorder %s9, 4
    %s16 = sphi 0, %s28
    %s17 = sphi 0, %s24
    %s18 = sphi 0, %s16
    %s19 = sphi 0, %s17
    %s20 = sphi 0, %s18
    %s21 = sphi 0, %s19
    %s33 = sphi 0, %s35
    %s36 = sphi 0, %s33
    %s37 = sphi 0, %s36
    %s53 = sphi 0, %s37
    %s59 = sphi 0, %s61
    %s62 = sphi 0, %s59
    %s63 = sphi 0, %s62
    %s79 = sphi 0, %s63
    %s85 = sphi 0, %s87
    %s88 = sphi 0, %s85
    %s89 = sphi 0, %s88
    %s105 = sphi 0, %s89
    %s113 = sphi 0, %s115
    %s116 = sphi 0, %s113
    %s117 = sphi 0, %s116
    %s133 = sphi 0, %s117
  $region4: #{shiftmlp_forward.4} parent=0 // loop_header_branch
    %12 = sbr.rel (%p10) target = $region8
  $region5: #{shiftmlp_forward.4} parent=0 // loop_body
    %s14 = ssub.s32 %s9, 1
    %s15 = ssub.s32 %s9, 2
    %s22 = sadd.s32 1, %s17
    %p23 = scmp.ge.s32.totalorder %s22, 1
    %s24 = scalar_select %p23, 0, %s22
    %s25 = sadd.s32 1, %s16
    %s26 = scalar_select %p23, %s25, %s16
    %p27 = scmp.ge.s32.totalorder %s26, 2
    %s28 = scalar_select %p27, 0, %s26
    %s29 = ssub.s32 %s16, %s28
    %s30 = ssub.s32 %s17, %s24
    %s31 = sor.u32 %s29, %s30
    %p32 = scmp.eq.s32.totalorder %s31, 0
    %s34 = sadd.s32 %s33, 1
    %s35 = scalar_select %p32, %s33, %s34
    %p38 = pneg %p32
    %p39 = scmp.eq.s32.totalorder %s9, 1
    %p40 = por %p38, %p39
    %p41 = scmp.ne.s32.totalorder %s33, %s36
    %p42 = scmp.eq.s32.totalorder %s9, 0
    %p43 = por %p41, %p42
    %p44 = scmp.ne.s32.totalorder %s33, %s36
    %p45 = scmp.eq.s32.totalorder %s14, 1
    %p46 = por %p44, %p45
    %p47 = scmp.ne.s32.totalorder %s36, %s37
    %p48 = scmp.eq.s32.totalorder %s14, 0
    %p49 = por %p47, %p48
    %p50 = scmp.ne.s32.totalorder %s36, %s37
    %p51 = scmp.eq.s32.totalorder %s15, 1
    %p52 = por %p50, %p51
    %p54 = scmp.ne.s32.totalorder %s37, %s53
    %p55 = scmp.eq.s32.totalorder %s15, 0
    %p56 = por %p54, %p55
    %s57 = ssub.s32 %s17, %s24
    %p58 = scmp.eq.s32.totalorder %s57, 0
    %s60 = sadd.s32 %s59, 1
    %s61 = scalar_select %p58, %s59, %s60
    %p64 = pneg %p58
    %p65 = scmp.eq.s32.totalorder %s9, 1
    %p66 = por %p64, %p65
    %p67 = scmp.ne.s32.totalorder %s59, %s62
    %p68 = scmp.eq.s32.totalorder %s9, 0
    %p69 = por %p67, %p68
    %p70 = scmp.ne.s32.totalorder %s59, %s62
    %p71 = scmp.eq.s32.totalorder %s14, 1
    %p72 = por %p70, %p71
    %p73 = scmp.ne.s32.totalorder %s62, %s63
    %p74 = scmp.eq.s32.totalorder %s14, 0
    %p75 = por %p73, %p74
    %p76 = scmp.ne.s32.totalorder %s62, %s63
    %p77 = scmp.eq.s32.totalorder %s15, 1
    %p78 = por %p76, %p77
    %p80 = scmp.ne.s32.totalorder %s63, %s79
    %p81 = scmp.eq.s32.totalorder %s15, 0
    %p82 = por %p80, %p81
    %s83 = ssub.s32 %s17, %s24
    %p84 = scmp.eq.s32.totalorder %s83, 0
    %s86 = sadd.s32 %s85, 1
    %s87 = scalar_select %p84, %s85, %s86
    %p90 = pneg %p84
    %p91 = scmp.eq.s32.totalorder %s9, 1
    %p92 = por %p90, %p91
    %p93 = scmp.ne.s32.totalorder %s85, %s88
    %p94 = scmp.eq.s32.totalorder %s9, 0
    %p95 = por %p93, %p94
    %p96 = scmp.ne.s32.totalorder %s85, %s88
    %p97 = scmp.eq.s32.totalorder %s14, 1
    %p98 = por %p96, %p97
    %p99 = scmp.ne.s32.totalorder %s88, %s89
    %p100 = scmp.eq.s32.totalorder %s14, 0
    %p101 = por %p99, %p100
    %p102 = scmp.ne.s32.totalorder %s88, %s89
    %p103 = scmp.eq.s32.totalorder %s15, 1
    %p104 = por %p102, %p103
    %p106 = scmp.ne.s32.totalorder %s89, %s105
    %p107 = scmp.eq.s32.totalorder %s15, 0
    %p108 = por %p106, %p107
    %s109 = ssub.s32 %s16, %s28
    %s110 = ssub.s32 %s17, %s24
    %s111 = sor.u32 %s109, %s110
    %p112 = scmp.eq.s32.totalorder %s111, 0
    %s114 = sadd.s32 %s113, 1
    %s115 = scalar_select %p112, %s113, %s114
    %p118 = pneg %p112
    %p119 = scmp.eq.s32.totalorder %s9, 1
    %p120 = por %p118, %p119
    %p121 = scmp.ne.s32.totalorder %s113, %s116
    %p122 = scmp.eq.s32.totalorder %s9, 0
    %p123 = por %p121, %p122
    %p124 = scmp.ne.s32.totalorder %s113, %s116
    %p125 = scmp.eq.s32.totalorder %s14, 1
    %p126 = por %p124, %p125
    %p127 = scmp.ne.s32.totalorder %s116, %s117
    %p128 = scmp.eq.s32.totalorder %s14, 0
    %p129 = por %p127, %p128
    %p130 = scmp.ne.s32.totalorder %s116, %s117
    %p131 = scmp.eq.s32.totalorder %s15, 1
    %p132 = por %p130, %p131
    %p134 = scmp.ne.s32.totalorder %s117, %s133
    %p135 = scmp.eq.s32.totalorder %s15, 0
    %p136 = por %p134, %p135
    %p137 = scmp.le.s32.totalorder 1, %s9
    %p138 = scmp.lt.s32.totalorder %s9, 3
    %p139 = pnand %p137, %p138
    %p140 = pneg %p139
    // Predicated region
    $region9: #{shiftmlp_forward.4} parent=5 // pred_check
      _
    $region10: #{shiftmlp_forward.4} parent=5 // pred_check_branch
      %142 = sbr.rel (%p139) target = $region12
    $region11: #{shiftmlp_forward.4} parent=5 // pred_region
      %s143 = ssub.s32 %s9, 1
      // Predicated region
      $region13: #{shiftmlp_forward.4} parent=11 // pred_check
        %p144 = pneg %p75
      $region14: #{shiftmlp_forward.4} parent=11 // pred_check_branch
        %146 = sbr.rel (%p144) target = $region16
      $region15: #{shiftmlp_forward.4} parent=11 // pred_region
        %p147 = scmp.lt.s32.totalorder %s19, 0
        %s148 = scalar_select %p147, %s19, 0
        %s149 = scalar_lea.vmem %s1, %s148
      $region16: #{shiftmlp_forward.4} parent=11 // pred_fallthru
        _
      // Predicated region
      $region17: #{shiftmlp_forward.4} parent=11 // pred_check
        %p150 = pneg %p101
      $region18: #{shiftmlp_forward.4} parent=11 // pred_check_branch
        %152 = sbr.rel (%p150) target = $region20
      $region19: #{shiftmlp_forward.4} parent=11 // pred_region
        %p153 = scmp.lt.s32.totalorder %s19, 0
        %s154 = scalar_select %p153, %s19, 0
        %s155 = scalar_lea.vmem %s2, %s154
      $region20: #{shiftmlp_forward.4} parent=11 // pred_fallthru
        _
    $region12: #{shiftmlp_forward.4} parent=5 // pred_fallthru
      _
    %p156 = scmp.lt.s32.totalorder %s9, 2
    // Predicated region
    $region21: #{shiftmlp_forward.4} parent=5 // pred_check
      %p157 = pneg %p156
    $region22: #{shiftmlp_forward.4} parent=5 // pred_check_branch
      %159 = sbr.rel (%p157) target = $region24
    $region23: #{shiftmlp_forward.4} parent=5 // pred_region
      // Predicated region
      $region25: #{shiftmlp_forward.4} parent=23 // pred_check
        %p160 = pneg %p43
      $region26: #{shiftmlp_forward.4} parent=23 // pred_check_branch
        %162 = sbr.rel (%p160) target = $region28
      $region27: #{shiftmlp_forward.4} parent=23 // pred_region
        %p163 = scmp.lt.s32.totalorder %s16, 1
        %s164 = scalar_select %p163, %s16, 1
        %p165 = scmp.lt.s32.totalorder %s17, 0
        %s166 = scalar_select %p165, %s17, 0
        %s167 = smul.addr %s164, 54
        %s168 = sadd.s32 %s166, %s167
        %s169 = smul.addr %s168, 8
        %s170 = scalar_lea.vmem %s0, %s169
      $region28: #{shiftmlp_forward.4} parent=23 // pred_fallthru
        _
    $region24: #{shiftmlp_forward.4} parent=5 // pred_fallthru
      _
    %p171 = scmp.le.s32.totalorder 1, %s9
    %p172 = scmp.lt.s32.totalorder %s9, 3
    %p173 = pnand %p171, %p172
    %p174 = pneg %p173
    // Predicated region
    $region29: #{shiftmlp_forward.4} parent=5 // pred_check
      _
    $region30: #{shiftmlp_forward.4} parent=5 // pred_check_branch
      %176 = sbr.rel (%p173) target = $region32
    $region31: #{shiftmlp_forward.4} parent=5 // pred_region
      %s177 = ssub.s32 %s9, 1
      %p178 = scmp.lt.s32.totalorder %s18, 1
      %s179 = scalar_select %p178, %s18, 1
      %p180 = scmp.lt.s32.totalorder %s19, 0
      %s181 = scalar_select %p180, %s19, 0
      %s182 = smul.addr %s179, 54
      %s183 = sadd.s32 %s181, %s182
      %s184 = smul.addr %s183, 8
      %s185 = scalar_lea.vmem %s0, %s184
      %p186 = pneg %p49
      %p187 = pneg %p46
      %p188 = scmp.lt.s32.totalorder %s19, 0
      %s189 = scalar_select %p188, %s19, 0
      %s190 = scalar_lea.vmem %s1, %s189
      %p191 = pneg %p75
      %p192 = pneg %p72
      %p193 = scmp.lt.s32.totalorder %s19, 0
      %s194 = scalar_select %p193, %s19, 0
      %s195 = scalar_lea.vmem %s2, %s194
      %p196 = pneg %p101
      %p197 = pneg %p98
      %p198 = pneg %p129
      %p199 = pneg %p126
      %p200 = scmp.lt.s32.totalorder %s18, 1
      %s201 = scalar_select %p200, %s18, 1
      %p202 = scmp.lt.s32.totalorder %s19, 0
      %s203 = scalar_select %p202, %s19, 0
      %s204 = smul.addr %s201, 32
      %s205 = sadd.s32 %s203, %s204
      %s206 = smul.addr %s205, 8
      %s207 = scalar_lea.vmem %s3, %s206
      %p208 = scmp.lt.s32.totalorder %s18, 1
      %s209 = scalar_select %p208, %s18, 1
      %p210 = scmp.lt.s32.totalorder %s19, 0
      %s211 = scalar_select %p210, %s19, 0
      %s212 = smul.addr %s209, 54
      %s213 = sadd.s32 %s211, %s212
      %s214 = smul.addr %s213, 8
      %s215 = scalar_lea.vmem %s0, %s214
      %p216 = scmp.lt.s32.totalorder %s19, 0
      %s217 = scalar_select %p216, %s19, 0
      %s218 = scalar_lea.vmem %s1, %s217
      %p219 = scmp.lt.s32.totalorder %s19, 0
      %s220 = scalar_select %p219, %s19, 0
      %s221 = scalar_lea.vmem %s2, %s220
      %p222 = scmp.lt.s32.totalorder %s18, 1
      %s223 = scalar_select %p222, %s18, 1
      %p224 = scmp.lt.s32.totalorder %s19, 0
      %s225 = scalar_select %p224, %s19, 0
      %s226 = smul.addr %s223, 32
      %s227 = sadd.s32 %s225, %s226
      %s228 = smul.addr %s227, 8
      %s229 = scalar_lea.vmem %s3, %s228
      %v230 = vld [vmem:[%s215] sm:$0xff]
      %v231 = vld [vmem:[%s215 + $0x8] sm:$0xff]
      %v232 = vld [vmem:[%s215 + $0x18] sm:$0xff]
      %v233 = vld [vmem:[%s215 + $0x20] sm:$0xff]
      %v234 = vld [vmem:[%s215 + $0x30] sm:$0xff]
      %v235 = vld [vmem:[%s215 + $0x38] sm:$0xff]
      %v236 = vld [vmem:[%s215 + $0x48] sm:$0xff]
      %v237 = vld [vmem:[%s215 + $0x50] sm:$0xff]
      %v238 = vld [vmem:[%s215 + $0x60] sm:$0xff]
      %v239 = vld [vmem:[%s215 + $0x68] sm:$0xff]
      %v240 = vld [vmem:[%s215 + $0x78] sm:$0xff]
      %v241 = vld [vmem:[%s215 + $0x80] sm:$0xff]
      %v242 = vld [vmem:[%s215 + $0x90] sm:$0xff]
      %v243 = vld [vmem:[%s215 + $0x98] sm:$0xff]
      %v244 = vld [vmem:[%s215 + $0xa8] sm:$0xff]
      %v245 = vld [vmem:[%s215 + $0xb0] sm:$0xff]
      %v246 = vld [vmem:[%s215 + $0xc0] sm:$0xff]
      %v247 = vld [vmem:[%s215 + $0xc8] sm:$0xff]
      %v248 = vld [vmem:[%s215 + $0xd8] sm:$0xff]
      %v249 = vld [vmem:[%s215 + $0xe0] sm:$0xff]
      %v250 = vld [vmem:[%s215 + $0xf0] sm:$0xff]
      %v251 = vld [vmem:[%s215 + $0xf8] sm:$0xff]
      %v252 = vld [vmem:[%s215 + $0x108] sm:$0xff]
      %v253 = vld [vmem:[%s215 + $0x110] sm:$0xff]
      %v254 = vld [vmem:[%s215 + $0x120] sm:$0xff]
      %v255 = vld [vmem:[%s215 + $0x128] sm:$0xff]
      %v256 = vld [vmem:[%s215 + $0x138] sm:$0xff]
      %v257 = vld [vmem:[%s215 + $0x140] sm:$0xff]
      %v258 = vld [vmem:[%s215 + $0x150] sm:$0xff]
      %v259 = vld [vmem:[%s215 + $0x158] sm:$0xff]
      %v260 = vld [vmem:[%s215 + $0x168] sm:$0xff]
      %v261 = vld [vmem:[%s215 + $0x170] sm:$0xff]
      %v262 = vld [vmem:[%s218] sm:$0x1]
      %v264 = vlaneseq
      %v265 = vshrl.u32 %v264, 7
      %v266 = vsub.s32 0, %v265
      %v267 = vrot.slane %v262, %v266
      %v269 = vmul.f32 %v230, %v267
      %v270 = vmul.f32 %v231, %v267
      %v271 = vmul.f32 %v232, %v267
      %v272 = vmul.f32 %v233, %v267
      %v273 = vmul.f32 %v234, %v267
      %v274 = vmul.f32 %v235, %v267
      %v275 = vmul.f32 %v236, %v267
      %v276 = vmul.f32 %v237, %v267
      %v277 = vmul.f32 %v238, %v267
      %v278 = vmul.f32 %v239, %v267
      %v279 = vmul.f32 %v240, %v267
      %v280 = vmul.f32 %v241, %v267
      %v281 = vmul.f32 %v242, %v267
      %v282 = vmul.f32 %v243, %v267
      %v283 = vmul.f32 %v244, %v267
      %v284 = vmul.f32 %v245, %v267
      %v285 = vmul.f32 %v246, %v267
      %v286 = vmul.f32 %v247, %v267
      %v287 = vmul.f32 %v248, %v267
      %v288 = vmul.f32 %v249, %v267
      %v289 = vmul.f32 %v250, %v267
      %v290 = vmul.f32 %v251, %v267
      %v291 = vmul.f32 %v252, %v267
      %v292 = vmul.f32 %v253, %v267
      %v293 = vmul.f32 %v254, %v267
      %v294 = vmul.f32 %v255, %v267
      %v295 = vmul.f32 %v256, %v267
      %v296 = vmul.f32 %v257, %v267
      %v297 = vmul.f32 %v258, %v267
      %v298 = vmul.f32 %v259, %v267
      %v299 = vmul.f32 %v260, %v267
      %v300 = vmul.f32 %v261, %v267
      %v301 = vld [vmem:[%s221] sm:$0x1]
      %v303 = vlaneseq
      %v304 = vshrl.u32 %v303, 7
      %v305 = vsub.s32 0, %v304
      %v306 = vrot.slane %v301, %v305
      %v308 = vadd.f32 %v269, %v306
      %v309 = vadd.f32 %v270, %v306
      %v310 = vadd.f32 %v271, %v306
      %v311 = vadd.f32 %v272, %v306
      %v312 = vadd.f32 %v273, %v306
      %v313 = vadd.f32 %v274, %v306
      %v314 = vadd.f32 %v275, %v306
      %v315 = vadd.f32 %v276, %v306
      %v316 = vadd.f32 %v277, %v306
      %v317 = vadd.f32 %v278, %v306
      %v318 = vadd.f32 %v279, %v306
      %v319 = vadd.f32 %v280, %v306
      %v320 = vadd.f32 %v281, %v306
      %v321 = vadd.f32 %v282, %v306
      %v322 = vadd.f32 %v283, %v306
      %v323 = vadd.f32 %v284, %v306
      %v324 = vadd.f32 %v285, %v306
      %v325 = vadd.f32 %v286, %v306
      %v326 = vadd.f32 %v287, %v306
      %v327 = vadd.f32 %v288, %v306
      %v328 = vadd.f32 %v289, %v306
      %v329 = vadd.f32 %v290, %v306
      %v330 = vadd.f32 %v291, %v306
      %v331 = vadd.f32 %v292, %v306
      %v332 = vadd.f32 %v293, %v306
      %v333 = vadd.f32 %v294, %v306
      %v334 = vadd.f32 %v295, %v306
      %v335 = vadd.f32 %v296, %v306
      %v336 = vadd.f32 %v297, %v306
      %v337 = vadd.f32 %v298, %v306
      %v338 = vadd.f32 %v299, %v306
      %v339 = vadd.f32 %v300, %v306
      %v340 = vld [vmem:[%s215 + $0x1] sm:$0xff]
      %v341 = vld [vmem:[%s215 + $0x9] sm:$0xff]
      %v342 = vld [vmem:[%s215 + $0x19] sm:$0xff]
      %v343 = vld [vmem:[%s215 + $0x21] sm:$0xff]
      %v344 = vld [vmem:[%s215 + $0x31] sm:$0xff]
      %v345 = vld [vmem:[%s215 + $0x39] sm:$0xff]
      %v346 = vld [vmem:[%s215 + $0x49] sm:$0xff]
      %v347 = vld [vmem:[%s215 + $0x51] sm:$0xff]
      %v348 = vld [vmem:[%s215 + $0x61] sm:$0xff]
      %v349 = vld [vmem:[%s215 + $0x69] sm:$0xff]
      %v350 = vld [vmem:[%s215 + $0x79] sm:$0xff]
      %v351 = vld [vmem:[%s215 + $0x81] sm:$0xff]
      %v352 = vld [vmem:[%s215 + $0x91] sm:$0xff]
      %v353 = vld [vmem:[%s215 + $0x99] sm:$0xff]
      %v354 = vld [vmem:[%s215 + $0xa9] sm:$0xff]
      %v355 = vld [vmem:[%s215 + $0xb1] sm:$0xff]
      %v356 = vld [vmem:[%s215 + $0xc1] sm:$0xff]
      %v357 = vld [vmem:[%s215 + $0xc9] sm:$0xff]
      %v358 = vld [vmem:[%s215 + $0xd9] sm:$0xff]
      %v359 = vld [vmem:[%s215 + $0xe1] sm:$0xff]
      %v360 = vld [vmem:[%s215 + $0xf1] sm:$0xff]
      %v361 = vld [vmem:[%s215 + $0xf9] sm:$0xff]
      %v362 = vld [vmem:[%s215 + $0x109] sm:$0xff]
      %v363 = vld [vmem:[%s215 + $0x111] sm:$0xff]
      %v364 = vld [vmem:[%s215 + $0x121] sm:$0xff]
      %v365 = vld [vmem:[%s215 + $0x129] sm:$0xff]
      %v366 = vld [vmem:[%s215 + $0x139] sm:$0xff]
      %v367 = vld [vmem:[%s215 + $0x141] sm:$0xff]
      %v368 = vld [vmem:[%s215 + $0x151] sm:$0xff]
      %v369 = vld [vmem:[%s215 + $0x159] sm:$0xff]
      %v370 = vld [vmem:[%s215 + $0x169] sm:$0xff]
      %v371 = vld [vmem:[%s215 + $0x171] sm:$0xff]
      %s372 = scalar_lea.vmem %s218, 1
      %v373 = vld [vmem:[%s372] sm:$0x1]
      %v375 = vlaneseq
      %v376 = vshrl.u32 %v375, 7
      %v377 = vsub.s32 0, %v376
      %v378 = vrot.slane %v373, %v377
      %v380 = vmul.f32 %v340, %v378
      %v381 = vmul.f32 %v341, %v378
      %v382 = vmul.f32 %v342, %v378
      %v383 = vmul.f32 %v343, %v378
      %v384 = vmul.f32 %v344, %v378
      %v385 = vmul.f32 %v345, %v378
      %v386 = vmul.f32 %v346, %v378
      %v387 = vmul.f32 %v347, %v378
      %v388 = vmul.f32 %v348, %v378
      %v389 = vmul.f32 %v349, %v378
      %v390 = vmul.f32 %v350, %v378
      %v391 = vmul.f32 %v351, %v378
      %v392 = vmul.f32 %v352, %v378
      %v393 = vmul.f32 %v353, %v378
      %v394 = vmul.f32 %v354, %v378
      %v395 = vmul.f32 %v355, %v378
      %v396 = vmul.f32 %v356, %v378
      %v397 = vmul.f32 %v357, %v378
      %v398 = vmul.f32 %v358, %v378
      %v399 = vmul.f32 %v359, %v378
      %v400 = vmul.f32 %v360, %v378
      %v401 = vmul.f32 %v361, %v378
      %v402 = vmul.f32 %v362, %v378
      %v403 = vmul.f32 %v363, %v378
      %v404 = vmul.f32 %v364, %v378
      %v405 = vmul.f32 %v365, %v378
      %v406 = vmul.f32 %v366, %v378
      %v407 = vmul.f32 %v367, %v378
      %v408 = vmul.f32 %v368, %v378
      %v409 = vmul.f32 %v369, %v378
      %v410 = vmul.f32 %v370, %v378
      %v411 = vmul.f32 %v371, %v378
      %v412 = vadd.f32 %v308, %v380
      %v413 = vadd.f32 %v309, %v381
      %v414 = vadd.f32 %v310, %v382
      %v415 = vadd.f32 %v311, %v383
      %v416 = vadd.f32 %v312, %v384
      %v417 = vadd.f32 %v313, %v385
      %v418 = vadd.f32 %v314, %v386
      %v419 = vadd.f32 %v315, %v387
      %v420 = vadd.f32 %v316, %v388
      %v421 = vadd.f32 %v317, %v389
      %v422 = vadd.f32 %v318, %v390
      %v423 = vadd.f32 %v319, %v391
      %v424 = vadd.f32 %v320, %v392
      %v425 = vadd.f32 %v321, %v393
      %v426 = vadd.f32 %v322, %v394
      %v427 = vadd.f32 %v323, %v395
      %v428 = vadd.f32 %v324, %v396
      %v429 = vadd.f32 %v325, %v397
      %v430 = vadd.f32 %v326, %v398
      %v431 = vadd.f32 %v327, %v399
      %v432 = vadd.f32 %v328, %v400
      %v433 = vadd.f32 %v329, %v401
      %v434 = vadd.f32 %v330, %v402
      %v435 = vadd.f32 %v331, %v403
      %v436 = vadd.f32 %v332, %v404
      %v437 = vadd.f32 %v333, %v405
      %v438 = vadd.f32 %v334, %v406
      %v439 = vadd.f32 %v335, %v407
      %v440 = vadd.f32 %v336, %v408
      %v441 = vadd.f32 %v337, %v409
      %v442 = vadd.f32 %v338, %v410
      %v443 = vadd.f32 %v339, %v411
      %v444 = vld [vmem:[%s215 + $0x2] sm:$0xff]
      %v445 = vld [vmem:[%s215 + $0xa] sm:$0xff]
      %v446 = vld [vmem:[%s215 + $0x1a] sm:$0xff]
      %v447 = vld [vmem:[%s215 + $0x22] sm:$0xff]
      %v448 = vld [vmem:[%s215 + $0x32] sm:$0xff]
      %v449 = vld [vmem:[%s215 + $0x3a] sm:$0xff]
      %v450 = vld [vmem:[%s215 + $0x4a] sm:$0xff]
      %v451 = vld [vmem:[%s215 + $0x52] sm:$0xff]
      %v452 = vld [vmem:[%s215 + $0x62] sm:$0xff]
      %v453 = vld [vmem:[%s215 + $0x6a] sm:$0xff]
      %v454 = vld [vmem:[%s215 + $0x7a] sm:$0xff]
      %v455 = vld [vmem:[%s215 + $0x82] sm:$0xff]
      %v456 = vld [vmem:[%s215 + $0x92] sm:$0xff]
      %v457 = vld [vmem:[%s215 + $0x9a] sm:$0xff]
      %v458 = vld [vmem:[%s215 + $0xaa] sm:$0xff]
      %v459 = vld [vmem:[%s215 + $0xb2] sm:$0xff]
      %v460 = vld [vmem:[%s215 + $0xc2] sm:$0xff]
      %v461 = vld [vmem:[%s215 + $0xca] sm:$0xff]
      %v462 = vld [vmem:[%s215 + $0xda] sm:$0xff]
      %v463 = vld [vmem:[%s215 + $0xe2] sm:$0xff]
      %v464 = vld [vmem:[%s215 + $0xf2] sm:$0xff]
      %v465 = vld [vmem:[%s215 + $0xfa] sm:$0xff]
      %v466 = vld [vmem:[%s215 + $0x10a] sm:$0xff]
      %v467 = vld [vmem:[%s215 + $0x112] sm:$0xff]
      %v468 = vld [vmem:[%s215 + $0x122] sm:$0xff]
      %v469 = vld [vmem:[%s215 + $0x12a] sm:$0xff]
      %v470 = vld [vmem:[%s215 + $0x13a] sm:$0xff]
      %v471 = vld [vmem:[%s215 + $0x142] sm:$0xff]
      %v472 = vld [vmem:[%s215 + $0x152] sm:$0xff]
      %v473 = vld [vmem:[%s215 + $0x15a] sm:$0xff]
      %v474 = vld [vmem:[%s215 + $0x16a] sm:$0xff]
      %v475 = vld [vmem:[%s215 + $0x172] sm:$0xff]
      %s476 = scalar_lea.vmem %s218, 2
      %v477 = vld [vmem:[%s476] sm:$0x1]
      %v479 = vlaneseq
      %v480 = vshrl.u32 %v479, 7
      %v481 = vsub.s32 0, %v480
      %v482 = vrot.slane %v477, %v481
      %v484 = vmul.f32 %v444, %v482
      %v485 = vmul.f32 %v445, %v482
      %v486 = vmul.f32 %v446, %v482
      %v487 = vmul.f32 %v447, %v482
      %v488 = vmul.f32 %v448, %v482
      %v489 = vmul.f32 %v449, %v482
      %v490 = vmul.f32 %v450, %v482
      %v491 = vmul.f32 %v451, %v482
      %v492 = vmul.f32 %v452, %v482
      %v493 = vmul.f32 %v453, %v482
      %v494 = vmul.f32 %v454, %v482
      %v495 = vmul.f32 %v455, %v482
      %v496 = vmul.f32 %v456, %v482
      %v497 = vmul.f32 %v457, %v482
      %v498 = vmul.f32 %v458, %v482
      %v499 = vmul.f32 %v459, %v482
      %v500 = vmul.f32 %v460, %v482
      %v501 = vmul.f32 %v461, %v482
      %v502 = vmul.f32 %v462, %v482
      %v503 = vmul.f32 %v463, %v482
      %v504 = vmul.f32 %v464, %v482
      %v505 = vmul.f32 %v465, %v482
      %v506 = vmul.f32 %v466, %v482
      %v507 = vmul.f32 %v467, %v482
      %v508 = vmul.f32 %v468, %v482
      %v509 = vmul.f32 %v469, %v482
      %v510 = vmul.f32 %v470, %v482
      %v511 = vmul.f32 %v471, %v482
      %v512 = vmul.f32 %v472, %v482
      %v513 = vmul.f32 %v473, %v482
      %v514 = vmul.f32 %v474, %v482
      %v515 = vmul.f32 %v475, %v482
      %v516 = vadd.f32 %v412, %v484
      %v517 = vadd.f32 %v413, %v485
      %v518 = vadd.f32 %v414, %v486
      %v519 = vadd.f32 %v415, %v487
      %v520 = vadd.f32 %v416, %v488
      %v521 = vadd.f32 %v417, %v489
      %v522 = vadd.f32 %v418, %v490
      %v523 = vadd.f32 %v419, %v491
      %v524 = vadd.f32 %v420, %v492
      %v525 = vadd.f32 %v421, %v493
      %v526 = vadd.f32 %v422, %v494
      %v527 = vadd.f32 %v423, %v495
      %v528 = vadd.f32 %v424, %v496
      %v529 = vadd.f32 %v425, %v497
      %v530 = vadd.f32 %v426, %v498
      %v531 = vadd.f32 %v427, %v499
      %v532 = vadd.f32 %v428, %v500
      %v533 = vadd.f32 %v429, %v501
      %v534 = vadd.f32 %v430, %v502
      %v535 = vadd.f32 %v431, %v503
      %v536 = vadd.f32 %v432, %v504
      %v537 = vadd.f32 %v433, %v505
      %v538 = vadd.f32 %v434, %v506
      %v539 = vadd.f32 %v435, %v507
      %v540 = vadd.f32 %v436, %v508
      %v541 = vadd.f32 %v437, %v509
      %v542 = vadd.f32 %v438, %v510
      %v543 = vadd.f32 %v439, %v511
      %v544 = vadd.f32 %v440, %v512
      %v545 = vadd.f32 %v441, %v513
      %v546 = vadd.f32 %v442, %v514
      %v547 = vadd.f32 %v443, %v515
      %s548 = scalar_lea.vmem %s215, 24
      %v549 = vld [vmem:[%s548] sm:$0xff]
      %v550 = vld [vmem:[%s548 + $0x8] sm:$0xff]
      %v551 = vld [vmem:[%s548 + $0x18] sm:$0xff]
      %v552 = vld [vmem:[%s548 + $0x20] sm:$0xff]
      %v553 = vld [vmem:[%s548 + $0x30] sm:$0xff]
      %v554 = vld [vmem:[%s548 + $0x38] sm:$0xff]
      %v555 = vld [vmem:[%s548 + $0x48] sm:$0xff]
      %v556 = vld [vmem:[%s548 + $0x50] sm:$0xff]
      %v557 = vld [vmem:[%s548 + $0x60] sm:$0xff]
      %v558 = vld [vmem:[%s548 + $0x68] sm:$0xff]
      %v559 = vld [vmem:[%s548 + $0x78] sm:$0xff]
      %v560 = vld [vmem:[%s548 + $0x80] sm:$0xff]
      %v561 = vld [vmem:[%s548 + $0x90] sm:$0xff]
      %v562 = vld [vmem:[%s548 + $0x98] sm:$0xff]
      %v563 = vld [vmem:[%s548 + $0xa8] sm:$0xff]
      %v564 = vld [vmem:[%s548 + $0xb0] sm:$0xff]
      %v565 = vld [vmem:[%s548 + $0xc0] sm:$0xff]
      %v566 = vld [vmem:[%s548 + $0xc8] sm:$0xff]
      %v567 = vld [vmem:[%s548 + $0xd8] sm:$0xff]
      %v568 = vld [vmem:[%s548 + $0xe0] sm:$0xff]
      %v569 = vld [vmem:[%s548 + $0xf0] sm:$0xff]
      %v570 = vld [vmem:[%s548 + $0xf8] sm:$0xff]
      %v571 = vld [vmem:[%s548 + $0x108] sm:$0xff]
      %v572 = vld [vmem:[%s548 + $0x110] sm:$0xff]
      %v573 = vld [vmem:[%s548 + $0x120] sm:$0xff]
      %v574 = vld [vmem:[%s548 + $0x128] sm:$0xff]
      %v575 = vld [vmem:[%s548 + $0x138] sm:$0xff]
      %v576 = vld [vmem:[%s548 + $0x140] sm:$0xff]
      %v577 = vld [vmem:[%s548 + $0x150] sm:$0xff]
      %v578 = vld [vmem:[%s548 + $0x158] sm:$0xff]
      %v579 = vld [vmem:[%s548 + $0x168] sm:$0xff]
      %v580 = vld [vmem:[%s548 + $0x170] sm:$0xff]
      %s581 = scalar_lea.vmem %s218, 3
      %v582 = vld [vmem:[%s581] sm:$0x1]
      %v584 = vlaneseq
      %v585 = vshrl.u32 %v584, 7
      %v586 = vsub.s32 0, %v585
      %v587 = vrot.slane %v582, %v586
      %v589 = vmul.f32 %v549, %v587
      %v590 = vmul.f32 %v550, %v587
      %v591 = vmul.f32 %v551, %v587
      %v592 = vmul.f32 %v552, %v587
      %v593 = vmul.f32 %v553, %v587
      %v594 = vmul.f32 %v554, %v587
      %v595 = vmul.f32 %v555, %v587
      %v596 = vmul.f32 %v556, %v587
      %v597 = vmul.f32 %v557, %v587
      %v598 = vmul.f32 %v558, %v587
      %v599 = vmul.f32 %v559, %v587
      %v600 = vmul.f32 %v560, %v587
      %v601 = vmul.f32 %v561, %v587
      %v602 = vmul.f32 %v562, %v587
      %v603 = vmul.f32 %v563, %v587
      %v604 = vmul.f32 %v564, %v587
      %v605 = vmul.f32 %v565, %v587
      %v606 = vmul.f32 %v566, %v587
      %v607 = vmul.f32 %v567, %v587
      %v608 = vmul.f32 %v568, %v587
      %v609 = vmul.f32 %v569, %v587
      %v610 = vmul.f32 %v570, %v587
      %v611 = vmul.f32 %v571, %v587
      %v612 = vmul.f32 %v572, %v587
      %v613 = vmul.f32 %v573, %v587
      %v614 = vmul.f32 %v574, %v587
      %v615 = vmul.f32 %v575, %v587
      %v616 = vmul.f32 %v576, %v587
      %v617 = vmul.f32 %v577, %v587
      %v618 = vmul.f32 %v578, %v587
      %v619 = vmul.f32 %v579, %v587
      %v620 = vmul.f32 %v580, %v587
      %v621 = vadd.f32 %v516, %v589
      %v622 = vadd.f32 %v517, %v590
      %v623 = vadd.f32 %v518, %v591
      %v624 = vadd.f32 %v519, %v592
      %v625 = vadd.f32 %v520, %v593
      %v626 = vadd.f32 %v521, %v594
      %v627 = vadd.f32 %v522, %v595
      %v628 = vadd.f32 %v523, %v596
      %v629 = vadd.f32 %v524, %v597
      %v630 = vadd.f32 %v525, %v598
      %v631 = vadd.f32 %v526, %v599
      %v632 = vadd.f32 %v527, %v600
      %v633 = vadd.f32 %v528, %v601
      %v634 = vadd.f32 %v529, %v602
      %v635 = vadd.f32 %v530, %v603
      %v636 = vadd.f32 %v531, %v604
      %v637 = vadd.f32 %v532, %v605
      %v638 = vadd.f32 %v533, %v606
      %v639 = vadd.f32 %v534, %v607
      %v640 = vadd.f32 %v535, %v608
      %v641 = vadd.f32 %v536, %v609
      %v642 = vadd.f32 %v537, %v610
      %v643 = vadd.f32 %v538, %v611
      %v644 = vadd.f32 %v539, %v612
      %v645 = vadd.f32 %v540, %v613
      %v646 = vadd.f32 %v541, %v614
      %v647 = vadd.f32 %v542, %v615
      %v648 = vadd.f32 %v543, %v616
      %v649 = vadd.f32 %v544, %v617
      %v650 = vadd.f32 %v545, %v618
      %v651 = vadd.f32 %v546, %v619
      %v652 = vadd.f32 %v547, %v620
      %v653 = vld [vmem:[%s548 + $0x1] sm:$0xff]
      %v654 = vld [vmem:[%s548 + $0x9] sm:$0xff]
      %v655 = vld [vmem:[%s548 + $0x19] sm:$0xff]
      %v656 = vld [vmem:[%s548 + $0x21] sm:$0xff]
      %v657 = vld [vmem:[%s548 + $0x31] sm:$0xff]
      %v658 = vld [vmem:[%s548 + $0x39] sm:$0xff]
      %v659 = vld [vmem:[%s548 + $0x49] sm:$0xff]
      %v660 = vld [vmem:[%s548 + $0x51] sm:$0xff]
      %v661 = vld [vmem:[%s548 + $0x61] sm:$0xff]
      %v662 = vld [vmem:[%s548 + $0x69] sm:$0xff]
      %v663 = vld [vmem:[%s548 + $0x79] sm:$0xff]
      %v664 = vld [vmem:[%s548 + $0x81] sm:$0xff]
      %v665 = vld [vmem:[%s548 + $0x91] sm:$0xff]
      %v666 = vld [vmem:[%s548 + $0x99] sm:$0xff]
      %v667 = vld [vmem:[%s548 + $0xa9] sm:$0xff]
      %v668 = vld [vmem:[%s548 + $0xb1] sm:$0xff]
      %v669 = vld [vmem:[%s548 + $0xc1] sm:$0xff]
      %v670 = vld [vmem:[%s548 + $0xc9] sm:$0xff]
      %v671 = vld [vmem:[%s548 + $0xd9] sm:$0xff]
      %v672 = vld [vmem:[%s548 + $0xe1] sm:$0xff]
      %v673 = vld [vmem:[%s548 + $0xf1] sm:$0xff]
      %v674 = vld [vmem:[%s548 + $0xf9] sm:$0xff]
      %v675 = vld [vmem:[%s548 + $0x109] sm:$0xff]
      %v676 = vld [vmem:[%s548 + $0x111] sm:$0xff]
      %v677 = vld [vmem:[%s548 + $0x121] sm:$0xff]
      %v678 = vld [vmem:[%s548 + $0x129] sm:$0xff]
      %v679 = vld [vmem:[%s548 + $0x139] sm:$0xff]
      %v680 = vld [vmem:[%s548 + $0x141] sm:$0xff]
      %v681 = vld [vmem:[%s548 + $0x151] sm:$0xff]
      %v682 = vld [vmem:[%s548 + $0x159] sm:$0xff]
      %v683 = vld [vmem:[%s548 + $0x169] sm:$0xff]
      %v684 = vld [vmem:[%s548 + $0x171] sm:$0xff]
      %s685 = scalar_lea.vmem %s218, 4
      %v686 = vld [vmem:[%s685] sm:$0x1]
      %v688 = vlaneseq
      %v689 = vshrl.u32 %v688, 7
      %v690 = vsub.s32 0, %v689
      %v691 = vrot.slane %v686, %v690
      %v693 = vmul.f32 %v653, %v691
      %v694 = vmul.f32 %v654, %v691
      %v695 = vmul.f32 %v655, %v691
      %v696 = vmul.f32 %v656, %v691
      %v697 = vmul.f32 %v657, %v691
      %v698 = vmul.f32 %v658, %v691
      %v699 = vmul.f32 %v659, %v691
      %v700 = vmul.f32 %v660, %v691
      %v701 = vmul.f32 %v661, %v691
      %v702 = vmul.f32 %v662, %v691
      %v703 = vmul.f32 %v663, %v691
      %v704 = vmul.f32 %v664, %v691
      %v705 = vmul.f32 %v665, %v691
      %v706 = vmul.f32 %v666, %v691
      %v707 = vmul.f32 %v667, %v691
      %v708 = vmul.f32 %v668, %v691
      %v709 = vmul.f32 %v669, %v691
      %v710 = vmul.f32 %v670, %v691
      %v711 = vmul.f32 %v671, %v691
      %v712 = vmul.f32 %v672, %v691
      %v713 = vmul.f32 %v673, %v691
      %v714 = vmul.f32 %v674, %v691
      %v715 = vmul.f32 %v675, %v691
      %v716 = vmul.f32 %v676, %v691
      %v717 = vmul.f32 %v677, %v691
      %v718 = vmul.f32 %v678, %v691
      %v719 = vmul.f32 %v679, %v691
      %v720 = vmul.f32 %v680, %v691
      %v721 = vmul.f32 %v681, %v691
      %v722 = vmul.f32 %v682, %v691
      %v723 = vmul.f32 %v683, %v691
      %v724 = vmul.f32 %v684, %v691
      %v725 = vadd.f32 %v621, %v693
      %v726 = vadd.f32 %v622, %v694
      %v727 = vadd.f32 %v623, %v695
      %v728 = vadd.f32 %v624, %v696
      %v729 = vadd.f32 %v625, %v697
      %v730 = vadd.f32 %v626, %v698
      %v731 = vadd.f32 %v627, %v699
      %v732 = vadd.f32 %v628, %v700
      %v733 = vadd.f32 %v629, %v701
      %v734 = vadd.f32 %v630, %v702
      %v735 = vadd.f32 %v631, %v703
      %v736 = vadd.f32 %v632, %v704
      %v737 = vadd.f32 %v633, %v705
      %v738 = vadd.f32 %v634, %v706
      %v739 = vadd.f32 %v635, %v707
      %v740 = vadd.f32 %v636, %v708
      %v741 = vadd.f32 %v637, %v709
      %v742 = vadd.f32 %v638, %v710
      %v743 = vadd.f32 %v639, %v711
      %v744 = vadd.f32 %v640, %v712
      %v745 = vadd.f32 %v641, %v713
      %v746 = vadd.f32 %v642, %v714
      %v747 = vadd.f32 %v643, %v715
      %v748 = vadd.f32 %v644, %v716
      %v749 = vadd.f32 %v645, %v717
      %v750 = vadd.f32 %v646, %v718
      %v751 = vadd.f32 %v647, %v719
      %v752 = vadd.f32 %v648, %v720
      %v753 = vadd.f32 %v649, %v721
      %v754 = vadd.f32 %v650, %v722
      %v755 = vadd.f32 %v651, %v723
      %v756 = vadd.f32 %v652, %v724
      %v757 = vld [vmem:[%s548 + $0x2] sm:$0xff]
      %v758 = vld [vmem:[%s548 + $0xa] sm:$0xff]
      %v759 = vld [vmem:[%s548 + $0x1a] sm:$0xff]
      %v760 = vld [vmem:[%s548 + $0x22] sm:$0xff]
      %v761 = vld [vmem:[%s548 + $0x32] sm:$0xff]
      %v762 = vld [vmem:[%s548 + $0x3a] sm:$0xff]
      %v763 = vld [vmem:[%s548 + $0x4a] sm:$0xff]
      %v764 = vld [vmem:[%s548 + $0x52] sm:$0xff]
      %v765 = vld [vmem:[%s548 + $0x62] sm:$0xff]
      %v766 = vld [vmem:[%s548 + $0x6a] sm:$0xff]
      %v767 = vld [vmem:[%s548 + $0x7a] sm:$0xff]
      %v768 = vld [vmem:[%s548 + $0x82] sm:$0xff]
      %v769 = vld [vmem:[%s548 + $0x92] sm:$0xff]
      %v770 = vld [vmem:[%s548 + $0x9a] sm:$0xff]
      %v771 = vld [vmem:[%s548 + $0xaa] sm:$0xff]
      %v772 = vld [vmem:[%s548 + $0xb2] sm:$0xff]
      %v773 = vld [vmem:[%s548 + $0xc2] sm:$0xff]
      %v774 = vld [vmem:[%s548 + $0xca] sm:$0xff]
      %v775 = vld [vmem:[%s548 + $0xda] sm:$0xff]
      %v776 = vld [vmem:[%s548 + $0xe2] sm:$0xff]
      %v777 = vld [vmem:[%s548 + $0xf2] sm:$0xff]
      %v778 = vld [vmem:[%s548 + $0xfa] sm:$0xff]
      %v779 = vld [vmem:[%s548 + $0x10a] sm:$0xff]
      %v780 = vld [vmem:[%s548 + $0x112] sm:$0xff]
      %v781 = vld [vmem:[%s548 + $0x122] sm:$0xff]
      %v782 = vld [vmem:[%s548 + $0x12a] sm:$0xff]
      %v783 = vld [vmem:[%s548 + $0x13a] sm:$0xff]
      %v784 = vld [vmem:[%s548 + $0x142] sm:$0xff]
      %v785 = vld [vmem:[%s548 + $0x152] sm:$0xff]
      %v786 = vld [vmem:[%s548 + $0x15a] sm:$0xff]
      %v787 = vld [vmem:[%s548 + $0x16a] sm:$0xff]
      %v788 = vld [vmem:[%s548 + $0x172] sm:$0xff]
      %s789 = scalar_lea.vmem %s218, 5
      %v790 = vld [vmem:[%s789] sm:$0x1]
      %v792 = vlaneseq
      %v793 = vshrl.u32 %v792, 7
      %v794 = vsub.s32 0, %v793
      %v795 = vrot.slane %v790, %v794
      %v797 = vmul.f32 %v757, %v795
      %v798 = vmul.f32 %v758, %v795
      %v799 = vmul.f32 %v759, %v795
      %v800 = vmul.f32 %v760, %v795
      %v801 = vmul.f32 %v761, %v795
      %v802 = vmul.f32 %v762, %v795
      %v803 = vmul.f32 %v763, %v795
      %v804 = vmul.f32 %v764, %v795
      %v805 = vmul.f32 %v765, %v795
      %v806 = vmul.f32 %v766, %v795
      %v807 = vmul.f32 %v767, %v795
      %v808 = vmul.f32 %v768, %v795
      %v809 = vmul.f32 %v769, %v795
      %v810 = vmul.f32 %v770, %v795
      %v811 = vmul.f32 %v771, %v795
      %v812 = vmul.f32 %v772, %v795
      %v813 = vmul.f32 %v773, %v795
      %v814 = vmul.f32 %v774, %v795
      %v815 = vmul.f32 %v775, %v795
      %v816 = vmul.f32 %v776, %v795
      %v817 = vmul.f32 %v777, %v795
      %v818 = vmul.f32 %v778, %v795
      %v819 = vmul.f32 %v779, %v795
      %v820 = vmul.f32 %v780, %v795
      %v821 = vmul.f32 %v781, %v795
      %v822 = vmul.f32 %v782, %v795
      %v823 = vmul.f32 %v783, %v795
      %v824 = vmul.f32 %v784, %v795
      %v825 = vmul.f32 %v785, %v795
      %v826 = vmul.f32 %v786, %v795
      %v827 = vmul.f32 %v787, %v795
      %v828 = vmul.f32 %v788, %v795
      %v829 = vadd.f32 %v725, %v797
      %v830 = vadd.f32 %v726, %v798
      %v831 = vadd.f32 %v727, %v799
      %v832 = vadd.f32 %v728, %v800
      %v833 = vadd.f32 %v729, %v801
      %v834 = vadd.f32 %v730, %v802
      %v835 = vadd.f32 %v731, %v803
      %v836 = vadd.f32 %v732, %v804
      %v837 = vadd.f32 %v733, %v805
      %v838 = vadd.f32 %v734, %v806
      %v839 = vadd.f32 %v735, %v807
      %v840 = vadd.f32 %v736, %v808
      %v841 = vadd.f32 %v737, %v809
      %v842 = vadd.f32 %v738, %v810
      %v843 = vadd.f32 %v739, %v811
      %v844 = vadd.f32 %v740, %v812
      %v845 = vadd.f32 %v741, %v813
      %v846 = vadd.f32 %v742, %v814
      %v847 = vadd.f32 %v743, %v815
      %v848 = vadd.f32 %v744, %v816
      %v849 = vadd.f32 %v745, %v817
      %v850 = vadd.f32 %v746, %v818
      %v851 = vadd.f32 %v747, %v819
      %v852 = vadd.f32 %v748, %v820
      %v853 = vadd.f32 %v749, %v821
      %v854 = vadd.f32 %v750, %v822
      %v855 = vadd.f32 %v751, %v823
      %v856 = vadd.f32 %v752, %v824
      %v857 = vadd.f32 %v753, %v825
      %v858 = vadd.f32 %v754, %v826
      %v859 = vadd.f32 %v755, %v827
      %v860 = vadd.f32 %v756, %v828
      %s861 = scalar_lea.vmem %s215, 48
      %v862 = vld [vmem:[%s861] sm:$0xff]
      %v863 = vld [vmem:[%s861 + $0x8] sm:$0xff]
      %v864 = vld [vmem:[%s861 + $0x18] sm:$0xff]
      %v865 = vld [vmem:[%s861 + $0x20] sm:$0xff]
      %v866 = vld [vmem:[%s861 + $0x30] sm:$0xff]
      %v867 = vld [vmem:[%s861 + $0x38] sm:$0xff]
      %v868 = vld [vmem:[%s861 + $0x48] sm:$0xff]
      %v869 = vld [vmem:[%s861 + $0x50] sm:$0xff]
      %v870 = vld [vmem:[%s861 + $0x60] sm:$0xff]
      %v871 = vld [vmem:[%s861 + $0x68] sm:$0xff]
      %v872 = vld [vmem:[%s861 + $0x78] sm:$0xff]
      %v873 = vld [vmem:[%s861 + $0x80] sm:$0xff]
      %v874 = vld [vmem:[%s861 + $0x90] sm:$0xff]
      %v875 = vld [vmem:[%s861 + $0x98] sm:$0xff]
      %v876 = vld [vmem:[%s861 + $0xa8] sm:$0xff]
      %v877 = vld [vmem:[%s861 + $0xb0] sm:$0xff]
      %v878 = vld [vmem:[%s861 + $0xc0] sm:$0xff]
      %v879 = vld [vmem:[%s861 + $0xc8] sm:$0xff]
      %v880 = vld [vmem:[%s861 + $0xd8] sm:$0xff]
      %v881 = vld [vmem:[%s861 + $0xe0] sm:$0xff]
      %v882 = vld [vmem:[%s861 + $0xf0] sm:$0xff]
      %v883 = vld [vmem:[%s861 + $0xf8] sm:$0xff]
      %v884 = vld [vmem:[%s861 + $0x108] sm:$0xff]
      %v885 = vld [vmem:[%s861 + $0x110] sm:$0xff]
      %v886 = vld [vmem:[%s861 + $0x120] sm:$0xff]
      %v887 = vld [vmem:[%s861 + $0x128] sm:$0xff]
      %v888 = vld [vmem:[%s861 + $0x138] sm:$0xff]
      %v889 = vld [vmem:[%s861 + $0x140] sm:$0xff]
      %v890 = vld [vmem:[%s861 + $0x150] sm:$0xff]
      %v891 = vld [vmem:[%s861 + $0x158] sm:$0xff]
      %v892 = vld [vmem:[%s861 + $0x168] sm:$0xff]
      %v893 = vld [vmem:[%s861 + $0x170] sm:$0xff]
      %s894 = scalar_lea.vmem %s218, 6
      %v895 = vld [vmem:[%s894] sm:$0x1]
      %v897 = vlaneseq
      %v898 = vshrl.u32 %v897, 7
      %v899 = vsub.s32 0, %v898
      %v900 = vrot.slane %v895, %v899
      %v902 = vmul.f32 %v862, %v900
      %v903 = vmul.f32 %v863, %v900
      %v904 = vmul.f32 %v864, %v900
      %v905 = vmul.f32 %v865, %v900
      %v906 = vmul.f32 %v866, %v900
      %v907 = vmul.f32 %v867, %v900
      %v908 = vmul.f32 %v868, %v900
      %v909 = vmul.f32 %v869, %v900
      %v910 = vmul.f32 %v870, %v900
      %v911 = vmul.f32 %v871, %v900
      %v912 = vmul.f32 %v872, %v900
      %v913 = vmul.f32 %v873, %v900
      %v914 = vmul.f32 %v874, %v900
      %v915 = vmul.f32 %v875, %v900
      %v916 = vmul.f32 %v876, %v900
      %v917 = vmul.f32 %v877, %v900
      %v918 = vmul.f32 %v878, %v900
      %v919 = vmul.f32 %v879, %v900
      %v920 = vmul.f32 %v880, %v900
      %v921 = vmul.f32 %v881, %v900
      %v922 = vmul.f32 %v882, %v900
      %v923 = vmul.f32 %v883, %v900
      %v924 = vmul.f32 %v884, %v900
      %v925 = vmul.f32 %v885, %v900
      %v926 = vmul.f32 %v886, %v900
      %v927 = vmul.f32 %v887, %v900
      %v928 = vmul.f32 %v888, %v900
      %v929 = vmul.f32 %v889, %v900
      %v930 = vmul.f32 %v890, %v900
      %v931 = vmul.f32 %v891, %v900
      %v932 = vmul.f32 %v892, %v900
      %v933 = vmul.f32 %v893, %v900
      %v934 = vadd.f32 %v829, %v902
      %v935 = vadd.f32 %v830, %v903
      %v936 = vadd.f32 %v831, %v904
      %v937 = vadd.f32 %v832, %v905
      %v938 = vadd.f32 %v833, %v906
      %v939 = vadd.f32 %v834, %v907
      %v940 = vadd.f32 %v835, %v908
      %v941 = vadd.f32 %v836, %v909
      %v942 = vadd.f32 %v837, %v910
      %v943 = vadd.f32 %v838, %v911
      %v944 = vadd.f32 %v839, %v912
      %v945 = vadd.f32 %v840, %v913
      %v946 = vadd.f32 %v841, %v914
      %v947 = vadd.f32 %v842, %v915
      %v948 = vadd.f32 %v843, %v916
      %v949 = vadd.f32 %v844, %v917
      %v950 = vadd.f32 %v845, %v918
      %v951 = vadd.f32 %v846, %v919
      %v952 = vadd.f32 %v847, %v920
      %v953 = vadd.f32 %v848, %v921
      %v954 = vadd.f32 %v849, %v922
      %v955 = vadd.f32 %v850, %v923
      %v956 = vadd.f32 %v851, %v924
      %v957 = vadd.f32 %v852, %v925
      %v958 = vadd.f32 %v853, %v926
      %v959 = vadd.f32 %v854, %v927
      %v960 = vadd.f32 %v855, %v928
      %v961 = vadd.f32 %v856, %v929
      %v962 = vadd.f32 %v857, %v930
      %v963 = vadd.f32 %v858, %v931
      %v964 = vadd.f32 %v859, %v932
      %v965 = vadd.f32 %v860, %v933
      %v966 = vld [vmem:[%s861 + $0x1] sm:$0xff]
      %v967 = vld [vmem:[%s861 + $0x9] sm:$0xff]
      %v968 = vld [vmem:[%s861 + $0x19] sm:$0xff]
      %v969 = vld [vmem:[%s861 + $0x21] sm:$0xff]
      %v970 = vld [vmem:[%s861 + $0x31] sm:$0xff]
      %v971 = vld [vmem:[%s861 + $0x39] sm:$0xff]
      %v972 = vld [vmem:[%s861 + $0x49] sm:$0xff]
      %v973 = vld [vmem:[%s861 + $0x51] sm:$0xff]
      %v974 = vld [vmem:[%s861 + $0x61] sm:$0xff]
      %v975 = vld [vmem:[%s861 + $0x69] sm:$0xff]
      %v976 = vld [vmem:[%s861 + $0x79] sm:$0xff]
      %v977 = vld [vmem:[%s861 + $0x81] sm:$0xff]
      %v978 = vld [vmem:[%s861 + $0x91] sm:$0xff]
      %v979 = vld [vmem:[%s861 + $0x99] sm:$0xff]
      %v980 = vld [vmem:[%s861 + $0xa9] sm:$0xff]
      %v981 = vld [vmem:[%s861 + $0xb1] sm:$0xff]
      %v982 = vld [vmem:[%s861 + $0xc1] sm:$0xff]
      %v983 = vld [vmem:[%s861 + $0xc9] sm:$0xff]
      %v984 = vld [vmem:[%s861 + $0xd9] sm:$0xff]
      %v985 = vld [vmem:[%s861 + $0xe1] sm:$0xff]
      %v986 = vld [vmem:[%s861 + $0xf1] sm:$0xff]
      %v987 = vld [vmem:[%s861 + $0xf9] sm:$0xff]
      %v988 = vld [vmem:[%s861 + $0x109] sm:$0xff]
      %v989 = vld [vmem:[%s861 + $0x111] sm:$0xff]
      %v990 = vld [vmem:[%s861 + $0x121] sm:$0xff]
      %v991 = vld [vmem:[%s861 + $0x129] sm:$0xff]
      %v992 = vld [vmem:[%s861 + $0x139] sm:$0xff]
      %v993 = vld [vmem:[%s861 + $0x141] sm:$0xff]
      %v994 = vld [vmem:[%s861 + $0x151] sm:$0xff]
      %v995 = vld [vmem:[%s861 + $0x159] sm:$0xff]
      %v996 = vld [vmem:[%s861 + $0x169] sm:$0xff]
      %v997 = vld [vmem:[%s861 + $0x171] sm:$0xff]
      %s998 = scalar_lea.vmem %s218, 7
      %v999 = vld [vmem:[%s998] sm:$0x1]
      %v1001 = vlaneseq
      %v1002 = vshrl.u32 %v1001, 7
      %v1003 = vsub.s32 0, %v1002
      %v1004 = vrot.slane %v999, %v1003
      %v1006 = vmul.f32 %v966, %v1004
      %v1007 = vmul.f32 %v967, %v1004
      %v1008 = vmul.f32 %v968, %v1004
      %v1009 = vmul.f32 %v969, %v1004
      %v1010 = vmul.f32 %v970, %v1004
      %v1011 = vmul.f32 %v971, %v1004
      %v1012 = vmul.f32 %v972, %v1004
      %v1013 = vmul.f32 %v973, %v1004
      %v1014 = vmul.f32 %v974, %v1004
      %v1015 = vmul.f32 %v975, %v1004
      %v1016 = vmul.f32 %v976, %v1004
      %v1017 = vmul.f32 %v977, %v1004
      %v1018 = vmul.f32 %v978, %v1004
      %v1019 = vmul.f32 %v979, %v1004
      %v1020 = vmul.f32 %v980, %v1004
      %v1021 = vmul.f32 %v981, %v1004
      %v1022 = vmul.f32 %v982, %v1004
      %v1023 = vmul.f32 %v983, %v1004
      %v1024 = vmul.f32 %v984, %v1004
      %v1025 = vmul.f32 %v985, %v1004
      %v1026 = vmul.f32 %v986, %v1004
      %v1027 = vmul.f32 %v987, %v1004
      %v1028 = vmul.f32 %v988, %v1004
      %v1029 = vmul.f32 %v989, %v1004
      %v1030 = vmul.f32 %v990, %v1004
      %v1031 = vmul.f32 %v991, %v1004
      %v1032 = vmul.f32 %v992, %v1004
      %v1033 = vmul.f32 %v993, %v1004
      %v1034 = vmul.f32 %v994, %v1004
      %v1035 = vmul.f32 %v995, %v1004
      %v1036 = vmul.f32 %v996, %v1004
      %v1037 = vmul.f32 %v997, %v1004
      %v1038 = vadd.f32 %v934, %v1006
      %v1039 = vadd.f32 %v935, %v1007
      %v1040 = vadd.f32 %v936, %v1008
      %v1041 = vadd.f32 %v937, %v1009
      %v1042 = vadd.f32 %v938, %v1010
      %v1043 = vadd.f32 %v939, %v1011
      %v1044 = vadd.f32 %v940, %v1012
      %v1045 = vadd.f32 %v941, %v1013
      %v1046 = vadd.f32 %v942, %v1014
      %v1047 = vadd.f32 %v943, %v1015
      %v1048 = vadd.f32 %v944, %v1016
      %v1049 = vadd.f32 %v945, %v1017
      %v1050 = vadd.f32 %v946, %v1018
      %v1051 = vadd.f32 %v947, %v1019
      %v1052 = vadd.f32 %v948, %v1020
      %v1053 = vadd.f32 %v949, %v1021
      %v1054 = vadd.f32 %v950, %v1022
      %v1055 = vadd.f32 %v951, %v1023
      %v1056 = vadd.f32 %v952, %v1024
      %v1057 = vadd.f32 %v953, %v1025
      %v1058 = vadd.f32 %v954, %v1026
      %v1059 = vadd.f32 %v955, %v1027
      %v1060 = vadd.f32 %v956, %v1028
      %v1061 = vadd.f32 %v957, %v1029
      %v1062 = vadd.f32 %v958, %v1030
      %v1063 = vadd.f32 %v959, %v1031
      %v1064 = vadd.f32 %v960, %v1032
      %v1065 = vadd.f32 %v961, %v1033
      %v1066 = vadd.f32 %v962, %v1034
      %v1067 = vadd.f32 %v963, %v1035
      %v1068 = vadd.f32 %v964, %v1036
      %v1069 = vadd.f32 %v965, %v1037
      %v1070 = vld [vmem:[%s861 + $0x2] sm:$0xff]
      %v1071 = vld [vmem:[%s861 + $0xa] sm:$0xff]
      %v1072 = vld [vmem:[%s861 + $0x1a] sm:$0xff]
      %v1073 = vld [vmem:[%s861 + $0x22] sm:$0xff]
      %v1074 = vld [vmem:[%s861 + $0x32] sm:$0xff]
      %v1075 = vld [vmem:[%s861 + $0x3a] sm:$0xff]
      %v1076 = vld [vmem:[%s861 + $0x4a] sm:$0xff]
      %v1077 = vld [vmem:[%s861 + $0x52] sm:$0xff]
      %v1078 = vld [vmem:[%s861 + $0x62] sm:$0xff]
      %v1079 = vld [vmem:[%s861 + $0x6a] sm:$0xff]
      %v1080 = vld [vmem:[%s861 + $0x7a] sm:$0xff]
      %v1081 = vld [vmem:[%s861 + $0x82] sm:$0xff]
      %v1082 = vld [vmem:[%s861 + $0x92] sm:$0xff]
      %v1083 = vld [vmem:[%s861 + $0x9a] sm:$0xff]
      %v1084 = vld [vmem:[%s861 + $0xaa] sm:$0xff]
      %v1085 = vld [vmem:[%s861 + $0xb2] sm:$0xff]
      %v1086 = vld [vmem:[%s861 + $0xc2] sm:$0xff]
      %v1087 = vld [vmem:[%s861 + $0xca] sm:$0xff]
      %v1088 = vld [vmem:[%s861 + $0xda] sm:$0xff]
      %v1089 = vld [vmem:[%s861 + $0xe2] sm:$0xff]
      %v1090 = vld [vmem:[%s861 + $0xf2] sm:$0xff]
      %v1091 = vld [vmem:[%s861 + $0xfa] sm:$0xff]
      %v1092 = vld [vmem:[%s861 + $0x10a] sm:$0xff]
      %v1093 = vld [vmem:[%s861 + $0x112] sm:$0xff]
      %v1094 = vld [vmem:[%s861 + $0x122] sm:$0xff]
      %v1095 = vld [vmem:[%s861 + $0x12a] sm:$0xff]
      %v1096 = vld [vmem:[%s861 + $0x13a] sm:$0xff]
      %v1097 = vld [vmem:[%s861 + $0x142] sm:$0xff]
      %v1098 = vld [vmem:[%s861 + $0x152] sm:$0xff]
      %v1099 = vld [vmem:[%s861 + $0x15a] sm:$0xff]
      %v1100 = vld [vmem:[%s861 + $0x16a] sm:$0xff]
      %v1101 = vld [vmem:[%s861 + $0x172] sm:$0xff]
      %s1102 = scalar_lea.vmem %s218, 8
      %v1103 = vld [vmem:[%s1102] sm:$0x1]
      %v1105 = vlaneseq
      %v1106 = vshrl.u32 %v1105, 7
      %v1107 = vsub.s32 0, %v1106
      %v1108 = vrot.slane %v1103, %v1107
      %v1110 = vmul.f32 %v1070, %v1108
      %v1111 = vmul.f32 %v1071, %v1108
      %v1112 = vmul.f32 %v1072, %v1108
      %v1113 = vmul.f32 %v1073, %v1108
      %v1114 = vmul.f32 %v1074, %v1108
      %v1115 = vmul.f32 %v1075, %v1108
      %v1116 = vmul.f32 %v1076, %v1108
      %v1117 = vmul.f32 %v1077, %v1108
      %v1118 = vmul.f32 %v1078, %v1108
      %v1119 = vmul.f32 %v1079, %v1108
      %v1120 = vmul.f32 %v1080, %v1108
      %v1121 = vmul.f32 %v1081, %v1108
      %v1122 = vmul.f32 %v1082, %v1108
      %v1123 = vmul.f32 %v1083, %v1108
      %v1124 = vmul.f32 %v1084, %v1108
      %v1125 = vmul.f32 %v1085, %v1108
      %v1126 = vmul.f32 %v1086, %v1108
      %v1127 = vmul.f32 %v1087, %v1108
      %v1128 = vmul.f32 %v1088, %v1108
      %v1129 = vmul.f32 %v1089, %v1108
      %v1130 = vmul.f32 %v1090, %v1108
      %v1131 = vmul.f32 %v1091, %v1108
      %v1132 = vmul.f32 %v1092, %v1108
      %v1133 = vmul.f32 %v1093, %v1108
      %v1134 = vmul.f32 %v1094, %v1108
      %v1135 = vmul.f32 %v1095, %v1108
      %v1136 = vmul.f32 %v1096, %v1108
      %v1137 = vmul.f32 %v1097, %v1108
      %v1138 = vmul.f32 %v1098, %v1108
      %v1139 = vmul.f32 %v1099, %v1108
      %v1140 = vmul.f32 %v1100, %v1108
      %v1141 = vmul.f32 %v1101, %v1108
      %v1142 = vadd.f32 %v1038, %v1110
      %v1143 = vadd.f32 %v1039, %v1111
      %v1144 = vadd.f32 %v1040, %v1112
      %v1145 = vadd.f32 %v1041, %v1113
      %v1146 = vadd.f32 %v1042, %v1114
      %v1147 = vadd.f32 %v1043, %v1115
      %v1148 = vadd.f32 %v1044, %v1116
      %v1149 = vadd.f32 %v1045, %v1117
      %v1150 = vadd.f32 %v1046, %v1118
      %v1151 = vadd.f32 %v1047, %v1119
      %v1152 = vadd.f32 %v1048, %v1120
      %v1153 = vadd.f32 %v1049, %v1121
      %v1154 = vadd.f32 %v1050, %v1122
      %v1155 = vadd.f32 %v1051, %v1123
      %v1156 = vadd.f32 %v1052, %v1124
      %v1157 = vadd.f32 %v1053, %v1125
      %v1158 = vadd.f32 %v1054, %v1126
      %v1159 = vadd.f32 %v1055, %v1127
      %v1160 = vadd.f32 %v1056, %v1128
      %v1161 = vadd.f32 %v1057, %v1129
      %v1162 = vadd.f32 %v1058, %v1130
      %v1163 = vadd.f32 %v1059, %v1131
      %v1164 = vadd.f32 %v1060, %v1132
      %v1165 = vadd.f32 %v1061, %v1133
      %v1166 = vadd.f32 %v1062, %v1134
      %v1167 = vadd.f32 %v1063, %v1135
      %v1168 = vadd.f32 %v1064, %v1136
      %v1169 = vadd.f32 %v1065, %v1137
      %v1170 = vadd.f32 %v1066, %v1138
      %v1171 = vadd.f32 %v1067, %v1139
      %v1172 = vadd.f32 %v1068, %v1140
      %v1173 = vadd.f32 %v1069, %v1141
      %v1174 = vmul.f32 %v1142, 0.70710677
      %v1175 = vmul.f32 %v1143, 0.70710677
      %v1176 = vmul.f32 %v1144, 0.70710677
      %v1177 = vmul.f32 %v1145, 0.70710677
      %v1178 = vmul.f32 %v1146, 0.70710677
      %v1179 = vmul.f32 %v1147, 0.70710677
      %v1180 = vmul.f32 %v1148, 0.70710677
      %v1181 = vmul.f32 %v1149, 0.70710677
      %v1182 = vmul.f32 %v1150, 0.70710677
      %v1183 = vmul.f32 %v1151, 0.70710677
      %v1184 = vmul.f32 %v1152, 0.70710677
      %v1185 = vmul.f32 %v1153, 0.70710677
      %v1186 = vmul.f32 %v1154, 0.70710677
      %v1187 = vmul.f32 %v1155, 0.70710677
      %v1188 = vmul.f32 %v1156, 0.70710677
      %v1189 = vmul.f32 %v1157, 0.70710677
      %v1190 = vmul.f32 %v1158, 0.70710677
      %v1191 = vmul.f32 %v1159, 0.70710677
      %v1192 = vmul.f32 %v1160, 0.70710677
      %v1193 = vmul.f32 %v1161, 0.70710677
      %v1194 = vmul.f32 %v1162, 0.70710677
      %v1195 = vmul.f32 %v1163, 0.70710677
      %v1196 = vmul.f32 %v1164, 0.70710677
      %v1197 = vmul.f32 %v1165, 0.70710677
      %v1198 = vmul.f32 %v1166, 0.70710677
      %v1199 = vmul.f32 %v1167, 0.70710677
      %v1200 = vmul.f32 %v1168, 0.70710677
      %v1201 = vmul.f32 %v1169, 0.70710677
      %v1202 = vmul.f32 %v1170, 0.70710677
      %v1203 = vmul.f32 %v1171, 0.70710677
      %v1204 = vmul.f32 %v1172, 0.70710677
      %v1205 = vmul.f32 %v1173, 0.70710677
      %v1206 = vand.u32 2147483647, %v1174
      %v1207 = vand.u32 2147483647, %v1175
      %v1208 = vand.u32 2147483647, %v1176
      %v1209 = vand.u32 2147483647, %v1177
      %v1210 = vand.u32 2147483647, %v1178
      %v1211 = vand.u32 2147483647, %v1179
      %v1212 = vand.u32 2147483647, %v1180
      %v1213 = vand.u32 2147483647, %v1181
      %v1214 = vand.u32 2147483647, %v1182
      %v1215 = vand.u32 2147483647, %v1183
      %v1216 = vand.u32 2147483647, %v1184
      %v1217 = vand.u32 2147483647, %v1185
      %v1218 = vand.u32 2147483647, %v1186
      %v1219 = vand.u32 2147483647, %v1187
      %v1220 = vand.u32 2147483647, %v1188
      %v1221 = vand.u32 2147483647, %v1189
      %v1222 = vand.u32 2147483647, %v1190
      %v1223 = vand.u32 2147483647, %v1191
      %v1224 = vand.u32 2147483647, %v1192
      %v1225 = vand.u32 2147483647, %v1193
      %v1226 = vand.u32 2147483647, %v1194
      %v1227 = vand.u32 2147483647, %v1195
      %v1228 = vand.u32 2147483647, %v1196
      %v1229 = vand.u32 2147483647, %v1197
      %v1230 = vand.u32 2147483647, %v1198
      %v1231 = vand.u32 2147483647, %v1199
      %v1232 = vand.u32 2147483647, %v1200
      %v1233 = vand.u32 2147483647, %v1201
      %v1234 = vand.u32 2147483647, %v1202
      %v1235 = vand.u32 2147483647, %v1203
      %v1236 = vand.u32 2147483647, %v1204
      %v1237 = vand.u32 2147483647, %v1205
      %v1238 = vmul.f32 %v1206, 0.3275911
      %v1239 = vmul.f32 %v1207, 0.3275911
      %v1240 = vmul.f32 %v1208, 0.3275911
      %v1241 = vmul.f32 %v1209, 0.3275911
      %v1242 = vmul.f32 %v1210, 0.3275911
      %v1243 = vmul.f32 %v1211, 0.3275911
      %v1244 = vmul.f32 %v1212, 0.3275911
      %v1245 = vmul.f32 %v1213, 0.3275911
      %v1246 = vmul.f32 %v1214, 0.3275911
      %v1247 = vmul.f32 %v1215, 0.3275911
      %v1248 = vmul.f32 %v1216, 0.3275911
      %v1249 = vmul.f32 %v1217, 0.3275911
      %v1250 = vmul.f32 %v1218, 0.3275911
      %v1251 = vmul.f32 %v1219, 0.3275911
      %v1252 = vmul.f32 %v1220, 0.3275911
      %v1253 = vmul.f32 %v1221, 0.3275911
      %v1254 = vmul.f32 %v1222, 0.3275911
      %v1255 = vmul.f32 %v1223, 0.3275911
      %v1256 = vmul.f32 %v1224, 0.3275911
      %v1257 = vmul.f32 %v1225, 0.3275911
      %v1258 = vmul.f32 %v1226, 0.3275911
      %v1259 = vmul.f32 %v1227, 0.3275911
      %v1260 = vmul.f32 %v1228, 0.3275911
      %v1261 = vmul.f32 %v1229, 0.3275911
      %v1262 = vmul.f32 %v1230, 0.3275911
      %v1263 = vmul.f32 %v1231, 0.3275911
      %v1264 = vmul.f32 %v1232, 0.3275911
      %v1265 = vmul.f32 %v1233, 0.3275911
      %v1266 = vmul.f32 %v1234, 0.3275911
      %v1267 = vmul.f32 %v1235, 0.3275911
      %v1268 = vmul.f32 %v1236, 0.3275911
      %v1269 = vmul.f32 %v1237, 0.3275911
      %v1270 = vadd.f32 %v1238, 1.0
      %v1271 = vadd.f32 %v1239, 1.0
      %v1272 = vadd.f32 %v1240, 1.0
      %v1273 = vadd.f32 %v1241, 1.0
      %v1274 = vadd.f32 %v1242, 1.0
      %v1275 = vadd.f32 %v1243, 1.0
      %v1276 = vadd.f32 %v1244, 1.0
      %v1277 = vadd.f32 %v1245, 1.0
      %v1278 = vadd.f32 %v1246, 1.0
      %v1279 = vadd.f32 %v1247, 1.0
      %v1280 = vadd.f32 %v1248, 1.0
      %v1281 = vadd.f32 %v1249, 1.0
      %v1282 = vadd.f32 %v1250, 1.0
      %v1283 = vadd.f32 %v1251, 1.0
      %v1284 = vadd.f32 %v1252, 1.0
      %v1285 = vadd.f32 %v1253, 1.0
      %v1286 = vadd.f32 %v1254, 1.0
      %v1287 = vadd.f32 %v1255, 1.0
      %v1288 = vadd.f32 %v1256, 1.0
      %v1289 = vadd.f32 %v1257, 1.0
      %v1290 = vadd.f32 %v1258, 1.0
      %v1291 = vadd.f32 %v1259, 1.0
      %v1292 = vadd.f32 %v1260, 1.0
      %v1293 = vadd.f32 %v1261, 1.0
      %v1294 = vadd.f32 %v1262, 1.0
      %v1295 = vadd.f32 %v1263, 1.0
      %v1296 = vadd.f32 %v1264, 1.0
      %v1297 = vadd.f32 %v1265, 1.0
      %v1298 = vadd.f32 %v1266, 1.0
      %v1299 = vadd.f32 %v1267, 1.0
      %v1300 = vadd.f32 %v1268, 1.0
      %v1301 = vadd.f32 %v1269, 1.0
      %v1302 = vrcp.pop %v1270
      %v1303 = vmul.f32 1.0, %v1302
      %v1304 = vrcp.pop %v1271
      %v1305 = vmul.f32 1.0, %v1304
      %v1306 = vrcp.pop %v1272
      %v1307 = vmul.f32 1.0, %v1306
      %v1308 = vrcp.pop %v1273
      %v1309 = vmul.f32 1.0, %v1308
      %v1310 = vrcp.pop %v1274
      %v1311 = vmul.f32 1.0, %v1310
      %v1312 = vrcp.pop %v1275
      %v1313 = vmul.f32 1.0, %v1312
      %v1314 = vrcp.pop %v1276
      %v1315 = vmul.f32 1.0, %v1314
      %v1316 = vrcp.pop %v1277
      %v1317 = vmul.f32 1.0, %v1316
      %v1318 = vrcp.pop %v1278
      %v1319 = vmul.f32 1.0, %v1318
      %v1320 = vrcp.pop %v1279
      %v1321 = vmul.f32 1.0, %v1320
      %v1322 = vrcp.pop %v1280
      %v1323 = vmul.f32 1.0, %v1322
      %v1324 = vrcp.pop %v1281
      %v1325 = vmul.f32 1.0, %v1324
      %v1326 = vrcp.pop %v1282
      %v1327 = vmul.f32 1.0, %v1326
      %v1328 = vrcp.pop %v1283
      %v1329 = vmul.f32 1.0, %v1328
      %v1330 = vrcp.pop %v1284
      %v1331 = vmul.f32 1.0, %v1330
      %v1332 = vrcp.pop %v1285
      %v1333 = vmul.f32 1.0, %v1332
      %v1334 = vrcp.pop %v1286
      %v1335 = vmul.f32 1.0, %v1334
      %v1336 = vrcp.pop %v1287
      %v1337 = vmul.f32 1.0, %v1336
      %v1338 = vrcp.pop %v1288
      %v1339 = vmul.f32 1.0, %v1338
      %v1340 = vrcp.pop %v1289
      %v1341 = vmul.f32 1.0, %v1340
      %v1342 = vrcp.pop %v1290
      %v1343 = vmul.f32 1.0, %v1342
      %v1344 = vrcp.pop %v1291
      %v1345 = vmul.f32 1.0, %v1344
      %v1346 = vrcp.pop %v1292
      %v1347 = vmul.f32 1.0, %v1346
      %v1348 = vrcp.pop %v1293
      %v1349 = vmul.f32 1.0, %v1348
      %v1350 = vrcp.pop %v1294
      %v1351 = vmul.f32 1.0, %v1350
      %v1352 = vrcp.pop %v1295
      %v1353 = vmul.f32 1.0, %v1352
      %v1354 = vrcp.pop %v1296
      %v1355 = vmul.f32 1.0, %v1354
      %v1356 = vrcp.pop %v1297
      %v1357 = vmul.f32 1.0, %v1356
      %v1358 = vrcp.pop %v1298
      %v1359 = vmul.f32 1.0, %v1358
      %v1360 = vrcp.pop %v1299
      %v1361 = vmul.f32 1.0, %v1360
      %v1362 = vrcp.pop %v1300
      %v1363 = vmul.f32 1.0, %v1362
      %v1364 = vrcp.pop %v1301
      %v1365 = vmul.f32 1.0, %v1364
      %v1366 = vmul.f32 %v1303, 1.0614054
      %v1367 = vmul.f32 %v1305, 1.0614054
      %v1368 = vmul.f32 %v1307, 1.0614054
      %v1369 = vmul.f32 %v1309, 1.0614054
      %v1370 = vmul.f32 %v1311, 1.0614054
      %v1371 = vmul.f32 %v1313, 1.0614054
      %v1372 = vmul.f32 %v1315, 1.0614054
      %v1373 = vmul.f32 %v1317, 1.0614054
      %v1374 = vmul.f32 %v1319, 1.0614054
      %v1375 = vmul.f32 %v1321, 1.0614054
      %v1376 = vmul.f32 %v1323, 1.0614054
      %v1377 = vmul.f32 %v1325, 1.0614054
      %v1378 = vmul.f32 %v1327, 1.0614054
      %v1379 = vmul.f32 %v1329, 1.0614054
      %v1380 = vmul.f32 %v1331, 1.0614054
      %v1381 = vmul.f32 %v1333, 1.0614054
      %v1382 = vmul.f32 %v1335, 1.0614054
      %v1383 = vmul.f32 %v1337, 1.0614054
      %v1384 = vmul.f32 %v1339, 1.0614054
      %v1385 = vmul.f32 %v1341, 1.0614054
      %v1386 = vmul.f32 %v1343, 1.0614054
      %v1387 = vmul.f32 %v1345, 1.0614054
      %v1388 = vmul.f32 %v1347, 1.0614054
      %v1389 = vmul.f32 %v1349, 1.0614054
      %v1390 = vmul.f32 %v1351, 1.0614054
      %v1391 = vmul.f32 %v1353, 1.0614054
      %v1392 = vmul.f32 %v1355, 1.0614054
      %v1393 = vmul.f32 %v1357, 1.0614054
      %v1394 = vmul.f32 %v1359, 1.0614054
      %v1395 = vmul.f32 %v1361, 1.0614054
      %v1396 = vmul.f32 %v1363, 1.0614054
      %v1397 = vmul.f32 %v1365, 1.0614054
      %v1398 = vadd.f32 %v1366, -1.4531521
      %v1399 = vadd.f32 %v1367, -1.4531521
      %v1400 = vadd.f32 %v1368, -1.4531521
      %v1401 = vadd.f32 %v1369, -1.4531521
      %v1402 = vadd.f32 %v1370, -1.4531521
      %v1403 = vadd.f32 %v1371, -1.4531521
      %v1404 = vadd.f32 %v1372, -1.4531521
      %v1405 = vadd.f32 %v1373, -1.4531521
      %v1406 = vadd.f32 %v1374, -1.4531521
      %v1407 = vadd.f32 %v1375, -1.4531521
      %v1408 = vadd.f32 %v1376, -1.4531521
      %v1409 = vadd.f32 %v1377, -1.4531521
      %v1410 = vadd.f32 %v1378, -1.4531521
      %v1411 = vadd.f32 %v1379, -1.4531521
      %v1412 = vadd.f32 %v1380, -1.4531521
      %v1413 = vadd.f32 %v1381, -1.4531521
      %v1414 = vadd.f32 %v1382, -1.4531521
      %v1415 = vadd.f32 %v1383, -1.4531521
      %v1416 = vadd.f32 %v1384, -1.4531521
      %v1417 = vadd.f32 %v1385, -1.4531521
      %v1418 = vadd.f32 %v1386, -1.4531521
      %v1419 = vadd.f32 %v1387, -1.4531521
      %v1420 = vadd.f32 %v1388, -1.4531521
      %v1421 = vadd.f32 %v1389, -1.4531521
      %v1422 = vadd.f32 %v1390, -1.4531521
      %v1423 = vadd.f32 %v1391, -1.4531521
      %v1424 = vadd.f32 %v1392, -1.4531521
      %v1425 = vadd.f32 %v1393, -1.4531521
      %v1426 = vadd.f32 %v1394, -1.4531521
      %v1427 = vadd.f32 %v1395, -1.4531521
      %v1428 = vadd.f32 %v1396, -1.4531521
      %v1429 = vadd.f32 %v1397, -1.4531521
      %v1430 = vmul.f32 %v1303, %v1398
      %v1431 = vmul.f32 %v1305, %v1399
      %v1432 = vmul.f32 %v1307, %v1400
      %v1433 = vmul.f32 %v1309, %v1401
      %v1434 = vmul.f32 %v1311, %v1402
      %v1435 = vmul.f32 %v1313, %v1403
      %v1436 = vmul.f32 %v1315, %v1404
      %v1437 = vmul.f32 %v1317, %v1405
      %v1438 = vmul.f32 %v1319, %v1406
      %v1439 = vmul.f32 %v1321, %v1407
      %v1440 = vmul.f32 %v1323, %v1408
      %v1441 = vmul.f32 %v1325, %v1409
      %v1442 = vmul.f32 %v1327, %v1410
      %v1443 = vmul.f32 %v1329, %v1411
      %v1444 = vmul.f32 %v1331, %v1412
      %v1445 = vmul.f32 %v1333, %v1413
      %v1446 = vmul.f32 %v1335, %v1414
      %v1447 = vmul.f32 %v1337, %v1415
      %v1448 = vmul.f32 %v1339, %v1416
      %v1449 = vmul.f32 %v1341, %v1417
      %v1450 = vmul.f32 %v1343, %v1418
      %v1451 = vmul.f32 %v1345, %v1419
      %v1452 = vmul.f32 %v1347, %v1420
      %v1453 = vmul.f32 %v1349, %v1421
      %v1454 = vmul.f32 %v1351, %v1422
      %v1455 = vmul.f32 %v1353, %v1423
      %v1456 = vmul.f32 %v1355, %v1424
      %v1457 = vmul.f32 %v1357, %v1425
      %v1458 = vmul.f32 %v1359, %v1426
      %v1459 = vmul.f32 %v1361, %v1427
      %v1460 = vmul.f32 %v1363, %v1428
      %v1461 = vmul.f32 %v1365, %v1429
      %v1462 = vadd.f32 %v1430, 1.4214138
      %v1463 = vadd.f32 %v1431, 1.4214138
      %v1464 = vadd.f32 %v1432, 1.4214138
      %v1465 = vadd.f32 %v1433, 1.4214138
      %v1466 = vadd.f32 %v1434, 1.4214138
      %v1467 = vadd.f32 %v1435, 1.4214138
      %v1468 = vadd.f32 %v1436, 1.4214138
      %v1469 = vadd.f32 %v1437, 1.4214138
      %v1470 = vadd.f32 %v1438, 1.4214138
      %v1471 = vadd.f32 %v1439, 1.4214138
      %v1472 = vadd.f32 %v1440, 1.4214138
      %v1473 = vadd.f32 %v1441, 1.4214138
      %v1474 = vadd.f32 %v1442, 1.4214138
      %v1475 = vadd.f32 %v1443, 1.4214138
      %v1476 = vadd.f32 %v1444, 1.4214138
      %v1477 = vadd.f32 %v1445, 1.4214138
      %v1478 = vadd.f32 %v1446, 1.4214138
      %v1479 = vadd.f32 %v1447, 1.4214138
      %v1480 = vadd.f32 %v1448, 1.4214138
      %v1481 = vadd.f32 %v1449, 1.4214138
      %v1482 = vadd.f32 %v1450, 1.4214138
      %v1483 = vadd.f32 %v1451, 1.4214138
      %v1484 = vadd.f32 %v1452, 1.4214138
      %v1485 = vadd.f32 %v1453, 1.4214138
      %v1486 = vadd.f32 %v1454, 1.4214138
      %v1487 = vadd.f32 %v1455, 1.4214138
      %v1488 = vadd.f32 %v1456, 1.4214138
      %v1489 = vadd.f32 %v1457, 1.4214138
      %v1490 = vadd.f32 %v1458, 1.4214138
      %v1491 = vadd.f32 %v1459, 1.4214138
      %v1492 = vadd.f32 %v1460, 1.4214138
      %v1493 = vadd.f32 %v1461, 1.4214138
      %v1494 = vmul.f32 %v1303, %v1462
      %v1495 = vmul.f32 %v1305, %v1463
      %v1496 = vmul.f32 %v1307, %v1464
      %v1497 = vmul.f32 %v1309, %v1465
      %v1498 = vmul.f32 %v1311, %v1466
      %v1499 = vmul.f32 %v1313, %v1467
      %v1500 = vmul.f32 %v1315, %v1468
      %v1501 = vmul.f32 %v1317, %v1469
      %v1502 = vmul.f32 %v1319, %v1470
      %v1503 = vmul.f32 %v1321, %v1471
      %v1504 = vmul.f32 %v1323, %v1472
      %v1505 = vmul.f32 %v1325, %v1473
      %v1506 = vmul.f32 %v1327, %v1474
      %v1507 = vmul.f32 %v1329, %v1475
      %v1508 = vmul.f32 %v1331, %v1476
      %v1509 = vmul.f32 %v1333, %v1477
      %v1510 = vmul.f32 %v1335, %v1478
      %v1511 = vmul.f32 %v1337, %v1479
      %v1512 = vmul.f32 %v1339, %v1480
      %v1513 = vmul.f32 %v1341, %v1481
      %v1514 = vmul.f32 %v1343, %v1482
      %v1515 = vmul.f32 %v1345, %v1483
      %v1516 = vmul.f32 %v1347, %v1484
      %v1517 = vmul.f32 %v1349, %v1485
      %v1518 = vmul.f32 %v1351, %v1486
      %v1519 = vmul.f32 %v1353, %v1487
      %v1520 = vmul.f32 %v1355, %v1488
      %v1521 = vmul.f32 %v1357, %v1489
      %v1522 = vmul.f32 %v1359, %v1490
      %v1523 = vmul.f32 %v1361, %v1491
      %v1524 = vmul.f32 %v1363, %v1492
      %v1525 = vmul.f32 %v1365, %v1493
      %v1526 = vadd.f32 %v1494, -0.28449672
      %v1527 = vadd.f32 %v1495, -0.28449672
      %v1528 = vadd.f32 %v1496, -0.28449672
      %v1529 = vadd.f32 %v1497, -0.28449672
      %v1530 = vadd.f32 %v1498, -0.28449672
      %v1531 = vadd.f32 %v1499, -0.28449672
      %v1532 = vadd.f32 %v1500, -0.28449672
      %v1533 = vadd.f32 %v1501, -0.28449672
      %v1534 = vadd.f32 %v1502, -0.28449672
      %v1535 = vadd.f32 %v1503, -0.28449672
      %v1536 = vadd.f32 %v1504, -0.28449672
      %v1537 = vadd.f32 %v1505, -0.28449672
      %v1538 = vadd.f32 %v1506, -0.28449672
      %v1539 = vadd.f32 %v1507, -0.28449672
      %v1540 = vadd.f32 %v1508, -0.28449672
      %v1541 = vadd.f32 %v1509, -0.28449672
      %v1542 = vadd.f32 %v1510, -0.28449672
      %v1543 = vadd.f32 %v1511, -0.28449672
      %v1544 = vadd.f32 %v1512, -0.28449672
      %v1545 = vadd.f32 %v1513, -0.28449672
      %v1546 = vadd.f32 %v1514, -0.28449672
      %v1547 = vadd.f32 %v1515, -0.28449672
      %v1548 = vadd.f32 %v1516, -0.28449672
      %v1549 = vadd.f32 %v1517, -0.28449672
      %v1550 = vadd.f32 %v1518, -0.28449672
      %v1551 = vadd.f32 %v1519, -0.28449672
      %v1552 = vadd.f32 %v1520, -0.28449672
      %v1553 = vadd.f32 %v1521, -0.28449672
      %v1554 = vadd.f32 %v1522, -0.28449672
      %v1555 = vadd.f32 %v1523, -0.28449672
      %v1556 = vadd.f32 %v1524, -0.28449672
      %v1557 = vadd.f32 %v1525, -0.28449672
      %v1558 = vmul.f32 %v1303, %v1526
      %v1559 = vmul.f32 %v1305, %v1527
      %v1560 = vmul.f32 %v1307, %v1528
      %v1561 = vmul.f32 %v1309, %v1529
      %v1562 = vmul.f32 %v1311, %v1530
      %v1563 = vmul.f32 %v1313, %v1531
      %v1564 = vmul.f32 %v1315, %v1532
      %v1565 = vmul.f32 %v1317, %v1533
      %v1566 = vmul.f32 %v1319, %v1534
      %v1567 = vmul.f32 %v1321, %v1535
      %v1568 = vmul.f32 %v1323, %v1536
      %v1569 = vmul.f32 %v1325, %v1537
      %v1570 = vmul.f32 %v1327, %v1538
      %v1571 = vmul.f32 %v1329, %v1539
      %v1572 = vmul.f32 %v1331, %v1540
      %v1573 = vmul.f32 %v1333, %v1541
      %v1574 = vmul.f32 %v1335, %v1542
      %v1575 = vmul.f32 %v1337, %v1543
      %v1576 = vmul.f32 %v1339, %v1544
      %v1577 = vmul.f32 %v1341, %v1545
      %v1578 = vmul.f32 %v1343, %v1546
      %v1579 = vmul.f32 %v1345, %v1547
      %v1580 = vmul.f32 %v1347, %v1548
      %v1581 = vmul.f32 %v1349, %v1549
      %v1582 = vmul.f32 %v1351, %v1550
      %v1583 = vmul.f32 %v1353, %v1551
      %v1584 = vmul.f32 %v1355, %v1552
      %v1585 = vmul.f32 %v1357, %v1553
      %v1586 = vmul.f32 %v1359, %v1554
      %v1587 = vmul.f32 %v1361, %v1555
      %v1588 = vmul.f32 %v1363, %v1556
      %v1589 = vmul.f32 %v1365, %v1557
      %v1590 = vadd.f32 %v1558, 0.2548296
      %v1591 = vadd.f32 %v1559, 0.2548296
      %v1592 = vadd.f32 %v1560, 0.2548296
      %v1593 = vadd.f32 %v1561, 0.2548296
      %v1594 = vadd.f32 %v1562, 0.2548296
      %v1595 = vadd.f32 %v1563, 0.2548296
      %v1596 = vadd.f32 %v1564, 0.2548296
      %v1597 = vadd.f32 %v1565, 0.2548296
      %v1598 = vadd.f32 %v1566, 0.2548296
      %v1599 = vadd.f32 %v1567, 0.2548296
      %v1600 = vadd.f32 %v1568, 0.2548296
      %v1601 = vadd.f32 %v1569, 0.2548296
      %v1602 = vadd.f32 %v1570, 0.2548296
      %v1603 = vadd.f32 %v1571, 0.2548296
      %v1604 = vadd.f32 %v1572, 0.2548296
      %v1605 = vadd.f32 %v1573, 0.2548296
      %v1606 = vadd.f32 %v1574, 0.2548296
      %v1607 = vadd.f32 %v1575, 0.2548296
      %v1608 = vadd.f32 %v1576, 0.2548296
      %v1609 = vadd.f32 %v1577, 0.2548296
      %v1610 = vadd.f32 %v1578, 0.2548296
      %v1611 = vadd.f32 %v1579, 0.2548296
      %v1612 = vadd.f32 %v1580, 0.2548296
      %v1613 = vadd.f32 %v1581, 0.2548296
      %v1614 = vadd.f32 %v1582, 0.2548296
      %v1615 = vadd.f32 %v1583, 0.2548296
      %v1616 = vadd.f32 %v1584, 0.2548296
      %v1617 = vadd.f32 %v1585, 0.2548296
      %v1618 = vadd.f32 %v1586, 0.2548296
      %v1619 = vadd.f32 %v1587, 0.2548296
      %v1620 = vadd.f32 %v1588, 0.2548296
      %v1621 = vadd.f32 %v1589, 0.2548296
      %v1622 = vmul.f32 %v1303, %v1590
      %v1623 = vmul.f32 %v1305, %v1591
      %v1624 = vmul.f32 %v1307, %v1592
      %v1625 = vmul.f32 %v1309, %v1593
      %v1626 = vmul.f32 %v1311, %v1594
      %v1627 = vmul.f32 %v1313, %v1595
      %v1628 = vmul.f32 %v1315, %v1596
      %v1629 = vmul.f32 %v1317, %v1597
      %v1630 = vmul.f32 %v1319, %v1598
      %v1631 = vmul.f32 %v1321, %v1599
      %v1632 = vmul.f32 %v1323, %v1600
      %v1633 = vmul.f32 %v1325, %v1601
      %v1634 = vmul.f32 %v1327, %v1602
      %v1635 = vmul.f32 %v1329, %v1603
      %v1636 = vmul.f32 %v1331, %v1604
      %v1637 = vmul.f32 %v1333, %v1605
      %v1638 = vmul.f32 %v1335, %v1606
      %v1639 = vmul.f32 %v1337, %v1607
      %v1640 = vmul.f32 %v1339, %v1608
      %v1641 = vmul.f32 %v1341, %v1609
      %v1642 = vmul.f32 %v1343, %v1610
      %v1643 = vmul.f32 %v1345, %v1611
      %v1644 = vmul.f32 %v1347, %v1612
      %v1645 = vmul.f32 %v1349, %v1613
      %v1646 = vmul.f32 %v1351, %v1614
      %v1647 = vmul.f32 %v1353, %v1615
      %v1648 = vmul.f32 %v1355, %v1616
      %v1649 = vmul.f32 %v1357, %v1617
      %v1650 = vmul.f32 %v1359, %v1618
      %v1651 = vmul.f32 %v1361, %v1619
      %v1652 = vmul.f32 %v1363, %v1620
      %v1653 = vmul.f32 %v1365, %v1621
      %v1654 = vsub.f32 0.0, %v1206
      %v1655 = vsub.f32 0.0, %v1207
      %v1656 = vsub.f32 0.0, %v1208
      %v1657 = vsub.f32 0.0, %v1209
      %v1658 = vsub.f32 0.0, %v1210
      %v1659 = vsub.f32 0.0, %v1211
      %v1660 = vsub.f32 0.0, %v1212
      %v1661 = vsub.f32 0.0, %v1213
      %v1662 = vsub.f32 0.0, %v1214
      %v1663 = vsub.f32 0.0, %v1215
      %v1664 = vsub.f32 0.0, %v1216
      %v1665 = vsub.f32 0.0, %v1217
      %v1666 = vsub.f32 0.0, %v1218
      %v1667 = vsub.f32 0.0, %v1219
      %v1668 = vsub.f32 0.0, %v1220
      %v1669 = vsub.f32 0.0, %v1221
      %v1670 = vsub.f32 0.0, %v1222
      %v1671 = vsub.f32 0.0, %v1223
      %v1672 = vsub.f32 0.0, %v1224
      %v1673 = vsub.f32 0.0, %v1225
      %v1674 = vsub.f32 0.0, %v1226
      %v1675 = vsub.f32 0.0, %v1227
      %v1676 = vsub.f32 0.0, %v1228
      %v1677 = vsub.f32 0.0, %v1229
      %v1678 = vsub.f32 0.0, %v1230
      %v1679 = vsub.f32 0.0, %v1231
      %v1680 = vsub.f32 0.0, %v1232
      %v1681 = vsub.f32 0.0, %v1233
      %v1682 = vsub.f32 0.0, %v1234
      %v1683 = vsub.f32 0.0, %v1235
      %v1684 = vsub.f32 0.0, %v1236
      %v1685 = vsub.f32 0.0, %v1237
      %v1686 = vmul.f32 %v1654, %v1206
      %v1687 = vmul.f32 %v1655, %v1207
      %v1688 = vmul.f32 %v1656, %v1208
      %v1689 = vmul.f32 %v1657, %v1209
      %v1690 = vmul.f32 %v1658, %v1210
      %v1691 = vmul.f32 %v1659, %v1211
      %v1692 = vmul.f32 %v1660, %v1212
      %v1693 = vmul.f32 %v1661, %v1213
      %v1694 = vmul.f32 %v1662, %v1214
      %v1695 = vmul.f32 %v1663, %v1215
      %v1696 = vmul.f32 %v1664, %v1216
      %v1697 = vmul.f32 %v1665, %v1217
      %v1698 = vmul.f32 %v1666, %v1218
      %v1699 = vmul.f32 %v1667, %v1219
      %v1700 = vmul.f32 %v1668, %v1220
      %v1701 = vmul.f32 %v1669, %v1221
      %v1702 = vmul.f32 %v1670, %v1222
      %v1703 = vmul.f32 %v1671, %v1223
      %v1704 = vmul.f32 %v1672, %v1224
      %v1705 = vmul.f32 %v1673, %v1225
      %v1706 = vmul.f32 %v1674, %v1226
      %v1707 = vmul.f32 %v1675, %v1227
      %v1708 = vmul.f32 %v1676, %v1228
      %v1709 = vmul.f32 %v1677, %v1229
      %v1710 = vmul.f32 %v1678, %v1230
      %v1711 = vmul.f32 %v1679, %v1231
      %v1712 = vmul.f32 %v1680, %v1232
      %v1713 = vmul.f32 %v1681, %v1233
      %v1714 = vmul.f32 %v1682, %v1234
      %v1715 = vmul.f32 %v1683, %v1235
      %v1716 = vmul.f32 %v1684, %v1236
      %v1717 = vmul.f32 %v1685, %v1237
      %v1718 = vmul.f32 %v1686, 1.442695
      %v1719 = vpow.pop %v1718
      %v1720 = vmul.f32 %v1687, 1.442695
      %v1721 = vpow.pop %v1720
      %v1722 = vmul.f32 %v1688, 1.442695
      %v1723 = vpow.pop %v1722
      %v1724 = vmul.f32 %v1689, 1.442695
      %v1725 = vpow.pop %v1724
      %v1726 = vmul.f32 %v1690, 1.442695
      %v1727 = vpow.pop %v1726
      %v1728 = vmul.f32 %v1691, 1.442695
      %v1729 = vpow.pop %v1728
      %v1730 = vmul.f32 %v1692, 1.442695
      %v1731 = vpow.pop %v1730
      %v1732 = vmul.f32 %v1693, 1.442695
      %v1733 = vpow.pop %v1732
      %v1734 = vmul.f32 %v1694, 1.442695
      %v1735 = vpow.pop %v1734
      %v1736 = vmul.f32 %v1695, 1.442695
      %v1737 = vpow.pop %v1736
      %v1738 = vmul.f32 %v1696, 1.442695
      %v1739 = vpow.pop %v1738
      %v1740 = vmul.f32 %v1697, 1.442695
      %v1741 = vpow.pop %v1740
      %v1742 = vmul.f32 %v1698, 1.442695
      %v1743 = vpow.pop %v1742
      %v1744 = vmul.f32 %v1699, 1.442695
      %v1745 = vpow.pop %v1744
      %v1746 = vmul.f32 %v1700, 1.442695
      %v1747 = vpow.pop %v1746
      %v1748 = vmul.f32 %v1701, 1.442695
      %v1749 = vpow.pop %v1748
      %v1750 = vmul.f32 %v1702, 1.442695
      %v1751 = vpow.pop %v1750
      %v1752 = vmul.f32 %v1703, 1.442695
      %v1753 = vpow.pop %v1752
      %v1754 = vmul.f32 %v1704, 1.442695
      %v1755 = vpow.pop %v1754
      %v1756 = vmul.f32 %v1705, 1.442695
      %v1757 = vpow.pop %v1756
      %v1758 = vmul.f32 %v1706, 1.442695
      %v1759 = vpow.pop %v1758
      %v1760 = vmul.f32 %v1707, 1.442695
      %v1761 = vpow.pop %v1760
      %v1762 = vmul.f32 %v1708, 1.442695
      %v1763 = vpow.pop %v1762
      %v1764 = vmul.f32 %v1709, 1.442695
      %v1765 = vpow.pop %v1764
      %v1766 = vmul.f32 %v1710, 1.442695
      %v1767 = vpow.pop %v1766
      %v1768 = vmul.f32 %v1711, 1.442695
      %v1769 = vpow.pop %v1768
      %v1770 = vmul.f32 %v1712, 1.442695
      %v1771 = vpow.pop %v1770
      %v1772 = vmul.f32 %v1713, 1.442695
      %v1773 = vpow.pop %v1772
      %v1774 = vmul.f32 %v1714, 1.442695
      %v1775 = vpow.pop %v1774
      %v1776 = vmul.f32 %v1715, 1.442695
      %v1777 = vpow.pop %v1776
      %v1778 = vmul.f32 %v1716, 1.442695
      %v1779 = vpow.pop %v1778
      %v1780 = vmul.f32 %v1717, 1.442695
      %v1781 = vpow.pop %v1780
      %v1782 = vmul.f32 %v1622, %v1719
      %v1783 = vmul.f32 %v1623, %v1721
      %v1784 = vmul.f32 %v1624, %v1723
      %v1785 = vmul.f32 %v1625, %v1725
      %v1786 = vmul.f32 %v1626, %v1727
      %v1787 = vmul.f32 %v1627, %v1729
      %v1788 = vmul.f32 %v1628, %v1731
      %v1789 = vmul.f32 %v1629, %v1733
      %v1790 = vmul.f32 %v1630, %v1735
      %v1791 = vmul.f32 %v1631, %v1737
      %v1792 = vmul.f32 %v1632, %v1739
      %v1793 = vmul.f32 %v1633, %v1741
      %v1794 = vmul.f32 %v1634, %v1743
      %v1795 = vmul.f32 %v1635, %v1745
      %v1796 = vmul.f32 %v1636, %v1747
      %v1797 = vmul.f32 %v1637, %v1749
      %v1798 = vmul.f32 %v1638, %v1751
      %v1799 = vmul.f32 %v1639, %v1753
      %v1800 = vmul.f32 %v1640, %v1755
      %v1801 = vmul.f32 %v1641, %v1757
      %v1802 = vmul.f32 %v1642, %v1759
      %v1803 = vmul.f32 %v1643, %v1761
      %v1804 = vmul.f32 %v1644, %v1763
      %v1805 = vmul.f32 %v1645, %v1765
      %v1806 = vmul.f32 %v1646, %v1767
      %v1807 = vmul.f32 %v1647, %v1769
      %v1808 = vmul.f32 %v1648, %v1771
      %v1809 = vmul.f32 %v1649, %v1773
      %v1810 = vmul.f32 %v1650, %v1775
      %v1811 = vmul.f32 %v1651, %v1777
      %v1812 = vmul.f32 %v1652, %v1779
      %v1813 = vmul.f32 %v1653, %v1781
      %v1814 = vsub.f32 1.0, %v1782
      %v1815 = vsub.f32 1.0, %v1783
      %v1816 = vsub.f32 1.0, %v1784
      %v1817 = vsub.f32 1.0, %v1785
      %v1818 = vsub.f32 1.0, %v1786
      %v1819 = vsub.f32 1.0, %v1787
      %v1820 = vsub.f32 1.0, %v1788
      %v1821 = vsub.f32 1.0, %v1789
      %v1822 = vsub.f32 1.0, %v1790
      %v1823 = vsub.f32 1.0, %v1791
      %v1824 = vsub.f32 1.0, %v1792
      %v1825 = vsub.f32 1.0, %v1793
      %v1826 = vsub.f32 1.0, %v1794
      %v1827 = vsub.f32 1.0, %v1795
      %v1828 = vsub.f32 1.0, %v1796
      %v1829 = vsub.f32 1.0, %v1797
      %v1830 = vsub.f32 1.0, %v1798
      %v1831 = vsub.f32 1.0, %v1799
      %v1832 = vsub.f32 1.0, %v1800
      %v1833 = vsub.f32 1.0, %v1801
      %v1834 = vsub.f32 1.0, %v1802
      %v1835 = vsub.f32 1.0, %v1803
      %v1836 = vsub.f32 1.0, %v1804
      %v1837 = vsub.f32 1.0, %v1805
      %v1838 = vsub.f32 1.0, %v1806
      %v1839 = vsub.f32 1.0, %v1807
      %v1840 = vsub.f32 1.0, %v1808
      %v1841 = vsub.f32 1.0, %v1809
      %v1842 = vsub.f32 1.0, %v1810
      %v1843 = vsub.f32 1.0, %v1811
      %v1844 = vsub.f32 1.0, %v1812
      %v1845 = vsub.f32 1.0, %v1813
      %vm1846 = vcmp.ge.f32.partialorder %v1174, 0.0
      %vm1847 = vcmp.ge.f32.partialorder %v1175, 0.0
      %vm1848 = vcmp.ge.f32.partialorder %v1176, 0.0
      %vm1849 = vcmp.ge.f32.partialorder %v1177, 0.0
      %vm1850 = vcmp.ge.f32.partialorder %v1178, 0.0
      %vm1851 = vcmp.ge.f32.partialorder %v1179, 0.0
      %vm1852 = vcmp.ge.f32.partialorder %v1180, 0.0
      %vm1853 = vcmp.ge.f32.partialorder %v1181, 0.0
      %vm1854 = vcmp.ge.f32.partialorder %v1182, 0.0
      %vm1855 = vcmp.ge.f32.partialorder %v1183, 0.0
      %vm1856 = vcmp.ge.f32.partialorder %v1184, 0.0
      %vm1857 = vcmp.ge.f32.partialorder %v1185, 0.0
      %vm1858 = vcmp.ge.f32.partialorder %v1186, 0.0
      %vm1859 = vcmp.ge.f32.partialorder %v1187, 0.0
      %vm1860 = vcmp.ge.f32.partialorder %v1188, 0.0
      %vm1861 = vcmp.ge.f32.partialorder %v1189, 0.0
      %vm1862 = vcmp.ge.f32.partialorder %v1190, 0.0
      %vm1863 = vcmp.ge.f32.partialorder %v1191, 0.0
      %vm1864 = vcmp.ge.f32.partialorder %v1192, 0.0
      %vm1865 = vcmp.ge.f32.partialorder %v1193, 0.0
      %vm1866 = vcmp.ge.f32.partialorder %v1194, 0.0
      %vm1867 = vcmp.ge.f32.partialorder %v1195, 0.0
      %vm1868 = vcmp.ge.f32.partialorder %v1196, 0.0
      %vm1869 = vcmp.ge.f32.partialorder %v1197, 0.0
      %vm1870 = vcmp.ge.f32.partialorder %v1198, 0.0
      %vm1871 = vcmp.ge.f32.partialorder %v1199, 0.0
      %vm1872 = vcmp.ge.f32.partialorder %v1200, 0.0
      %vm1873 = vcmp.ge.f32.partialorder %v1201, 0.0
      %vm1874 = vcmp.ge.f32.partialorder %v1202, 0.0
      %vm1875 = vcmp.ge.f32.partialorder %v1203, 0.0
      %vm1876 = vcmp.ge.f32.partialorder %v1204, 0.0
      %vm1877 = vcmp.ge.f32.partialorder %v1205, 0.0
      %v1878 = vsub.f32 0.0, %v1814
      %v1879 = vsub.f32 0.0, %v1815
      %v1880 = vsub.f32 0.0, %v1816
      %v1881 = vsub.f32 0.0, %v1817
      %v1882 = vsub.f32 0.0, %v1818
      %v1883 = vsub.f32 0.0, %v1819
      %v1884 = vsub.f32 0.0, %v1820
      %v1885 = vsub.f32 0.0, %v1821
      %v1886 = vsub.f32 0.0, %v1822
      %v1887 = vsub.f32 0.0, %v1823
      %v1888 = vsub.f32 0.0, %v1824
      %v1889 = vsub.f32 0.0, %v1825
      %v1890 = vsub.f32 0.0, %v1826
      %v1891 = vsub.f32 0.0, %v1827
      %v1892 = vsub.f32 0.0, %v1828
      %v1893 = vsub.f32 0.0, %v1829
      %v1894 = vsub.f32 0.0, %v1830
      %v1895 = vsub.f32 0.0, %v1831
      %v1896 = vsub.f32 0.0, %v1832
      %v1897 = vsub.f32 0.0, %v1833
      %v1898 = vsub.f32 0.0, %v1834
      %v1899 = vsub.f32 0.0, %v1835
      %v1900 = vsub.f32 0.0, %v1836
      %v1901 = vsub.f32 0.0, %v1837
      %v1902 = vsub.f32 0.0, %v1838
      %v1903 = vsub.f32 0.0, %v1839
      %v1904 = vsub.f32 0.0, %v1840
      %v1905 = vsub.f32 0.0, %v1841
      %v1906 = vsub.f32 0.0, %v1842
      %v1907 = vsub.f32 0.0, %v1843
      %v1908 = vsub.f32 0.0, %v1844
      %v1909 = vsub.f32 0.0, %v1845
      %v1910 = vsel %vm1846, %v1814, %v1878
      %v1911 = vsel %vm1847, %v1815, %v1879
      %v1912 = vsel %vm1848, %v1816, %v1880
      %v1913 = vsel %vm1849, %v1817, %v1881
      %v1914 = vsel %vm1850, %v1818, %v1882
      %v1915 = vsel %vm1851, %v1819, %v1883
      %v1916 = vsel %vm1852, %v1820, %v1884
      %v1917 = vsel %vm1853, %v1821, %v1885
      %v1918 = vsel %vm1854, %v1822, %v1886
      %v1919 = vsel %vm1855, %v1823, %v1887
      %v1920 = vsel %vm1856, %v1824, %v1888
      %v1921 = vsel %vm1857, %v1825, %v1889
      %v1922 = vsel %vm1858, %v1826, %v1890
      %v1923 = vsel %vm1859, %v1827, %v1891
      %v1924 = vsel %vm1860, %v1828, %v1892
      %v1925 = vsel %vm1861, %v1829, %v1893
      %v1926 = vsel %vm1862, %v1830, %v1894
      %v1927 = vsel %vm1863, %v1831, %v1895
      %v1928 = vsel %vm1864, %v1832, %v1896
      %v1929 = vsel %vm1865, %v1833, %v1897
      %v1930 = vsel %vm1866, %v1834, %v1898
      %v1931 = vsel %vm1867, %v1835, %v1899
      %v1932 = vsel %vm1868, %v1836, %v1900
      %v1933 = vsel %vm1869, %v1837, %v1901
      %v1934 = vsel %vm1870, %v1838, %v1902
      %v1935 = vsel %vm1871, %v1839, %v1903
      %v1936 = vsel %vm1872, %v1840, %v1904
      %v1937 = vsel %vm1873, %v1841, %v1905
      %v1938 = vsel %vm1874, %v1842, %v1906
      %v1939 = vsel %vm1875, %v1843, %v1907
      %v1940 = vsel %vm1876, %v1844, %v1908
      %v1941 = vsel %vm1877, %v1845, %v1909
      %v1942 = vmul.f32 %v1142, 0.5
      %v1943 = vmul.f32 %v1143, 0.5
      %v1944 = vmul.f32 %v1144, 0.5
      %v1945 = vmul.f32 %v1145, 0.5
      %v1946 = vmul.f32 %v1146, 0.5
      %v1947 = vmul.f32 %v1147, 0.5
      %v1948 = vmul.f32 %v1148, 0.5
      %v1949 = vmul.f32 %v1149, 0.5
      %v1950 = vmul.f32 %v1150, 0.5
      %v1951 = vmul.f32 %v1151, 0.5
      %v1952 = vmul.f32 %v1152, 0.5
      %v1953 = vmul.f32 %v1153, 0.5
      %v1954 = vmul.f32 %v1154, 0.5
      %v1955 = vmul.f32 %v1155, 0.5
      %v1956 = vmul.f32 %v1156, 0.5
      %v1957 = vmul.f32 %v1157, 0.5
      %v1958 = vmul.f32 %v1158, 0.5
      %v1959 = vmul.f32 %v1159, 0.5
      %v1960 = vmul.f32 %v1160, 0.5
      %v1961 = vmul.f32 %v1161, 0.5
      %v1962 = vmul.f32 %v1162, 0.5
      %v1963 = vmul.f32 %v1163, 0.5
      %v1964 = vmul.f32 %v1164, 0.5
      %v1965 = vmul.f32 %v1165, 0.5
      %v1966 = vmul.f32 %v1166, 0.5
      %v1967 = vmul.f32 %v1167, 0.5
      %v1968 = vmul.f32 %v1168, 0.5
      %v1969 = vmul.f32 %v1169, 0.5
      %v1970 = vmul.f32 %v1170, 0.5
      %v1971 = vmul.f32 %v1171, 0.5
      %v1972 = vmul.f32 %v1172, 0.5
      %v1973 = vmul.f32 %v1173, 0.5
      %v1974 = vadd.f32 %v1910, 1.0
      %v1975 = vadd.f32 %v1911, 1.0
      %v1976 = vadd.f32 %v1912, 1.0
      %v1977 = vadd.f32 %v1913, 1.0
      %v1978 = vadd.f32 %v1914, 1.0
      %v1979 = vadd.f32 %v1915, 1.0
      %v1980 = vadd.f32 %v1916, 1.0
      %v1981 = vadd.f32 %v1917, 1.0
      %v1982 = vadd.f32 %v1918, 1.0
      %v1983 = vadd.f32 %v1919, 1.0
      %v1984 = vadd.f32 %v1920, 1.0
      %v1985 = vadd.f32 %v1921, 1.0
      %v1986 = vadd.f32 %v1922, 1.0
      %v1987 = vadd.f32 %v1923, 1.0
      %v1988 = vadd.f32 %v1924, 1.0
      %v1989 = vadd.f32 %v1925, 1.0
      %v1990 = vadd.f32 %v1926, 1.0
      %v1991 = vadd.f32 %v1927, 1.0
      %v1992 = vadd.f32 %v1928, 1.0
      %v1993 = vadd.f32 %v1929, 1.0
      %v1994 = vadd.f32 %v1930, 1.0
      %v1995 = vadd.f32 %v1931, 1.0
      %v1996 = vadd.f32 %v1932, 1.0
      %v1997 = vadd.f32 %v1933, 1.0
      %v1998 = vadd.f32 %v1934, 1.0
      %v1999 = vadd.f32 %v1935, 1.0
      %v2000 = vadd.f32 %v1936, 1.0
      %v2001 = vadd.f32 %v1937, 1.0
      %v2002 = vadd.f32 %v1938, 1.0
      %v2003 = vadd.f32 %v1939, 1.0
      %v2004 = vadd.f32 %v1940, 1.0
      %v2005 = vadd.f32 %v1941, 1.0
      %v2006 = vmul.f32 %v1942, %v1974
      %v2007 = vmul.f32 %v1943, %v1975
      %v2008 = vmul.f32 %v1944, %v1976
      %v2009 = vmul.f32 %v1945, %v1977
      %v2010 = vmul.f32 %v1946, %v1978
      %v2011 = vmul.f32 %v1947, %v1979
      %v2012 = vmul.f32 %v1948, %v1980
      %v2013 = vmul.f32 %v1949, %v1981
      %v2014 = vmul.f32 %v1950, %v1982
      %v2015 = vmul.f32 %v1951, %v1983
      %v2016 = vmul.f32 %v1952, %v1984
      %v2017 = vmul.f32 %v1953, %v1985
      %v2018 = vmul.f32 %v1954, %v1986
      %v2019 = vmul.f32 %v1955, %v1987
      %v2020 = vmul.f32 %v1956, %v1988
      %v2021 = vmul.f32 %v1957, %v1989
      %v2022 = vmul.f32 %v1958, %v1990
      %v2023 = vmul.f32 %v1959, %v1991
      %v2024 = vmul.f32 %v1960, %v1992
      %v2025 = vmul.f32 %v1961, %v1993
      %v2026 = vmul.f32 %v1962, %v1994
      %v2027 = vmul.f32 %v1963, %v1995
      %v2028 = vmul.f32 %v1964, %v1996
      %v2029 = vmul.f32 %v1965, %v1997
      %v2030 = vmul.f32 %v1966, %v1998
      %v2031 = vmul.f32 %v1967, %v1999
      %v2032 = vmul.f32 %v1968, %v2000
      %v2033 = vmul.f32 %v1969, %v2001
      %v2034 = vmul.f32 %v1970, %v2002
      %v2035 = vmul.f32 %v1971, %v2003
      %v2036 = vmul.f32 %v1972, %v2004
      %v2037 = vmul.f32 %v1973, %v2005
      %vm2038 = vcmask 523264
      %2039 = vst.msk [vmem:[%s229] sm:$0xff] %vm2038, %v2006
      %2040 = vst.msk [vmem:[%s229 + $0x8] sm:$0xff] %vm2038, %v2007
      %2041 = vst.msk [vmem:[%s229 + $0x10] sm:$0xff] %vm2038, %v2008
      %2042 = vst.msk [vmem:[%s229 + $0x18] sm:$0xff] %vm2038, %v2009
      %2043 = vst.msk [vmem:[%s229 + $0x20] sm:$0xff] %vm2038, %v2010
      %2044 = vst.msk [vmem:[%s229 + $0x28] sm:$0xff] %vm2038, %v2011
      %2045 = vst.msk [vmem:[%s229 + $0x30] sm:$0xff] %vm2038, %v2012
      %2046 = vst.msk [vmem:[%s229 + $0x38] sm:$0xff] %vm2038, %v2013
      %2047 = vst.msk [vmem:[%s229 + $0x40] sm:$0xff] %vm2038, %v2014
      %2048 = vst.msk [vmem:[%s229 + $0x48] sm:$0xff] %vm2038, %v2015
      %2049 = vst.msk [vmem:[%s229 + $0x50] sm:$0xff] %vm2038, %v2016
      %2050 = vst.msk [vmem:[%s229 + $0x58] sm:$0xff] %vm2038, %v2017
      %2051 = vst.msk [vmem:[%s229 + $0x60] sm:$0xff] %vm2038, %v2018
      %2052 = vst.msk [vmem:[%s229 + $0x68] sm:$0xff] %vm2038, %v2019
      %2053 = vst.msk [vmem:[%s229 + $0x70] sm:$0xff] %vm2038, %v2020
      %2054 = vst.msk [vmem:[%s229 + $0x78] sm:$0xff] %vm2038, %v2021
      %2055 = vst.msk [vmem:[%s229 + $0x80] sm:$0xff] %vm2038, %v2022
      %2056 = vst.msk [vmem:[%s229 + $0x88] sm:$0xff] %vm2038, %v2023
      %2057 = vst.msk [vmem:[%s229 + $0x90] sm:$0xff] %vm2038, %v2024
      %2058 = vst.msk [vmem:[%s229 + $0x98] sm:$0xff] %vm2038, %v2025
      %2059 = vst.msk [vmem:[%s229 + $0xa0] sm:$0xff] %vm2038, %v2026
      %2060 = vst.msk [vmem:[%s229 + $0xa8] sm:$0xff] %vm2038, %v2027
      %2061 = vst.msk [vmem:[%s229 + $0xb0] sm:$0xff] %vm2038, %v2028
      %2062 = vst.msk [vmem:[%s229 + $0xb8] sm:$0xff] %vm2038, %v2029
      %2063 = vst.msk [vmem:[%s229 + $0xc0] sm:$0xff] %vm2038, %v2030
      %2064 = vst.msk [vmem:[%s229 + $0xc8] sm:$0xff] %vm2038, %v2031
      %2065 = vst.msk [vmem:[%s229 + $0xd0] sm:$0xff] %vm2038, %v2032
      %2066 = vst.msk [vmem:[%s229 + $0xd8] sm:$0xff] %vm2038, %v2033
      %2067 = vst.msk [vmem:[%s229 + $0xe0] sm:$0xff] %vm2038, %v2034
      %2068 = vst.msk [vmem:[%s229 + $0xe8] sm:$0xff] %vm2038, %v2035
      %2069 = vst.msk [vmem:[%s229 + $0xf0] sm:$0xff] %vm2038, %v2036
      %2070 = vst.msk [vmem:[%s229 + $0xf8] sm:$0xff] %vm2038, %v2037
      %p2071 = scmp.lt.s32.totalorder %s18, 1
      %s2072 = scalar_select %p2071, %s18, 1
      %p2073 = scmp.lt.s32.totalorder %s19, 0
      %s2074 = scalar_select %p2073, %s19, 0
      %s2075 = smul.addr %s2072, 32
      %s2076 = sadd.s32 %s2074, %s2075
      %s2077 = smul.addr %s2076, 8
      %s2078 = scalar_lea.vmem %s3, %s2077
      // Predicated region
      $region33: #{shiftmlp_forward.4} parent=31 // pred_check
        %p2079 = pneg %p126
      $region34: #{shiftmlp_forward.4} parent=31 // pred_check_branch
        %2081 = sbr.rel (%p2079) target = $region36
      $region35: #{shiftmlp_forward.4} parent=31 // pred_region
        _
      $region36: #{shiftmlp_forward.4} parent=31 // pred_fallthru
        _
    $region32: #{shiftmlp_forward.4} parent=5 // pred_fallthru
      _
    %p2082 = scmp.le.s32.totalorder 2, %s9
    // Predicated region
    $region37: #{shiftmlp_forward.4} parent=5 // pred_check
      %p2083 = pneg %p2082
    $region38: #{shiftmlp_forward.4} parent=5 // pred_check_branch
      %2085 = sbr.rel (%p2083) target = $region40
    $region39: #{shiftmlp_forward.4} parent=5 // pred_region
      %s2086 = ssub.s32 %s9, 2
      // Predicated region
      $region41: #{shiftmlp_forward.4} parent=39 // pred_check
        %p2087 = pneg %p132
      $region42: #{shiftmlp_forward.4} parent=39 // pred_check_branch
        %2089 = sbr.rel (%p2087) target = $region44
      $region43: #{shiftmlp_forward.4} parent=39 // pred_region
        %p2090 = scmp.lt.s32.totalorder %s20, 1
        %s2091 = scalar_select %p2090, %s20, 1
        %p2092 = scmp.lt.s32.totalorder %s21, 0
        %s2093 = scalar_select %p2092, %s21, 0
        %s2094 = smul.addr %s2091, 32
        %s2095 = sadd.s32 %s2093, %s2094
        %s2096 = smul.addr %s2095, 8
        %s2097 = scalar_lea.vmem %s3, %s2096
      $region44: #{shiftmlp_forward.4} parent=39 // pred_fallthru
        _
    $region40: #{shiftmlp_forward.4} parent=5 // pred_fallthru
      _
  $region6: #{shiftmlp_forward.4} parent=0 // loop_footer
    %s13 = sadd.s32 1, %s9
  $region7: #{shiftmlp_forward.4} parent=0 // loop_footer_branch
    %8 = sbr.rel target = $region3
  $region8: #{shiftmlp_forward.4} parent=0 // loop_exit
    _

</llo_original>
